<compile_context>
chip_gen: v7x
topology: tpu7x:2x2x1
jax: 0.10.0
libtpu: 0.0.40
codegen_flags: <defaults>
</compile_context>

<pallas_src>
import jax
import jax.numpy as jnp
from jax.experimental import pallas as pl
from jax.experimental.pallas import tpu as pltpu

NEG_SLOPE = 0.2
BN_EPS = 1e-5


# --------------------------------------------------------------------------- #
# Kernel
# --------------------------------------------------------------------------- #
def _discriminator_kernel(x_ref, wconv_ref, bconv_ref, w12_ref, b12_ref, out_ref):
    # Conv2d(512,512,4,2,1) on a 2x2 input == matmul over flattened (Cin*2*2).
    # BatchNorm (eval mode) is already folded into wconv/bconv at prepack time.
    h = jnp.dot(x_ref[...], wconv_ref[...].astype(jnp.float32),
                preferred_element_type=jnp.float32)
    h = h + bconv_ref[...]

    # LeakyReLU(0.2)
    h = jnp.where(h > 0, h, NEG_SLOPE * h)

    # fc2(dropout(fc1(.))) in eval mode == one linear map (fused at prepack).
    o = jnp.dot(h, w12_ref[...].astype(jnp.float32),
                preferred_element_type=jnp.float32)
    out_ref[...] = (o + b12_ref[...]).astype(out_ref.dtype)


# --------------------------------------------------------------------------- #
# One-time weight prepack (call once, reuse across forwards)
# --------------------------------------------------------------------------- #
def prepack_params(params, weight_dtype=jnp.bfloat16):
    """Fold BN into the conv weights, fuse fc1*fc2, flatten, cast to bf16."""
    cout, cin = params["conv_w"].shape[:2]

    # Only the inner 2x2 taps of the 4x4 kernel see non-padded input.
    # Column order ci*4 + i*2 + j matches x.reshape(B, Cin*2*2).
    wconv = params["conv_w"][:, :, 1:3, 1:3].reshape(cout, cin * 4).T  # (Cin*4, Cout)

    # Eval-mode BN (running_mean=0, running_var=1): y = x * g/sqrt(1+eps) + b
    scale = params["bn_gamma"] / jnp.sqrt(1.0 + BN_EPS)                # (Cout,)
    wconv = wconv * scale[None, :]
    bconv = params["conv_b"] * scale + params["bn_beta"]               # (Cout,)

    # fc1 -> dropout(identity) -> fc2  ==  single linear map.
    w12 = params["fc1_w"].T @ params["fc2_w"].T                        # (512, num_attrs)
    b12 = params["fc1_b"] @ params["fc2_w"].T + params["fc2_b"]        # (num_attrs,)

    return {
        "wconv": wconv.astype(weight_dtype),                  # (2048, 512) bf16
        "bconv": bconv.reshape(1, -1).astype(jnp.float32),    # (1, 512)
        "w12": w12.astype(weight_dtype),                      # (512, num_attrs) bf16
        "b12": b12.reshape(1, -1).astype(jnp.float32),        # (1, num_attrs)
    }


# --------------------------------------------------------------------------- #
# Forward (no per-call weight manipulation — just the pallas_call)
# --------------------------------------------------------------------------- #
def discriminator_forward(x_nchw, packed):
    """x_nchw: (B, 512, 2, 2) float32, packed: output of prepack_params."""
    B, C, H, W = x_nchw.shape
    assert (H, W) == (2, 2) and C == 512

    x_flat = x_nchw.reshape(B, C * H * W).astype(jnp.float32)  # (B, 2048)
    wconv, bconv = packed["wconv"], packed["bconv"]
    w12, b12 = packed["w12"], packed["b12"]
    num_attrs = w12.shape[1]

    full = lambda shape: pl.BlockSpec(shape, lambda i: (0, 0))

    # Single fused grid step: ~2.5 MiB of weight DMA, two MXU matmuls.
    # (If B ever grows large, add a "parallel" batch grid axis with 128-row
    #  blocks and keep weight index_maps constant so they stay resident.)
    return pl.pallas_call(
        _discriminator_kernel,
        out_shape=jax.ShapeDtypeStruct((B, num_attrs), jnp.float32),
        grid_spec=pltpu.PrefetchScalarGridSpec(
            num_scalar_prefetch=0,
            grid=(1,),
            in_specs=[
                full(x_flat.shape),
                full(wconv.shape),
                full(bconv.shape),
                full(w12.shape),
                full(b12.shape),
            ],
            out_specs=full((B, num_attrs)),
        ),
        compiler_params=pltpu.CompilerParams(
            dimension_semantics=("arbitrary",)),
    )(x_flat, wconv, bconv, w12, b12)


# --------------------------------------------------------------------------- #
# Params / references
# --------------------------------------------------------------------------- #
def init_params(key, num_attrs):
    ks = jax.random.split(key, 6)
    scale = 0.02
    return {
        "conv_w": scale * jax.random.normal(ks[0], (512, 512, 4, 4), jnp.float32),
        "conv_b": scale * jax.random.normal(ks[1], (512,), jnp.float32),
        "bn_gamma": jnp.ones((512,), jnp.float32),
        "bn_beta": jnp.zeros((512,), jnp.float32),
        "fc1_w": scale * jax.random.normal(ks[2], (512, 512), jnp.float32),
        "fc1_b": scale * jax.random.normal(ks[3], (512,), jnp.float32),
        "fc2_w": scale * jax.random.normal(ks[4], (num_attrs, 512), jnp.float32),
        "fc2_b": scale * jax.random.normal(ks[5], (num_attrs,), jnp.float32),
    }


def reference_forward(x_nchw, params):
    """Pure-JAX f32 reference mirroring the PyTorch eval-mode forward."""
    B = x_nchw.shape[0]
    x_flat = x_nchw.reshape(B, -1)
    wconv = params["conv_w"][:, :, 1:3, 1:3].reshape(512, -1)
    h = x_flat @ wconv.T + params["conv_b"]
    h = h / jnp.sqrt(1.0 + BN_EPS) * params["bn_gamma"] + params["bn_beta"]
    h = jnp.where(h > 0, h, NEG_SLOPE * h)
    h = h @ params["fc1_w"].T + params["fc1_b"]
    return h @ params["fc2_w"].T + params["fc2_b"]


def reference_forward_packed(x_nchw, packed):
    """Pure-JAX reference using the same prepacked (bf16-quantized) weights."""
    B = x_nchw.shape[0]
    x_flat = x_nchw.reshape(B, -1).astype(jnp.float32)
    h = x_flat @ packed["wconv"].astype(jnp.float32) + packed["bconv"]
    h = jnp.where(h > 0, h, NEG_SLOPE * h)
    return h @ packed["w12"].astype(jnp.float32) + packed["b12"]


# TODO(synk): training-mode BatchNorm statistics and stochastic Dropout are not
# implemented; the kernel targets eval/inference semantics only.

if __name__ == "__main__":
    num_attrs = 8
    batch = 2
    key = jax.random.PRNGKey(0)
    k_x, k_p = jax.random.split(key)

    # Input: (B, 512, image_size/2**7, image_size/2**7) with image_size=256.
    x = jax.random.normal(k_x, (batch, 512, 2, 2), jnp.float32)
    params = init_params(k_p, num_attrs)

    # One-time prepack (would be done at model-load time in a real pipeline).
    packed = jax.block_until_ready(prepack_params(params))

    fwd = jax.jit(discriminator_forward)
    out = jax.block_until_ready(fwd(x, packed))

    assert out.shape == (batch, num_attrs)

    # Tight check against the same fused / bf16-quantized math.
    ref_packed = reference_forward_packed(x, packed)
    assert jnp.allclose(out, ref_packed, atol=1e-3, rtol=1e-3)

    # Semantics check against the original f32 eval-mode module
    # (difference bounded by bf16 weight quantization).
    ref_f32 = reference_forward(x, params)
    assert jnp.allclose(out, ref_f32, atol=2e-2, rtol=2e-2)

    print("KERNEL_OK")
</pallas_src>

<mosaic_0001>
module attributes {stable_mosaic.version = 11 : i64} {
  func.func @_discriminator_kernel(%arg0: i32, %arg1: memref<2x2048xf32, #tpu.memory_space<vmem>>, %arg2: memref<2048x512xbf16, #tpu.memory_space<vmem>>, %arg3: memref<1x512xf32, #tpu.memory_space<vmem>>, %arg4: memref<512x8xbf16, #tpu.memory_space<vmem>>, %arg5: memref<1x8xf32, #tpu.memory_space<vmem>>, %arg6: memref<2x8xf32, #tpu.memory_space<vmem>>) attributes {dimension_semantics = [#tpu.dimension_semantics<arbitrary>], iteration_bounds = array<i64: 1>, scalar_prefetch = 0 : i64, scratch_operands = 0 : i64, tpu.core_type = #tpu.core_type<tc>, window_params = [{pipeline_mode = #tpu.pipeline_mode<synchronous>, transform_indices = @transform_0, window_bounds = array<i64: 2, 2048>}, {pipeline_mode = #tpu.pipeline_mode<synchronous>, transform_indices = @transform_1, window_bounds = array<i64: 2048, 512>}, {pipeline_mode = #tpu.pipeline_mode<synchronous>, transform_indices = @transform_2, window_bounds = array<i64: 1, 512>}, {pipeline_mode = #tpu.pipeline_mode<synchronous>, transform_indices = @transform_3, window_bounds = array<i64: 512, 8>}, {pipeline_mode = #tpu.pipeline_mode<synchronous>, transform_indices = @transform_4, window_bounds = array<i64: 1, 8>}, {pipeline_mode = #tpu.pipeline_mode<synchronous>, transform_indices = @transform_5, window_bounds = array<i64: 2, 8>}]} {
    %c0 = arith.constant 0 : index
    %c0_0 = arith.constant 0 : index
    %0 = vector.load %arg1[%c0, %c0_0] : memref<2x2048xf32, #tpu.memory_space<vmem>>, vector<2x2048xf32>
    %c0_1 = arith.constant 0 : index
    %c0_2 = arith.constant 0 : index
    %1 = vector.load %arg2[%c0_1, %c0_2] : memref<2048x512xbf16, #tpu.memory_space<vmem>>, vector<2048x512xbf16>
    %2 = arith.extf %1 : vector<2048x512xbf16> to vector<2048x512xf32>
    %cst = arith.constant dense<0.000000e+00> : vector<2x512xf32>
    %3 = tpu.matmul %0, %2, %cst {dimension_numbers = #tpu.dot_dimension_numbers<[1], [0], [0], [1], [0, 0, 1, 1], [], []>} : vector<2x2048xf32>, vector<2048x512xf32>, vector<2x512xf32> -> vector<2x512xf32>
    %c0_3 = arith.constant 0 : index
    %c0_4 = arith.constant 0 : index
    %4 = vector.load %arg3[%c0_3, %c0_4] : memref<1x512xf32, #tpu.memory_space<vmem>>, vector<1x512xf32>
    %5 = vector.broadcast %4 : vector<1x512xf32> to vector<2x512xf32>
    %6 = arith.addf %3, %5 : vector<2x512xf32>
    %cst_5 = arith.constant 0.000000e+00 : f32
    %7 = vector.broadcast %cst_5 : f32 to vector<2x512xf32>
    %8 = arith.cmpf ogt, %6, %7 : vector<2x512xf32>
    %cst_6 = arith.constant 2.000000e-01 : f32
    %9 = vector.broadcast %cst_6 : f32 to vector<2x512xf32>
    %10 = arith.mulf %9, %6 : vector<2x512xf32>
    %11 = arith.select %8, %6, %10 : vector<2x512xi1>, vector<2x512xf32>
    %c0_7 = arith.constant 0 : index
    %c0_8 = arith.constant 0 : index
    %12 = vector.load %arg4[%c0_7, %c0_8] : memref<512x8xbf16, #tpu.memory_space<vmem>>, vector<512x8xbf16>
    %13 = arith.extf %12 : vector<512x8xbf16> to vector<512x8xf32>
    %cst_9 = arith.constant dense<0.000000e+00> : vector<2x8xf32>
    %14 = tpu.matmul %11, %13, %cst_9 {dimension_numbers = #tpu.dot_dimension_numbers<[1], [0], [0], [1], [0, 0, 1, 1], [], []>} : vector<2x512xf32>, vector<512x8xf32>, vector<2x8xf32> -> vector<2x8xf32>
    %c0_10 = arith.constant 0 : index
    %c0_11 = arith.constant 0 : index
    %15 = vector.load %arg5[%c0_10, %c0_11] : memref<1x8xf32, #tpu.memory_space<vmem>>, vector<1x8xf32>
    %16 = vector.broadcast %15 : vector<1x8xf32> to vector<2x8xf32>
    %17 = arith.addf %14, %16 : vector<2x8xf32>
    %c0_12 = arith.constant 0 : index
    %c0_13 = arith.constant 0 : index
    %18 = vector.load %arg6[%c0_12, %c0_13] : memref<2x8xf32, #tpu.memory_space<vmem>>, vector<2x8xf32>
    tpu.vector_store %arg6[%c0_12, %c0_13], %17 {strides = array<i32>} : memref<2x8xf32, #tpu.memory_space<vmem>>, vector<2x8xf32>,
    return
  }
  func.func @transform_0(%arg0: i32) -> (i32, i32) {
    %c0_i32 = arith.constant 0 : i32
    %c0_i32_0 = arith.constant 0 : i32
    %c0_i32_1 = arith.constant 0 : i32
    return %c0_i32, %c0_i32_0 : i32, i32
  }
  func.func @transform_1(%arg0: i32) -> (i32, i32) {
    %c0_i32 = arith.constant 0 : i32
    %c0_i32_0 = arith.constant 0 : i32
    %c0_i32_1 = arith.constant 0 : i32
    return %c0_i32, %c0_i32_0 : i32, i32
  }
  func.func @transform_2(%arg0: i32) -> (i32, i32) {
    %c0_i32 = arith.constant 0 : i32
    %c0_i32_0 = arith.constant 0 : i32
    %c0_i32_1 = arith.constant 0 : i32
    return %c0_i32, %c0_i32_0 : i32, i32
  }
  func.func @transform_3(%arg0: i32) -> (i32, i32) {
    %c0_i32 = arith.constant 0 : i32
    %c0_i32_0 = arith.constant 0 : i32
    %c0_i32_1 = arith.constant 0 : i32
    return %c0_i32, %c0_i32_0 : i32, i32
  }
  func.func @transform_4(%arg0: i32) -> (i32, i32) {
    %c0_i32 = arith.constant 0 : i32
    %c0_i32_0 = arith.constant 0 : i32
    %c0_i32_1 = arith.constant 0 : i32
    return %c0_i32, %c0_i32_0 : i32, i32
  }
  func.func @transform_5(%arg0: i32) -> (i32, i32) {
    %c0_i32 = arith.constant 0 : i32
    %c0_i32_0 = arith.constant 0 : i32
    %c0_i32_1 = arith.constant 0 : i32
    return %c0_i32, %c0_i32_0 : i32, i32
  }
}

</mosaic_0001>

<llo_original>
// kernel: discriminator_forward.1
$region0: #{discriminator_forward.1}
  #allocation0 [shape = 'u32[]', space=smem, size = 0x4, offset = 0x4, fixed_abs, tag = 'smem constant byte address 0x4 - core index']
  #allocation1 [shape = 'u32[144,128]{1,0:T(1,128)}', space=vmem, size = 0x12000, scoped, tag = 'internal scratch']
  %s0 = inlined_call_operand.vmem [shape: f32[2,2048], index: 0, kind: input, shape index: {}]
  %s1 = inlined_call_operand.vmem [shape: bf16[2048,512], index: 1, kind: input, shape index: {}]
  %s2 = inlined_call_operand.vmem [shape: f32[1,512], index: 2, kind: input, shape index: {}]
  %s3 = inlined_call_operand.vmem [shape: bf16[512,8], index: 3, kind: input, shape index: {}]
  %s4 = inlined_call_operand.vmem [shape: f32[1,8], index: 4, kind: input, shape index: {}]
  %s5 = inlined_call_operand.hbm [shape: f32[2,8], index: 5, kind: output, shape index: {}]
  %s6 = sld [smem:[#allocation0]]
  $region30: #{discriminator_forward.1} parent=0
    _
  %s8 = ssub.s32 1, %s6
  %s9 = scalar_select 0, %s8, %s6
  $region1: #{discriminator_forward.1} parent=0
    #allocation2 [shape = 'u8[1024]{0}', space=vmem, size = 0x400, scoped, tag = 'output window, operand 0, single buffered']
    #allocation3 [shape = 's32[1]{0}', space=sflag, size = 0x4, scoped, tag = 'scoped memory for discriminator_forward.1']
    %10 = vsyncpa [#allocation3], 0
    // Predicated region
    $region2: #{discriminator_forward.1} parent=1 // pred_check
      _
    $region3: #{discriminator_forward.1} parent=1 // pred_check_branch
      %12 = sbr.rel (0) target = $region5
    $region4: #{discriminator_forward.1} parent=1 // pred_region
      _
    $region5: #{discriminator_forward.1} parent=1 // pred_fallthru
      _
    // Predicated region
    $region6: #{discriminator_forward.1} parent=1 // pred_check
      _
    $region7: #{discriminator_forward.1} parent=1 // pred_check_branch
      %14 = sbr.rel (0) target = $region9
    $region8: #{discriminator_forward.1} parent=1 // pred_region
      _
    $region9: #{discriminator_forward.1} parent=1 // pred_fallthru
      _
    // Predicated region
    $region10: #{discriminator_forward.1} parent=1 // pred_check
      _
    $region11: #{discriminator_forward.1} parent=1 // pred_check_branch
      %16 = sbr.rel (0) target = $region13
    $region12: #{discriminator_forward.1} parent=1 // pred_region
      _
    $region13: #{discriminator_forward.1} parent=1 // pred_fallthru
      _
    // Predicated region
    $region14: #{discriminator_forward.1} parent=1 // pred_check
      _
    $region15: #{discriminator_forward.1} parent=1 // pred_check_branch
      %18 = sbr.rel (0) target = $region17
    $region16: #{discriminator_forward.1} parent=1 // pred_region
      _
    $region17: #{discriminator_forward.1} parent=1 // pred_fallthru
      _
    // Predicated region
    $region18: #{discriminator_forward.1} parent=1 // pred_check
      _
    $region19: #{discriminator_forward.1} parent=1 // pred_check_branch
      %20 = sbr.rel (0) target = $region21
    $region20: #{discriminator_forward.1} parent=1 // pred_region
      _
    $region21: #{discriminator_forward.1} parent=1 // pred_fallthru
      _
    %v21 = vld [vmem:[%s0] sm:$0xff]
    %v22 = vld [vmem:[%s0 + $0x8] sm:$0xff]
    %v23 = vld [vmem:[%s0 + $0x10] sm:$0xff]
    %v24 = vld [vmem:[%s0 + $0x18] sm:$0xff]
    %v25 = vld [vmem:[%s1] sm:$0xff]
    %v26 = vld [vmem:[%s1 + $0x8] sm:$0xff]
    %v27 = vld [vmem:[%s1 + $0x10] sm:$0xff]
    %v28 = vld [vmem:[%s1 + $0x18] sm:$0xff]
    %v29 = vld [vmem:[%s1 + $0x20] sm:$0xff]
    %v30 = vld [vmem:[%s1 + $0x28] sm:$0xff]
    %v31 = vld [vmem:[%s1 + $0x30] sm:$0xff]
    %v32 = vld [vmem:[%s1 + $0x38] sm:$0xff]
    %v33 = vld [vmem:[%s1 + $0x40] sm:$0xff]
    %v34 = vld [vmem:[%s1 + $0x48] sm:$0xff]
    %v35 = vld [vmem:[%s1 + $0x50] sm:$0xff]
    %v36 = vld [vmem:[%s1 + $0x58] sm:$0xff]
    %v37 = vld [vmem:[%s1 + $0x60] sm:$0xff]
    %v38 = vld [vmem:[%s1 + $0x68] sm:$0xff]
    %v39 = vld [vmem:[%s1 + $0x70] sm:$0xff]
    %v40 = vld [vmem:[%s1 + $0x78] sm:$0xff]
    %v41 = vld [vmem:[%s1 + $0x80] sm:$0xff]
    %v42 = vld [vmem:[%s1 + $0x88] sm:$0xff]
    %v43 = vld [vmem:[%s1 + $0x90] sm:$0xff]
    %v44 = vld [vmem:[%s1 + $0x98] sm:$0xff]
    %v45 = vld [vmem:[%s1 + $0xa0] sm:$0xff]
    %v46 = vld [vmem:[%s1 + $0xa8] sm:$0xff]
    %v47 = vld [vmem:[%s1 + $0xb0] sm:$0xff]
    %v48 = vld [vmem:[%s1 + $0xb8] sm:$0xff]
    %v49 = vld [vmem:[%s1 + $0xc0] sm:$0xff]
    %v50 = vld [vmem:[%s1 + $0xc8] sm:$0xff]
    %v51 = vld [vmem:[%s1 + $0xd0] sm:$0xff]
    %v52 = vld [vmem:[%s1 + $0xd8] sm:$0xff]
    %v53 = vld [vmem:[%s1 + $0xe0] sm:$0xff]
    %v54 = vld [vmem:[%s1 + $0xe8] sm:$0xff]
    %v55 = vld [vmem:[%s1 + $0xf0] sm:$0xff]
    %v56 = vld [vmem:[%s1 + $0xf8] sm:$0xff]
    %v57 = vld [vmem:[%s1 + $0x100] sm:$0xff]
    %v58 = vld [vmem:[%s1 + $0x108] sm:$0xff]
    %v59 = vld [vmem:[%s1 + $0x110] sm:$0xff]
    %v60 = vld [vmem:[%s1 + $0x118] sm:$0xff]
    %v61 = vld [vmem:[%s1 + $0x120] sm:$0xff]
    %v62 = vld [vmem:[%s1 + $0x128] sm:$0xff]
    %v63 = vld [vmem:[%s1 + $0x130] sm:$0xff]
    %v64 = vld [vmem:[%s1 + $0x138] sm:$0xff]
    %v65 = vld [vmem:[%s1 + $0x140] sm:$0xff]
    %v66 = vld [vmem:[%s1 + $0x148] sm:$0xff]
    %v67 = vld [vmem:[%s1 + $0x150] sm:$0xff]
    %v68 = vld [vmem:[%s1 + $0x158] sm:$0xff]
    %v69 = vld [vmem:[%s1 + $0x160] sm:$0xff]
    %v70 = vld [vmem:[%s1 + $0x168] sm:$0xff]
    %v71 = vld [vmem:[%s1 + $0x170] sm:$0xff]
    %v72 = vld [vmem:[%s1 + $0x178] sm:$0xff]
    %v73 = vld [vmem:[%s1 + $0x180] sm:$0xff]
    %v74 = vld [vmem:[%s1 + $0x188] sm:$0xff]
    %v75 = vld [vmem:[%s1 + $0x190] sm:$0xff]
    %v76 = vld [vmem:[%s1 + $0x198] sm:$0xff]
    %v77 = vld [vmem:[%s1 + $0x1a0] sm:$0xff]
    %v78 = vld [vmem:[%s1 + $0x1a8] sm:$0xff]
    %v79 = vld [vmem:[%s1 + $0x1b0] sm:$0xff]
    %v80 = vld [vmem:[%s1 + $0x1b8] sm:$0xff]
    %v81 = vld [vmem:[%s1 + $0x1c0] sm:$0xff]
    %v82 = vld [vmem:[%s1 + $0x1c8] sm:$0xff]
    %v83 = vld [vmem:[%s1 + $0x1d0] sm:$0xff]
    %v84 = vld [vmem:[%s1 + $0x1d8] sm:$0xff]
    %v85 = vld [vmem:[%s1 + $0x1e0] sm:$0xff]
    %v86 = vld [vmem:[%s1 + $0x1e8] sm:$0xff]
    %v87 = vld [vmem:[%s1 + $0x1f0] sm:$0xff]
    %v88 = vld [vmem:[%s1 + $0x1f8] sm:$0xff]
    %v89 = vld [vmem:[%s1 + $0x200] sm:$0xff]
    %v90 = vld [vmem:[%s1 + $0x208] sm:$0xff]
    %v91 = vld [vmem:[%s1 + $0x210] sm:$0xff]
    %v92 = vld [vmem:[%s1 + $0x218] sm:$0xff]
    %v93 = vld [vmem:[%s1 + $0x220] sm:$0xff]
    %v94 = vld [vmem:[%s1 + $0x228] sm:$0xff]
    %v95 = vld [vmem:[%s1 + $0x230] sm:$0xff]
    %v96 = vld [vmem:[%s1 + $0x238] sm:$0xff]
    %v97 = vld [vmem:[%s1 + $0x240] sm:$0xff]
    %v98 = vld [vmem:[%s1 + $0x248] sm:$0xff]
    %v99 = vld [vmem:[%s1 + $0x250] sm:$0xff]
    %v100 = vld [vmem:[%s1 + $0x258] sm:$0xff]
    %v101 = vld [vmem:[%s1 + $0x260] sm:$0xff]
    %v102 = vld [vmem:[%s1 + $0x268] sm:$0xff]
    %v103 = vld [vmem:[%s1 + $0x270] sm:$0xff]
    %v104 = vld [vmem:[%s1 + $0x278] sm:$0xff]
    %v105 = vld [vmem:[%s1 + $0x280] sm:$0xff]
    %v106 = vld [vmem:[%s1 + $0x288] sm:$0xff]
    %v107 = vld [vmem:[%s1 + $0x290] sm:$0xff]
    %v108 = vld [vmem:[%s1 + $0x298] sm:$0xff]
    %v109 = vld [vmem:[%s1 + $0x2a0] sm:$0xff]
    %v110 = vld [vmem:[%s1 + $0x2a8] sm:$0xff]
    %v111 = vld [vmem:[%s1 + $0x2b0] sm:$0xff]
    %v112 = vld [vmem:[%s1 + $0x2b8] sm:$0xff]
    %v113 = vld [vmem:[%s1 + $0x2c0] sm:$0xff]
    %v114 = vld [vmem:[%s1 + $0x2c8] sm:$0xff]
    %v115 = vld [vmem:[%s1 + $0x2d0] sm:$0xff]
    %v116 = vld [vmem:[%s1 + $0x2d8] sm:$0xff]
    %v117 = vld [vmem:[%s1 + $0x2e0] sm:$0xff]
    %v118 = vld [vmem:[%s1 + $0x2e8] sm:$0xff]
    %v119 = vld [vmem:[%s1 + $0x2f0] sm:$0xff]
    %v120 = vld [vmem:[%s1 + $0x2f8] sm:$0xff]
    %v121 = vld [vmem:[%s1 + $0x300] sm:$0xff]
    %v122 = vld [vmem:[%s1 + $0x308] sm:$0xff]
    %v123 = vld [vmem:[%s1 + $0x310] sm:$0xff]
    %v124 = vld [vmem:[%s1 + $0x318] sm:$0xff]
    %v125 = vld [vmem:[%s1 + $0x320] sm:$0xff]
    %v126 = vld [vmem:[%s1 + $0x328] sm:$0xff]
    %v127 = vld [vmem:[%s1 + $0x330] sm:$0xff]
    %v128 = vld [vmem:[%s1 + $0x338] sm:$0xff]
    %v129 = vld [vmem:[%s1 + $0x340] sm:$0xff]
    %v130 = vld [vmem:[%s1 + $0x348] sm:$0xff]
    %v131 = vld [vmem:[%s1 + $0x350] sm:$0xff]
    %v132 = vld [vmem:[%s1 + $0x358] sm:$0xff]
    %v133 = vld [vmem:[%s1 + $0x360] sm:$0xff]
    %v134 = vld [vmem:[%s1 + $0x368] sm:$0xff]
    %v135 = vld [vmem:[%s1 + $0x370] sm:$0xff]
    %v136 = vld [vmem:[%s1 + $0x378] sm:$0xff]
    %v137 = vld [vmem:[%s1 + $0x380] sm:$0xff]
    %v138 = vld [vmem:[%s1 + $0x388] sm:$0xff]
    %v139 = vld [vmem:[%s1 + $0x390] sm:$0xff]
    %v140 = vld [vmem:[%s1 + $0x398] sm:$0xff]
    %v141 = vld [vmem:[%s1 + $0x3a0] sm:$0xff]
    %v142 = vld [vmem:[%s1 + $0x3a8] sm:$0xff]
    %v143 = vld [vmem:[%s1 + $0x3b0] sm:$0xff]
    %v144 = vld [vmem:[%s1 + $0x3b8] sm:$0xff]
    %v145 = vld [vmem:[%s1 + $0x3c0] sm:$0xff]
    %v146 = vld [vmem:[%s1 + $0x3c8] sm:$0xff]
    %v147 = vld [vmem:[%s1 + $0x3d0] sm:$0xff]
    %v148 = vld [vmem:[%s1 + $0x3d8] sm:$0xff]
    %v149 = vld [vmem:[%s1 + $0x3e0] sm:$0xff]
    %v150 = vld [vmem:[%s1 + $0x3e8] sm:$0xff]
    %v151 = vld [vmem:[%s1 + $0x3f0] sm:$0xff]
    %v152 = vld [vmem:[%s1 + $0x3f8] sm:$0xff]
    %v153 = vld [vmem:[%s1 + $0x400] sm:$0xff]
    %v154 = vld [vmem:[%s1 + $0x408] sm:$0xff]
    %v155 = vld [vmem:[%s1 + $0x410] sm:$0xff]
    %v156 = vld [vmem:[%s1 + $0x418] sm:$0xff]
    %v157 = vld [vmem:[%s1 + $0x420] sm:$0xff]
    %v158 = vld [vmem:[%s1 + $0x428] sm:$0xff]
    %v159 = vld [vmem:[%s1 + $0x430] sm:$0xff]
    %v160 = vld [vmem:[%s1 + $0x438] sm:$0xff]
    %v161 = vld [vmem:[%s1 + $0x440] sm:$0xff]
    %v162 = vld [vmem:[%s1 + $0x448] sm:$0xff]
    %v163 = vld [vmem:[%s1 + $0x450] sm:$0xff]
    %v164 = vld [vmem:[%s1 + $0x458] sm:$0xff]
    %v165 = vld [vmem:[%s1 + $0x460] sm:$0xff]
    %v166 = vld [vmem:[%s1 + $0x468] sm:$0xff]
    %v167 = vld [vmem:[%s1 + $0x470] sm:$0xff]
    %v168 = vld [vmem:[%s1 + $0x478] sm:$0xff]
    %v169 = vld [vmem:[%s1 + $0x480] sm:$0xff]
    %v170 = vld [vmem:[%s1 + $0x488] sm:$0xff]
    %v171 = vld [vmem:[%s1 + $0x490] sm:$0xff]
    %v172 = vld [vmem:[%s1 + $0x498] sm:$0xff]
    %v173 = vld [vmem:[%s1 + $0x4a0] sm:$0xff]
    %v174 = vld [vmem:[%s1 + $0x4a8] sm:$0xff]
    %v175 = vld [vmem:[%s1 + $0x4b0] sm:$0xff]
    %v176 = vld [vmem:[%s1 + $0x4b8] sm:$0xff]
    %v177 = vld [vmem:[%s1 + $0x4c0] sm:$0xff]
    %v178 = vld [vmem:[%s1 + $0x4c8] sm:$0xff]
    %v179 = vld [vmem:[%s1 + $0x4d0] sm:$0xff]
    %v180 = vld [vmem:[%s1 + $0x4d8] sm:$0xff]
    %v181 = vld [vmem:[%s1 + $0x4e0] sm:$0xff]
    %v182 = vld [vmem:[%s1 + $0x4e8] sm:$0xff]
    %v183 = vld [vmem:[%s1 + $0x4f0] sm:$0xff]
    %v184 = vld [vmem:[%s1 + $0x4f8] sm:$0xff]
    %v185 = vld [vmem:[%s1 + $0x500] sm:$0xff]
    %v186 = vld [vmem:[%s1 + $0x508] sm:$0xff]
    %v187 = vld [vmem:[%s1 + $0x510] sm:$0xff]
    %v188 = vld [vmem:[%s1 + $0x518] sm:$0xff]
    %v189 = vld [vmem:[%s1 + $0x520] sm:$0xff]
    %v190 = vld [vmem:[%s1 + $0x528] sm:$0xff]
    %v191 = vld [vmem:[%s1 + $0x530] sm:$0xff]
    %v192 = vld [vmem:[%s1 + $0x538] sm:$0xff]
    %v193 = vld [vmem:[%s1 + $0x540] sm:$0xff]
    %v194 = vld [vmem:[%s1 + $0x548] sm:$0xff]
    %v195 = vld [vmem:[%s1 + $0x550] sm:$0xff]
    %v196 = vld [vmem:[%s1 + $0x558] sm:$0xff]
    %v197 = vld [vmem:[%s1 + $0x560] sm:$0xff]
    %v198 = vld [vmem:[%s1 + $0x568] sm:$0xff]
    %v199 = vld [vmem:[%s1 + $0x570] sm:$0xff]
    %v200 = vld [vmem:[%s1 + $0x578] sm:$0xff]
    %v201 = vld [vmem:[%s1 + $0x580] sm:$0xff]
    %v202 = vld [vmem:[%s1 + $0x588] sm:$0xff]
    %v203 = vld [vmem:[%s1 + $0x590] sm:$0xff]
    %v204 = vld [vmem:[%s1 + $0x598] sm:$0xff]
    %v205 = vld [vmem:[%s1 + $0x5a0] sm:$0xff]
    %v206 = vld [vmem:[%s1 + $0x5a8] sm:$0xff]
    %v207 = vld [vmem:[%s1 + $0x5b0] sm:$0xff]
    %v208 = vld [vmem:[%s1 + $0x5b8] sm:$0xff]
    %v209 = vld [vmem:[%s1 + $0x5c0] sm:$0xff]
    %v210 = vld [vmem:[%s1 + $0x5c8] sm:$0xff]
    %v211 = vld [vmem:[%s1 + $0x5d0] sm:$0xff]
    %v212 = vld [vmem:[%s1 + $0x5d8] sm:$0xff]
    %v213 = vld [vmem:[%s1 + $0x5e0] sm:$0xff]
    %v214 = vld [vmem:[%s1 + $0x5e8] sm:$0xff]
    %v215 = vld [vmem:[%s1 + $0x5f0] sm:$0xff]
    %v216 = vld [vmem:[%s1 + $0x5f8] sm:$0xff]
    %v217 = vld [vmem:[%s1 + $0x600] sm:$0xff]
    %v218 = vld [vmem:[%s1 + $0x608] sm:$0xff]
    %v219 = vld [vmem:[%s1 + $0x610] sm:$0xff]
    %v220 = vld [vmem:[%s1 + $0x618] sm:$0xff]
    %v221 = vld [vmem:[%s1 + $0x620] sm:$0xff]
    %v222 = vld [vmem:[%s1 + $0x628] sm:$0xff]
    %v223 = vld [vmem:[%s1 + $0x630] sm:$0xff]
    %v224 = vld [vmem:[%s1 + $0x638] sm:$0xff]
    %v225 = vld [vmem:[%s1 + $0x640] sm:$0xff]
    %v226 = vld [vmem:[%s1 + $0x648] sm:$0xff]
    %v227 = vld [vmem:[%s1 + $0x650] sm:$0xff]
    %v228 = vld [vmem:[%s1 + $0x658] sm:$0xff]
    %v229 = vld [vmem:[%s1 + $0x660] sm:$0xff]
    %v230 = vld [vmem:[%s1 + $0x668] sm:$0xff]
    %v231 = vld [vmem:[%s1 + $0x670] sm:$0xff]
    %v232 = vld [vmem:[%s1 + $0x678] sm:$0xff]
    %v233 = vld [vmem:[%s1 + $0x680] sm:$0xff]
    %v234 = vld [vmem:[%s1 + $0x688] sm:$0xff]
    %v235 = vld [vmem:[%s1 + $0x690] sm:$0xff]
    %v236 = vld [vmem:[%s1 + $0x698] sm:$0xff]
    %v237 = vld [vmem:[%s1 + $0x6a0] sm:$0xff]
    %v238 = vld [vmem:[%s1 + $0x6a8] sm:$0xff]
    %v239 = vld [vmem:[%s1 + $0x6b0] sm:$0xff]
    %v240 = vld [vmem:[%s1 + $0x6b8] sm:$0xff]
    %v241 = vld [vmem:[%s1 + $0x6c0] sm:$0xff]
    %v242 = vld [vmem:[%s1 + $0x6c8] sm:$0xff]
    %v243 = vld [vmem:[%s1 + $0x6d0] sm:$0xff]
    %v244 = vld [vmem:[%s1 + $0x6d8] sm:$0xff]
    %v245 = vld [vmem:[%s1 + $0x6e0] sm:$0xff]
    %v246 = vld [vmem:[%s1 + $0x6e8] sm:$0xff]
    %v247 = vld [vmem:[%s1 + $0x6f0] sm:$0xff]
    %v248 = vld [vmem:[%s1 + $0x6f8] sm:$0xff]
    %v249 = vld [vmem:[%s1 + $0x700] sm:$0xff]
    %v250 = vld [vmem:[%s1 + $0x708] sm:$0xff]
    %v251 = vld [vmem:[%s1 + $0x710] sm:$0xff]
    %v252 = vld [vmem:[%s1 + $0x718] sm:$0xff]
    %v253 = vld [vmem:[%s1 + $0x720] sm:$0xff]
    %v254 = vld [vmem:[%s1 + $0x728] sm:$0xff]
    %v255 = vld [vmem:[%s1 + $0x730] sm:$0xff]
    %v256 = vld [vmem:[%s1 + $0x738] sm:$0xff]
    %v257 = vld [vmem:[%s1 + $0x740] sm:$0xff]
    %v258 = vld [vmem:[%s1 + $0x748] sm:$0xff]
    %v259 = vld [vmem:[%s1 + $0x750] sm:$0xff]
    %v260 = vld [vmem:[%s1 + $0x758] sm:$0xff]
    %v261 = vld [vmem:[%s1 + $0x760] sm:$0xff]
    %v262 = vld [vmem:[%s1 + $0x768] sm:$0xff]
    %v263 = vld [vmem:[%s1 + $0x770] sm:$0xff]
    %v264 = vld [vmem:[%s1 + $0x778] sm:$0xff]
    %v265 = vld [vmem:[%s1 + $0x780] sm:$0xff]
    %v266 = vld [vmem:[%s1 + $0x788] sm:$0xff]
    %v267 = vld [vmem:[%s1 + $0x790] sm:$0xff]
    %v268 = vld [vmem:[%s1 + $0x798] sm:$0xff]
    %v269 = vld [vmem:[%s1 + $0x7a0] sm:$0xff]
    %v270 = vld [vmem:[%s1 + $0x7a8] sm:$0xff]
    %v271 = vld [vmem:[%s1 + $0x7b0] sm:$0xff]
    %v272 = vld [vmem:[%s1 + $0x7b8] sm:$0xff]
    %v273 = vld [vmem:[%s1 + $0x7c0] sm:$0xff]
    %v274 = vld [vmem:[%s1 + $0x7c8] sm:$0xff]
    %v275 = vld [vmem:[%s1 + $0x7d0] sm:$0xff]
    %v276 = vld [vmem:[%s1 + $0x7d8] sm:$0xff]
    %v277 = vld [vmem:[%s1 + $0x7e0] sm:$0xff]
    %v278 = vld [vmem:[%s1 + $0x7e8] sm:$0xff]
    %v279 = vld [vmem:[%s1 + $0x7f0] sm:$0xff]
    %v280 = vld [vmem:[%s1 + $0x7f8] sm:$0xff]
    %v281 = vld [vmem:[%s1 + $0x800] sm:$0xff]
    %v282 = vld [vmem:[%s1 + $0x808] sm:$0xff]
    %v283 = vld [vmem:[%s1 + $0x810] sm:$0xff]
    %v284 = vld [vmem:[%s1 + $0x818] sm:$0xff]
    %v285 = vld [vmem:[%s1 + $0x820] sm:$0xff]
    %v286 = vld [vmem:[%s1 + $0x828] sm:$0xff]
    %v287 = vld [vmem:[%s1 + $0x830] sm:$0xff]
    %v288 = vld [vmem:[%s1 + $0x838] sm:$0xff]
    %v289 = vld [vmem:[%s1 + $0x840] sm:$0xff]
    %v290 = vld [vmem:[%s1 + $0x848] sm:$0xff]
    %v291 = vld [vmem:[%s1 + $0x850] sm:$0xff]
    %v292 = vld [vmem:[%s1 + $0x858] sm:$0xff]
    %v293 = vld [vmem:[%s1 + $0x860] sm:$0xff]
    %v294 = vld [vmem:[%s1 + $0x868] sm:$0xff]
    %v295 = vld [vmem:[%s1 + $0x870] sm:$0xff]
    %v296 = vld [vmem:[%s1 + $0x878] sm:$0xff]
    %v297 = vld [vmem:[%s1 + $0x880] sm:$0xff]
    %v298 = vld [vmem:[%s1 + $0x888] sm:$0xff]
    %v299 = vld [vmem:[%s1 + $0x890] sm:$0xff]
    %v300 = vld [vmem:[%s1 + $0x898] sm:$0xff]
    %v301 = vld [vmem:[%s1 + $0x8a0] sm:$0xff]
    %v302 = vld [vmem:[%s1 + $0x8a8] sm:$0xff]
    %v303 = vld [vmem:[%s1 + $0x8b0] sm:$0xff]
    %v304 = vld [vmem:[%s1 + $0x8b8] sm:$0xff]
    %v305 = vld [vmem:[%s1 + $0x8c0] sm:$0xff]
    %v306 = vld [vmem:[%s1 + $0x8c8] sm:$0xff]
    %v307 = vld [vmem:[%s1 + $0x8d0] sm:$0xff]
    %v308 = vld [vmem:[%s1 + $0x8d8] sm:$0xff]
    %v309 = vld [vmem:[%s1 + $0x8e0] sm:$0xff]
    %v310 = vld [vmem:[%s1 + $0x8e8] sm:$0xff]
    %v311 = vld [vmem:[%s1 + $0x8f0] sm:$0xff]
    %v312 = vld [vmem:[%s1 + $0x8f8] sm:$0xff]
    %v313 = vld [vmem:[%s1 + $0x900] sm:$0xff]
    %v314 = vld [vmem:[%s1 + $0x908] sm:$0xff]
    %v315 = vld [vmem:[%s1 + $0x910] sm:$0xff]
    %v316 = vld [vmem:[%s1 + $0x918] sm:$0xff]
    %v317 = vld [vmem:[%s1 + $0x920] sm:$0xff]
    %v318 = vld [vmem:[%s1 + $0x928] sm:$0xff]
    %v319 = vld [vmem:[%s1 + $0x930] sm:$0xff]
    %v320 = vld [vmem:[%s1 + $0x938] sm:$0xff]
    %v321 = vld [vmem:[%s1 + $0x940] sm:$0xff]
    %v322 = vld [vmem:[%s1 + $0x948] sm:$0xff]
    %v323 = vld [vmem:[%s1 + $0x950] sm:$0xff]
    %v324 = vld [vmem:[%s1 + $0x958] sm:$0xff]
    %v325 = vld [vmem:[%s1 + $0x960] sm:$0xff]
    %v326 = vld [vmem:[%s1 + $0x968] sm:$0xff]
    %v327 = vld [vmem:[%s1 + $0x970] sm:$0xff]
    %v328 = vld [vmem:[%s1 + $0x978] sm:$0xff]
    %v329 = vld [vmem:[%s1 + $0x980] sm:$0xff]
    %v330 = vld [vmem:[%s1 + $0x988] sm:$0xff]
    %v331 = vld [vmem:[%s1 + $0x990] sm:$0xff]
    %v332 = vld [vmem:[%s1 + $0x998] sm:$0xff]
    %v333 = vld [vmem:[%s1 + $0x9a0] sm:$0xff]
    %v334 = vld [vmem:[%s1 + $0x9a8] sm:$0xff]
    %v335 = vld [vmem:[%s1 + $0x9b0] sm:$0xff]
    %v336 = vld [vmem:[%s1 + $0x9b8] sm:$0xff]
    %v337 = vld [vmem:[%s1 + $0x9c0] sm:$0xff]
    %v338 = vld [vmem:[%s1 + $0x9c8] sm:$0xff]
    %v339 = vld [vmem:[%s1 + $0x9d0] sm:$0xff]
    %v340 = vld [vmem:[%s1 + $0x9d8] sm:$0xff]
    %v341 = vld [vmem:[%s1 + $0x9e0] sm:$0xff]
    %v342 = vld [vmem:[%s1 + $0x9e8] sm:$0xff]
    %v343 = vld [vmem:[%s1 + $0x9f0] sm:$0xff]
    %v344 = vld [vmem:[%s1 + $0x9f8] sm:$0xff]
    %v345 = vld [vmem:[%s1 + $0xa00] sm:$0xff]
    %v346 = vld [vmem:[%s1 + $0xa08] sm:$0xff]
    %v347 = vld [vmem:[%s1 + $0xa10] sm:$0xff]
    %v348 = vld [vmem:[%s1 + $0xa18] sm:$0xff]
    %v349 = vld [vmem:[%s1 + $0xa20] sm:$0xff]
    %v350 = vld [vmem:[%s1 + $0xa28] sm:$0xff]
    %v351 = vld [vmem:[%s1 + $0xa30] sm:$0xff]
    %v352 = vld [vmem:[%s1 + $0xa38] sm:$0xff]
    %v353 = vld [vmem:[%s1 + $0xa40] sm:$0xff]
    %v354 = vld [vmem:[%s1 + $0xa48] sm:$0xff]
    %v355 = vld [vmem:[%s1 + $0xa50] sm:$0xff]
    %v356 = vld [vmem:[%s1 + $0xa58] sm:$0xff]
    %v357 = vld [vmem:[%s1 + $0xa60] sm:$0xff]
    %v358 = vld [vmem:[%s1 + $0xa68] sm:$0xff]
    %v359 = vld [vmem:[%s1 + $0xa70] sm:$0xff]
    %v360 = vld [vmem:[%s1 + $0xa78] sm:$0xff]
    %v361 = vld [vmem:[%s1 + $0xa80] sm:$0xff]
    %v362 = vld [vmem:[%s1 + $0xa88] sm:$0xff]
    %v363 = vld [vmem:[%s1 + $0xa90] sm:$0xff]
    %v364 = vld [vmem:[%s1 + $0xa98] sm:$0xff]
    %v365 = vld [vmem:[%s1 + $0xaa0] sm:$0xff]
    %v366 = vld [vmem:[%s1 + $0xaa8] sm:$0xff]
    %v367 = vld [vmem:[%s1 + $0xab0] sm:$0xff]
    %v368 = vld [vmem:[%s1 + $0xab8] sm:$0xff]
    %v369 = vld [vmem:[%s1 + $0xac0] sm:$0xff]
    %v370 = vld [vmem:[%s1 + $0xac8] sm:$0xff]
    %v371 = vld [vmem:[%s1 + $0xad0] sm:$0xff]
    %v372 = vld [vmem:[%s1 + $0xad8] sm:$0xff]
    %v373 = vld [vmem:[%s1 + $0xae0] sm:$0xff]
    %v374 = vld [vmem:[%s1 + $0xae8] sm:$0xff]
    %v375 = vld [vmem:[%s1 + $0xaf0] sm:$0xff]
    %v376 = vld [vmem:[%s1 + $0xaf8] sm:$0xff]
    %v377 = vld [vmem:[%s1 + $0xb00] sm:$0xff]
    %v378 = vld [vmem:[%s1 + $0xb08] sm:$0xff]
    %v379 = vld [vmem:[%s1 + $0xb10] sm:$0xff]
    %v380 = vld [vmem:[%s1 + $0xb18] sm:$0xff]
    %v381 = vld [vmem:[%s1 + $0xb20] sm:$0xff]
    %v382 = vld [vmem:[%s1 + $0xb28] sm:$0xff]
    %v383 = vld [vmem:[%s1 + $0xb30] sm:$0xff]
    %v384 = vld [vmem:[%s1 + $0xb38] sm:$0xff]
    %v385 = vld [vmem:[%s1 + $0xb40] sm:$0xff]
    %v386 = vld [vmem:[%s1 + $0xb48] sm:$0xff]
    %v387 = vld [vmem:[%s1 + $0xb50] sm:$0xff]
    %v388 = vld [vmem:[%s1 + $0xb58] sm:$0xff]
    %v389 = vld [vmem:[%s1 + $0xb60] sm:$0xff]
    %v390 = vld [vmem:[%s1 + $0xb68] sm:$0xff]
    %v391 = vld [vmem:[%s1 + $0xb70] sm:$0xff]
    %v392 = vld [vmem:[%s1 + $0xb78] sm:$0xff]
    %v393 = vld [vmem:[%s1 + $0xb80] sm:$0xff]
    %v394 = vld [vmem:[%s1 + $0xb88] sm:$0xff]
    %v395 = vld [vmem:[%s1 + $0xb90] sm:$0xff]
    %v396 = vld [vmem:[%s1 + $0xb98] sm:$0xff]
    %v397 = vld [vmem:[%s1 + $0xba0] sm:$0xff]
    %v398 = vld [vmem:[%s1 + $0xba8] sm:$0xff]
    %v399 = vld [vmem:[%s1 + $0xbb0] sm:$0xff]
    %v400 = vld [vmem:[%s1 + $0xbb8] sm:$0xff]
    %v401 = vld [vmem:[%s1 + $0xbc0] sm:$0xff]
    %v402 = vld [vmem:[%s1 + $0xbc8] sm:$0xff]
    %v403 = vld [vmem:[%s1 + $0xbd0] sm:$0xff]
    %v404 = vld [vmem:[%s1 + $0xbd8] sm:$0xff]
    %v405 = vld [vmem:[%s1 + $0xbe0] sm:$0xff]
    %v406 = vld [vmem:[%s1 + $0xbe8] sm:$0xff]
    %v407 = vld [vmem:[%s1 + $0xbf0] sm:$0xff]
    %v408 = vld [vmem:[%s1 + $0xbf8] sm:$0xff]
    %v409 = vld [vmem:[%s1 + $0xc00] sm:$0xff]
    %v410 = vld [vmem:[%s1 + $0xc08] sm:$0xff]
    %v411 = vld [vmem:[%s1 + $0xc10] sm:$0xff]
    %v412 = vld [vmem:[%s1 + $0xc18] sm:$0xff]
    %v413 = vld [vmem:[%s1 + $0xc20] sm:$0xff]
    %v414 = vld [vmem:[%s1 + $0xc28] sm:$0xff]
    %v415 = vld [vmem:[%s1 + $0xc30] sm:$0xff]
    %v416 = vld [vmem:[%s1 + $0xc38] sm:$0xff]
    %v417 = vld [vmem:[%s1 + $0xc40] sm:$0xff]
    %v418 = vld [vmem:[%s1 + $0xc48] sm:$0xff]
    %v419 = vld [vmem:[%s1 + $0xc50] sm:$0xff]
    %v420 = vld [vmem:[%s1 + $0xc58] sm:$0xff]
    %v421 = vld [vmem:[%s1 + $0xc60] sm:$0xff]
    %v422 = vld [vmem:[%s1 + $0xc68] sm:$0xff]
    %v423 = vld [vmem:[%s1 + $0xc70] sm:$0xff]
    %v424 = vld [vmem:[%s1 + $0xc78] sm:$0xff]
    %v425 = vld [vmem:[%s1 + $0xc80] sm:$0xff]
    %v426 = vld [vmem:[%s1 + $0xc88] sm:$0xff]
    %v427 = vld [vmem:[%s1 + $0xc90] sm:$0xff]
    %v428 = vld [vmem:[%s1 + $0xc98] sm:$0xff]
    %v429 = vld [vmem:[%s1 + $0xca0] sm:$0xff]
    %v430 = vld [vmem:[%s1 + $0xca8] sm:$0xff]
    %v431 = vld [vmem:[%s1 + $0xcb0] sm:$0xff]
    %v432 = vld [vmem:[%s1 + $0xcb8] sm:$0xff]
    %v433 = vld [vmem:[%s1 + $0xcc0] sm:$0xff]
    %v434 = vld [vmem:[%s1 + $0xcc8] sm:$0xff]
    %v435 = vld [vmem:[%s1 + $0xcd0] sm:$0xff]
    %v436 = vld [vmem:[%s1 + $0xcd8] sm:$0xff]
    %v437 = vld [vmem:[%s1 + $0xce0] sm:$0xff]
    %v438 = vld [vmem:[%s1 + $0xce8] sm:$0xff]
    %v439 = vld [vmem:[%s1 + $0xcf0] sm:$0xff]
    %v440 = vld [vmem:[%s1 + $0xcf8] sm:$0xff]
    %v441 = vld [vmem:[%s1 + $0xd00] sm:$0xff]
    %v442 = vld [vmem:[%s1 + $0xd08] sm:$0xff]
    %v443 = vld [vmem:[%s1 + $0xd10] sm:$0xff]
    %v444 = vld [vmem:[%s1 + $0xd18] sm:$0xff]
    %v445 = vld [vmem:[%s1 + $0xd20] sm:$0xff]
    %v446 = vld [vmem:[%s1 + $0xd28] sm:$0xff]
    %v447 = vld [vmem:[%s1 + $0xd30] sm:$0xff]
    %v448 = vld [vmem:[%s1 + $0xd38] sm:$0xff]
    %v449 = vld [vmem:[%s1 + $0xd40] sm:$0xff]
    %v450 = vld [vmem:[%s1 + $0xd48] sm:$0xff]
    %v451 = vld [vmem:[%s1 + $0xd50] sm:$0xff]
    %v452 = vld [vmem:[%s1 + $0xd58] sm:$0xff]
    %v453 = vld [vmem:[%s1 + $0xd60] sm:$0xff]
    %v454 = vld [vmem:[%s1 + $0xd68] sm:$0xff]
    %v455 = vld [vmem:[%s1 + $0xd70] sm:$0xff]
    %v456 = vld [vmem:[%s1 + $0xd78] sm:$0xff]
    %v457 = vld [vmem:[%s1 + $0xd80] sm:$0xff]
    %v458 = vld [vmem:[%s1 + $0xd88] sm:$0xff]
    %v459 = vld [vmem:[%s1 + $0xd90] sm:$0xff]
    %v460 = vld [vmem:[%s1 + $0xd98] sm:$0xff]
    %v461 = vld [vmem:[%s1 + $0xda0] sm:$0xff]
    %v462 = vld [vmem:[%s1 + $0xda8] sm:$0xff]
    %v463 = vld [vmem:[%s1 + $0xdb0] sm:$0xff]
    %v464 = vld [vmem:[%s1 + $0xdb8] sm:$0xff]
    %v465 = vld [vmem:[%s1 + $0xdc0] sm:$0xff]
    %v466 = vld [vmem:[%s1 + $0xdc8] sm:$0xff]
    %v467 = vld [vmem:[%s1 + $0xdd0] sm:$0xff]
    %v468 = vld [vmem:[%s1 + $0xdd8] sm:$0xff]
    %v469 = vld [vmem:[%s1 + $0xde0] sm:$0xff]
    %v470 = vld [vmem:[%s1 + $0xde8] sm:$0xff]
    %v471 = vld [vmem:[%s1 + $0xdf0] sm:$0xff]
    %v472 = vld [vmem:[%s1 + $0xdf8] sm:$0xff]
    %v473 = vld [vmem:[%s1 + $0xe00] sm:$0xff]
    %v474 = vld [vmem:[%s1 + $0xe08] sm:$0xff]
    %v475 = vld [vmem:[%s1 + $0xe10] sm:$0xff]
    %v476 = vld [vmem:[%s1 + $0xe18] sm:$0xff]
    %v477 = vld [vmem:[%s1 + $0xe20] sm:$0xff]
    %v478 = vld [vmem:[%s1 + $0xe28] sm:$0xff]
    %v479 = vld [vmem:[%s1 + $0xe30] sm:$0xff]
    %v480 = vld [vmem:[%s1 + $0xe38] sm:$0xff]
    %v481 = vld [vmem:[%s1 + $0xe40] sm:$0xff]
    %v482 = vld [vmem:[%s1 + $0xe48] sm:$0xff]
    %v483 = vld [vmem:[%s1 + $0xe50] sm:$0xff]
    %v484 = vld [vmem:[%s1 + $0xe58] sm:$0xff]
    %v485 = vld [vmem:[%s1 + $0xe60] sm:$0xff]
    %v486 = vld [vmem:[%s1 + $0xe68] sm:$0xff]
    %v487 = vld [vmem:[%s1 + $0xe70] sm:$0xff]
    %v488 = vld [vmem:[%s1 + $0xe78] sm:$0xff]
    %v489 = vld [vmem:[%s1 + $0xe80] sm:$0xff]
    %v490 = vld [vmem:[%s1 + $0xe88] sm:$0xff]
    %v491 = vld [vmem:[%s1 + $0xe90] sm:$0xff]
    %v492 = vld [vmem:[%s1 + $0xe98] sm:$0xff]
    %v493 = vld [vmem:[%s1 + $0xea0] sm:$0xff]
    %v494 = vld [vmem:[%s1 + $0xea8] sm:$0xff]
    %v495 = vld [vmem:[%s1 + $0xeb0] sm:$0xff]
    %v496 = vld [vmem:[%s1 + $0xeb8] sm:$0xff]
    %v497 = vld [vmem:[%s1 + $0xec0] sm:$0xff]
    %v498 = vld [vmem:[%s1 + $0xec8] sm:$0xff]
    %v499 = vld [vmem:[%s1 + $0xed0] sm:$0xff]
    %v500 = vld [vmem:[%s1 + $0xed8] sm:$0xff]
    %v501 = vld [vmem:[%s1 + $0xee0] sm:$0xff]
    %v502 = vld [vmem:[%s1 + $0xee8] sm:$0xff]
    %v503 = vld [vmem:[%s1 + $0xef0] sm:$0xff]
    %v504 = vld [vmem:[%s1 + $0xef8] sm:$0xff]
    %v505 = vld [vmem:[%s1 + $0xf00] sm:$0xff]
    %v506 = vld [vmem:[%s1 + $0xf08] sm:$0xff]
    %v507 = vld [vmem:[%s1 + $0xf10] sm:$0xff]
    %v508 = vld [vmem:[%s1 + $0xf18] sm:$0xff]
    %v509 = vld [vmem:[%s1 + $0xf20] sm:$0xff]
    %v510 = vld [vmem:[%s1 + $0xf28] sm:$0xff]
    %v511 = vld [vmem:[%s1 + $0xf30] sm:$0xff]
    %v512 = vld [vmem:[%s1 + $0xf38] sm:$0xff]
    %v513 = vld [vmem:[%s1 + $0xf40] sm:$0xff]
    %v514 = vld [vmem:[%s1 + $0xf48] sm:$0xff]
    %v515 = vld [vmem:[%s1 + $0xf50] sm:$0xff]
    %v516 = vld [vmem:[%s1 + $0xf58] sm:$0xff]
    %v517 = vld [vmem:[%s1 + $0xf60] sm:$0xff]
    %v518 = vld [vmem:[%s1 + $0xf68] sm:$0xff]
    %v519 = vld [vmem:[%s1 + $0xf70] sm:$0xff]
    %v520 = vld [vmem:[%s1 + $0xf78] sm:$0xff]
    %v521 = vld [vmem:[%s1 + $0xf80] sm:$0xff]
    %v522 = vld [vmem:[%s1 + $0xf88] sm:$0xff]
    %v523 = vld [vmem:[%s1 + $0xf90] sm:$0xff]
    %v524 = vld [vmem:[%s1 + $0xf98] sm:$0xff]
    %v525 = vld [vmem:[%s1 + $0xfa0] sm:$0xff]
    %v526 = vld [vmem:[%s1 + $0xfa8] sm:$0xff]
    %v527 = vld [vmem:[%s1 + $0xfb0] sm:$0xff]
    %v528 = vld [vmem:[%s1 + $0xfb8] sm:$0xff]
    %v529 = vld [vmem:[%s1 + $0xfc0] sm:$0xff]
    %v530 = vld [vmem:[%s1 + $0xfc8] sm:$0xff]
    %v531 = vld [vmem:[%s1 + $0xfd0] sm:$0xff]
    %v532 = vld [vmem:[%s1 + $0xfd8] sm:$0xff]
    %v533 = vld [vmem:[%s1 + $0xfe0] sm:$0xff]
    %v534 = vld [vmem:[%s1 + $0xfe8] sm:$0xff]
    %v535 = vld [vmem:[%s1 + $0xff0] sm:$0xff]
    %v536 = vld [vmem:[%s1 + $0xff8] sm:$0xff]
    %v537 = vunpack.c.l.bf16 %v25
    %v538 = vunpack.c.h.bf16 %v25
    %v539 = vunpack.c.l.bf16 %v26
    %v540 = vunpack.c.h.bf16 %v26
    %v541 = vunpack.c.l.bf16 %v27
    %v542 = vunpack.c.h.bf16 %v27
    %v543 = vunpack.c.l.bf16 %v28
    %v544 = vunpack.c.h.bf16 %v28
    %v545 = vunpack.c.l.bf16 %v29
    %v546 = vunpack.c.h.bf16 %v29
    %v547 = vunpack.c.l.bf16 %v30
    %v548 = vunpack.c.h.bf16 %v30
    %v549 = vunpack.c.l.bf16 %v31
    %v550 = vunpack.c.h.bf16 %v31
    %v551 = vunpack.c.l.bf16 %v32
    %v552 = vunpack.c.h.bf16 %v32
    %v553 = vunpack.c.l.bf16 %v33
    %v554 = vunpack.c.h.bf16 %v33
    %v555 = vunpack.c.l.bf16 %v34
    %v556 = vunpack.c.h.bf16 %v34
    %v557 = vunpack.c.l.bf16 %v35
    %v558 = vunpack.c.h.bf16 %v35
    %v559 = vunpack.c.l.bf16 %v36
    %v560 = vunpack.c.h.bf16 %v36
    %v561 = vunpack.c.l.bf16 %v37
    %v562 = vunpack.c.h.bf16 %v37
    %v563 = vunpack.c.l.bf16 %v38
    %v564 = vunpack.c.h.bf16 %v38
    %v565 = vunpack.c.l.bf16 %v39
    %v566 = vunpack.c.h.bf16 %v39
    %v567 = vunpack.c.l.bf16 %v40
    %v568 = vunpack.c.h.bf16 %v40
    %v569 = vunpack.c.l.bf16 %v41
    %v570 = vunpack.c.h.bf16 %v41
    %v571 = vunpack.c.l.bf16 %v42
    %v572 = vunpack.c.h.bf16 %v42
    %v573 = vunpack.c.l.bf16 %v43
    %v574 = vunpack.c.h.bf16 %v43
    %v575 = vunpack.c.l.bf16 %v44
    %v576 = vunpack.c.h.bf16 %v44
    %v577 = vunpack.c.l.bf16 %v45
    %v578 = vunpack.c.h.bf16 %v45
    %v579 = vunpack.c.l.bf16 %v46
    %v580 = vunpack.c.h.bf16 %v46
    %v581 = vunpack.c.l.bf16 %v47
    %v582 = vunpack.c.h.bf16 %v47
    %v583 = vunpack.c.l.bf16 %v48
    %v584 = vunpack.c.h.bf16 %v48
    %v585 = vunpack.c.l.bf16 %v49
    %v586 = vunpack.c.h.bf16 %v49
    %v587 = vunpack.c.l.bf16 %v50
    %v588 = vunpack.c.h.bf16 %v50
    %v589 = vunpack.c.l.bf16 %v51
    %v590 = vunpack.c.h.bf16 %v51
    %v591 = vunpack.c.l.bf16 %v52
    %v592 = vunpack.c.h.bf16 %v52
    %v593 = vunpack.c.l.bf16 %v53
    %v594 = vunpack.c.h.bf16 %v53
    %v595 = vunpack.c.l.bf16 %v54
    %v596 = vunpack.c.h.bf16 %v54
    %v597 = vunpack.c.l.bf16 %v55
    %v598 = vunpack.c.h.bf16 %v55
    %v599 = vunpack.c.l.bf16 %v56
    %v600 = vunpack.c.h.bf16 %v56
    %v601 = vunpack.c.l.bf16 %v57
    %v602 = vunpack.c.h.bf16 %v57
    %v603 = vunpack.c.l.bf16 %v58
    %v604 = vunpack.c.h.bf16 %v58
    %v605 = vunpack.c.l.bf16 %v59
    %v606 = vunpack.c.h.bf16 %v59
    %v607 = vunpack.c.l.bf16 %v60
    %v608 = vunpack.c.h.bf16 %v60
    %v609 = vunpack.c.l.bf16 %v61
    %v610 = vunpack.c.h.bf16 %v61
    %v611 = vunpack.c.l.bf16 %v62
    %v612 = vunpack.c.h.bf16 %v62
    %v613 = vunpack.c.l.bf16 %v63
    %v614 = vunpack.c.h.bf16 %v63
    %v615 = vunpack.c.l.bf16 %v64
    %v616 = vunpack.c.h.bf16 %v64
    %v617 = vunpack.c.l.bf16 %v65
    %v618 = vunpack.c.h.bf16 %v65
    %v619 = vunpack.c.l.bf16 %v66
    %v620 = vunpack.c.h.bf16 %v66
    %v621 = vunpack.c.l.bf16 %v67
    %v622 = vunpack.c.h.bf16 %v67
    %v623 = vunpack.c.l.bf16 %v68
    %v624 = vunpack.c.h.bf16 %v68
    %v625 = vunpack.c.l.bf16 %v69
    %v626 = vunpack.c.h.bf16 %v69
    %v627 = vunpack.c.l.bf16 %v70
    %v628 = vunpack.c.h.bf16 %v70
    %v629 = vunpack.c.l.bf16 %v71
    %v630 = vunpack.c.h.bf16 %v71
    %v631 = vunpack.c.l.bf16 %v72
    %v632 = vunpack.c.h.bf16 %v72
    %v633 = vunpack.c.l.bf16 %v73
    %v634 = vunpack.c.h.bf16 %v73
    %v635 = vunpack.c.l.bf16 %v74
    %v636 = vunpack.c.h.bf16 %v74
    %v637 = vunpack.c.l.bf16 %v75
    %v638 = vunpack.c.h.bf16 %v75
    %v639 = vunpack.c.l.bf16 %v76
    %v640 = vunpack.c.h.bf16 %v76
    %v641 = vunpack.c.l.bf16 %v77
    %v642 = vunpack.c.h.bf16 %v77
    %v643 = vunpack.c.l.bf16 %v78
    %v644 = vunpack.c.h.bf16 %v78
    %v645 = vunpack.c.l.bf16 %v79
    %v646 = vunpack.c.h.bf16 %v79
    %v647 = vunpack.c.l.bf16 %v80
    %v648 = vunpack.c.h.bf16 %v80
    %v649 = vunpack.c.l.bf16 %v81
    %v650 = vunpack.c.h.bf16 %v81
    %v651 = vunpack.c.l.bf16 %v82
    %v652 = vunpack.c.h.bf16 %v82
    %v653 = vunpack.c.l.bf16 %v83
    %v654 = vunpack.c.h.bf16 %v83
    %v655 = vunpack.c.l.bf16 %v84
    %v656 = vunpack.c.h.bf16 %v84
    %v657 = vunpack.c.l.bf16 %v85
    %v658 = vunpack.c.h.bf16 %v85
    %v659 = vunpack.c.l.bf16 %v86
    %v660 = vunpack.c.h.bf16 %v86
    %v661 = vunpack.c.l.bf16 %v87
    %v662 = vunpack.c.h.bf16 %v87
    %v663 = vunpack.c.l.bf16 %v88
    %v664 = vunpack.c.h.bf16 %v88
    %v665 = vunpack.c.l.bf16 %v89
    %v666 = vunpack.c.h.bf16 %v89
    %v667 = vunpack.c.l.bf16 %v90
    %v668 = vunpack.c.h.bf16 %v90
    %v669 = vunpack.c.l.bf16 %v91
    %v670 = vunpack.c.h.bf16 %v91
    %v671 = vunpack.c.l.bf16 %v92
    %v672 = vunpack.c.h.bf16 %v92
    %v673 = vunpack.c.l.bf16 %v93
    %v674 = vunpack.c.h.bf16 %v93
    %v675 = vunpack.c.l.bf16 %v94
    %v676 = vunpack.c.h.bf16 %v94
    %v677 = vunpack.c.l.bf16 %v95
    %v678 = vunpack.c.h.bf16 %v95
    %v679 = vunpack.c.l.bf16 %v96
    %v680 = vunpack.c.h.bf16 %v96
    %v681 = vunpack.c.l.bf16 %v97
    %v682 = vunpack.c.h.bf16 %v97
    %v683 = vunpack.c.l.bf16 %v98
    %v684 = vunpack.c.h.bf16 %v98
    %v685 = vunpack.c.l.bf16 %v99
    %v686 = vunpack.c.h.bf16 %v99
    %v687 = vunpack.c.l.bf16 %v100
    %v688 = vunpack.c.h.bf16 %v100
    %v689 = vunpack.c.l.bf16 %v101
    %v690 = vunpack.c.h.bf16 %v101
    %v691 = vunpack.c.l.bf16 %v102
    %v692 = vunpack.c.h.bf16 %v102
    %v693 = vunpack.c.l.bf16 %v103
    %v694 = vunpack.c.h.bf16 %v103
    %v695 = vunpack.c.l.bf16 %v104
    %v696 = vunpack.c.h.bf16 %v104
    %v697 = vunpack.c.l.bf16 %v105
    %v698 = vunpack.c.h.bf16 %v105
    %v699 = vunpack.c.l.bf16 %v106
    %v700 = vunpack.c.h.bf16 %v106
    %v701 = vunpack.c.l.bf16 %v107
    %v702 = vunpack.c.h.bf16 %v107
    %v703 = vunpack.c.l.bf16 %v108
    %v704 = vunpack.c.h.bf16 %v108
    %v705 = vunpack.c.l.bf16 %v109
    %v706 = vunpack.c.h.bf16 %v109
    %v707 = vunpack.c.l.bf16 %v110
    %v708 = vunpack.c.h.bf16 %v110
    %v709 = vunpack.c.l.bf16 %v111
    %v710 = vunpack.c.h.bf16 %v111
    %v711 = vunpack.c.l.bf16 %v112
    %v712 = vunpack.c.h.bf16 %v112
    %v713 = vunpack.c.l.bf16 %v113
    %v714 = vunpack.c.h.bf16 %v113
    %v715 = vunpack.c.l.bf16 %v114
    %v716 = vunpack.c.h.bf16 %v114
    %v717 = vunpack.c.l.bf16 %v115
    %v718 = vunpack.c.h.bf16 %v115
    %v719 = vunpack.c.l.bf16 %v116
    %v720 = vunpack.c.h.bf16 %v116
    %v721 = vunpack.c.l.bf16 %v117
    %v722 = vunpack.c.h.bf16 %v117
    %v723 = vunpack.c.l.bf16 %v118
    %v724 = vunpack.c.h.bf16 %v118
    %v725 = vunpack.c.l.bf16 %v119
    %v726 = vunpack.c.h.bf16 %v119
    %v727 = vunpack.c.l.bf16 %v120
    %v728 = vunpack.c.h.bf16 %v120
    %v729 = vunpack.c.l.bf16 %v121
    %v730 = vunpack.c.h.bf16 %v121
    %v731 = vunpack.c.l.bf16 %v122
    %v732 = vunpack.c.h.bf16 %v122
    %v733 = vunpack.c.l.bf16 %v123
    %v734 = vunpack.c.h.bf16 %v123
    %v735 = vunpack.c.l.bf16 %v124
    %v736 = vunpack.c.h.bf16 %v124
    %v737 = vunpack.c.l.bf16 %v125
    %v738 = vunpack.c.h.bf16 %v125
    %v739 = vunpack.c.l.bf16 %v126
    %v740 = vunpack.c.h.bf16 %v126
    %v741 = vunpack.c.l.bf16 %v127
    %v742 = vunpack.c.h.bf16 %v127
    %v743 = vunpack.c.l.bf16 %v128
    %v744 = vunpack.c.h.bf16 %v128
    %v745 = vunpack.c.l.bf16 %v129
    %v746 = vunpack.c.h.bf16 %v129
    %v747 = vunpack.c.l.bf16 %v130
    %v748 = vunpack.c.h.bf16 %v130
    %v749 = vunpack.c.l.bf16 %v131
    %v750 = vunpack.c.h.bf16 %v131
    %v751 = vunpack.c.l.bf16 %v132
    %v752 = vunpack.c.h.bf16 %v132
    %v753 = vunpack.c.l.bf16 %v133
    %v754 = vunpack.c.h.bf16 %v133
    %v755 = vunpack.c.l.bf16 %v134
    %v756 = vunpack.c.h.bf16 %v134
    %v757 = vunpack.c.l.bf16 %v135
    %v758 = vunpack.c.h.bf16 %v135
    %v759 = vunpack.c.l.bf16 %v136
    %v760 = vunpack.c.h.bf16 %v136
    %v761 = vunpack.c.l.bf16 %v137
    %v762 = vunpack.c.h.bf16 %v137
    %v763 = vunpack.c.l.bf16 %v138
    %v764 = vunpack.c.h.bf16 %v138
    %v765 = vunpack.c.l.bf16 %v139
    %v766 = vunpack.c.h.bf16 %v139
    %v767 = vunpack.c.l.bf16 %v140
    %v768 = vunpack.c.h.bf16 %v140
    %v769 = vunpack.c.l.bf16 %v141
    %v770 = vunpack.c.h.bf16 %v141
    %v771 = vunpack.c.l.bf16 %v142
    %v772 = vunpack.c.h.bf16 %v142
    %v773 = vunpack.c.l.bf16 %v143
    %v774 = vunpack.c.h.bf16 %v143
    %v775 = vunpack.c.l.bf16 %v144
    %v776 = vunpack.c.h.bf16 %v144
    %v777 = vunpack.c.l.bf16 %v145
    %v778 = vunpack.c.h.bf16 %v145
    %v779 = vunpack.c.l.bf16 %v146
    %v780 = vunpack.c.h.bf16 %v146
    %v781 = vunpack.c.l.bf16 %v147
    %v782 = vunpack.c.h.bf16 %v147
    %v783 = vunpack.c.l.bf16 %v148
    %v784 = vunpack.c.h.bf16 %v148
    %v785 = vunpack.c.l.bf16 %v149
    %v786 = vunpack.c.h.bf16 %v149
    %v787 = vunpack.c.l.bf16 %v150
    %v788 = vunpack.c.h.bf16 %v150
    %v789 = vunpack.c.l.bf16 %v151
    %v790 = vunpack.c.h.bf16 %v151
    %v791 = vunpack.c.l.bf16 %v152
    %v792 = vunpack.c.h.bf16 %v152
    %v793 = vunpack.c.l.bf16 %v153
    %v794 = vunpack.c.h.bf16 %v153
    %v795 = vunpack.c.l.bf16 %v154
    %v796 = vunpack.c.h.bf16 %v154
    %v797 = vunpack.c.l.bf16 %v155
    %v798 = vunpack.c.h.bf16 %v155
    %v799 = vunpack.c.l.bf16 %v156
    %v800 = vunpack.c.h.bf16 %v156
    %v801 = vunpack.c.l.bf16 %v157
    %v802 = vunpack.c.h.bf16 %v157
    %v803 = vunpack.c.l.bf16 %v158
    %v804 = vunpack.c.h.bf16 %v158
    %v805 = vunpack.c.l.bf16 %v159
    %v806 = vunpack.c.h.bf16 %v159
    %v807 = vunpack.c.l.bf16 %v160
    %v808 = vunpack.c.h.bf16 %v160
    %v809 = vunpack.c.l.bf16 %v161
    %v810 = vunpack.c.h.bf16 %v161
    %v811 = vunpack.c.l.bf16 %v162
    %v812 = vunpack.c.h.bf16 %v162
    %v813 = vunpack.c.l.bf16 %v163
    %v814 = vunpack.c.h.bf16 %v163
    %v815 = vunpack.c.l.bf16 %v164
    %v816 = vunpack.c.h.bf16 %v164
    %v817 = vunpack.c.l.bf16 %v165
    %v818 = vunpack.c.h.bf16 %v165
    %v819 = vunpack.c.l.bf16 %v166
    %v820 = vunpack.c.h.bf16 %v166
    %v821 = vunpack.c.l.bf16 %v167
    %v822 = vunpack.c.h.bf16 %v167
    %v823 = vunpack.c.l.bf16 %v168
    %v824 = vunpack.c.h.bf16 %v168
    %v825 = vunpack.c.l.bf16 %v169
    %v826 = vunpack.c.h.bf16 %v169
    %v827 = vunpack.c.l.bf16 %v170
    %v828 = vunpack.c.h.bf16 %v170
    %v829 = vunpack.c.l.bf16 %v171
    %v830 = vunpack.c.h.bf16 %v171
    %v831 = vunpack.c.l.bf16 %v172
    %v832 = vunpack.c.h.bf16 %v172
    %v833 = vunpack.c.l.bf16 %v173
    %v834 = vunpack.c.h.bf16 %v173
    %v835 = vunpack.c.l.bf16 %v174
    %v836 = vunpack.c.h.bf16 %v174
    %v837 = vunpack.c.l.bf16 %v175
    %v838 = vunpack.c.h.bf16 %v175
    %v839 = vunpack.c.l.bf16 %v176
    %v840 = vunpack.c.h.bf16 %v176
    %v841 = vunpack.c.l.bf16 %v177
    %v842 = vunpack.c.h.bf16 %v177
    %v843 = vunpack.c.l.bf16 %v178
    %v844 = vunpack.c.h.bf16 %v178
    %v845 = vunpack.c.l.bf16 %v179
    %v846 = vunpack.c.h.bf16 %v179
    %v847 = vunpack.c.l.bf16 %v180
    %v848 = vunpack.c.h.bf16 %v180
    %v849 = vunpack.c.l.bf16 %v181
    %v850 = vunpack.c.h.bf16 %v181
    %v851 = vunpack.c.l.bf16 %v182
    %v852 = vunpack.c.h.bf16 %v182
    %v853 = vunpack.c.l.bf16 %v183
    %v854 = vunpack.c.h.bf16 %v183
    %v855 = vunpack.c.l.bf16 %v184
    %v856 = vunpack.c.h.bf16 %v184
    %v857 = vunpack.c.l.bf16 %v185
    %v858 = vunpack.c.h.bf16 %v185
    %v859 = vunpack.c.l.bf16 %v186
    %v860 = vunpack.c.h.bf16 %v186
    %v861 = vunpack.c.l.bf16 %v187
    %v862 = vunpack.c.h.bf16 %v187
    %v863 = vunpack.c.l.bf16 %v188
    %v864 = vunpack.c.h.bf16 %v188
    %v865 = vunpack.c.l.bf16 %v189
    %v866 = vunpack.c.h.bf16 %v189
    %v867 = vunpack.c.l.bf16 %v190
    %v868 = vunpack.c.h.bf16 %v190
    %v869 = vunpack.c.l.bf16 %v191
    %v870 = vunpack.c.h.bf16 %v191
    %v871 = vunpack.c.l.bf16 %v192
    %v872 = vunpack.c.h.bf16 %v192
    %v873 = vunpack.c.l.bf16 %v193
    %v874 = vunpack.c.h.bf16 %v193
    %v875 = vunpack.c.l.bf16 %v194
    %v876 = vunpack.c.h.bf16 %v194
    %v877 = vunpack.c.l.bf16 %v195
    %v878 = vunpack.c.h.bf16 %v195
    %v879 = vunpack.c.l.bf16 %v196
    %v880 = vunpack.c.h.bf16 %v196
    %v881 = vunpack.c.l.bf16 %v197
    %v882 = vunpack.c.h.bf16 %v197
    %v883 = vunpack.c.l.bf16 %v198
    %v884 = vunpack.c.h.bf16 %v198
    %v885 = vunpack.c.l.bf16 %v199
    %v886 = vunpack.c.h.bf16 %v199
    %v887 = vunpack.c.l.bf16 %v200
    %v888 = vunpack.c.h.bf16 %v200
    %v889 = vunpack.c.l.bf16 %v201
    %v890 = vunpack.c.h.bf16 %v201
    %v891 = vunpack.c.l.bf16 %v202
    %v892 = vunpack.c.h.bf16 %v202
    %v893 = vunpack.c.l.bf16 %v203
    %v894 = vunpack.c.h.bf16 %v203
    %v895 = vunpack.c.l.bf16 %v204
    %v896 = vunpack.c.h.bf16 %v204
    %v897 = vunpack.c.l.bf16 %v205
    %v898 = vunpack.c.h.bf16 %v205
    %v899 = vunpack.c.l.bf16 %v206
    %v900 = vunpack.c.h.bf16 %v206
    %v901 = vunpack.c.l.bf16 %v207
    %v902 = vunpack.c.h.bf16 %v207
    %v903 = vunpack.c.l.bf16 %v208
    %v904 = vunpack.c.h.bf16 %v208
    %v905 = vunpack.c.l.bf16 %v209
    %v906 = vunpack.c.h.bf16 %v209
    %v907 = vunpack.c.l.bf16 %v210
    %v908 = vunpack.c.h.bf16 %v210
    %v909 = vunpack.c.l.bf16 %v211
    %v910 = vunpack.c.h.bf16 %v211
    %v911 = vunpack.c.l.bf16 %v212
    %v912 = vunpack.c.h.bf16 %v212
    %v913 = vunpack.c.l.bf16 %v213
    %v914 = vunpack.c.h.bf16 %v213
    %v915 = vunpack.c.l.bf16 %v214
    %v916 = vunpack.c.h.bf16 %v214
    %v917 = vunpack.c.l.bf16 %v215
    %v918 = vunpack.c.h.bf16 %v215
    %v919 = vunpack.c.l.bf16 %v216
    %v920 = vunpack.c.h.bf16 %v216
    %v921 = vunpack.c.l.bf16 %v217
    %v922 = vunpack.c.h.bf16 %v217
    %v923 = vunpack.c.l.bf16 %v218
    %v924 = vunpack.c.h.bf16 %v218
    %v925 = vunpack.c.l.bf16 %v219
    %v926 = vunpack.c.h.bf16 %v219
    %v927 = vunpack.c.l.bf16 %v220
    %v928 = vunpack.c.h.bf16 %v220
    %v929 = vunpack.c.l.bf16 %v221
    %v930 = vunpack.c.h.bf16 %v221
    %v931 = vunpack.c.l.bf16 %v222
    %v932 = vunpack.c.h.bf16 %v222
    %v933 = vunpack.c.l.bf16 %v223
    %v934 = vunpack.c.h.bf16 %v223
    %v935 = vunpack.c.l.bf16 %v224
    %v936 = vunpack.c.h.bf16 %v224
    %v937 = vunpack.c.l.bf16 %v225
    %v938 = vunpack.c.h.bf16 %v225
    %v939 = vunpack.c.l.bf16 %v226
    %v940 = vunpack.c.h.bf16 %v226
    %v941 = vunpack.c.l.bf16 %v227
    %v942 = vunpack.c.h.bf16 %v227
    %v943 = vunpack.c.l.bf16 %v228
    %v944 = vunpack.c.h.bf16 %v228
    %v945 = vunpack.c.l.bf16 %v229
    %v946 = vunpack.c.h.bf16 %v229
    %v947 = vunpack.c.l.bf16 %v230
    %v948 = vunpack.c.h.bf16 %v230
    %v949 = vunpack.c.l.bf16 %v231
    %v950 = vunpack.c.h.bf16 %v231
    %v951 = vunpack.c.l.bf16 %v232
    %v952 = vunpack.c.h.bf16 %v232
    %v953 = vunpack.c.l.bf16 %v233
    %v954 = vunpack.c.h.bf16 %v233
    %v955 = vunpack.c.l.bf16 %v234
    %v956 = vunpack.c.h.bf16 %v234
    %v957 = vunpack.c.l.bf16 %v235
    %v958 = vunpack.c.h.bf16 %v235
    %v959 = vunpack.c.l.bf16 %v236
    %v960 = vunpack.c.h.bf16 %v236
    %v961 = vunpack.c.l.bf16 %v237
    %v962 = vunpack.c.h.bf16 %v237
    %v963 = vunpack.c.l.bf16 %v238
    %v964 = vunpack.c.h.bf16 %v238
    %v965 = vunpack.c.l.bf16 %v239
    %v966 = vunpack.c.h.bf16 %v239
    %v967 = vunpack.c.l.bf16 %v240
    %v968 = vunpack.c.h.bf16 %v240
    %v969 = vunpack.c.l.bf16 %v241
    %v970 = vunpack.c.h.bf16 %v241
    %v971 = vunpack.c.l.bf16 %v242
    %v972 = vunpack.c.h.bf16 %v242
    %v973 = vunpack.c.l.bf16 %v243
    %v974 = vunpack.c.h.bf16 %v243
    %v975 = vunpack.c.l.bf16 %v244
    %v976 = vunpack.c.h.bf16 %v244
    %v977 = vunpack.c.l.bf16 %v245
    %v978 = vunpack.c.h.bf16 %v245
    %v979 = vunpack.c.l.bf16 %v246
    %v980 = vunpack.c.h.bf16 %v246
    %v981 = vunpack.c.l.bf16 %v247
    %v982 = vunpack.c.h.bf16 %v247
    %v983 = vunpack.c.l.bf16 %v248
    %v984 = vunpack.c.h.bf16 %v248
    %v985 = vunpack.c.l.bf16 %v249
    %v986 = vunpack.c.h.bf16 %v249
    %v987 = vunpack.c.l.bf16 %v250
    %v988 = vunpack.c.h.bf16 %v250
    %v989 = vunpack.c.l.bf16 %v251
    %v990 = vunpack.c.h.bf16 %v251
    %v991 = vunpack.c.l.bf16 %v252
    %v992 = vunpack.c.h.bf16 %v252
    %v993 = vunpack.c.l.bf16 %v253
    %v994 = vunpack.c.h.bf16 %v253
    %v995 = vunpack.c.l.bf16 %v254
    %v996 = vunpack.c.h.bf16 %v254
    %v997 = vunpack.c.l.bf16 %v255
    %v998 = vunpack.c.h.bf16 %v255
    %v999 = vunpack.c.l.bf16 %v256
    %v1000 = vunpack.c.h.bf16 %v256
    %v1001 = vunpack.c.l.bf16 %v257
    %v1002 = vunpack.c.h.bf16 %v257
    %v1003 = vunpack.c.l.bf16 %v258
    %v1004 = vunpack.c.h.bf16 %v258
    %v1005 = vunpack.c.l.bf16 %v259
    %v1006 = vunpack.c.h.bf16 %v259
    %v1007 = vunpack.c.l.bf16 %v260
    %v1008 = vunpack.c.h.bf16 %v260
    %v1009 = vunpack.c.l.bf16 %v261
    %v1010 = vunpack.c.h.bf16 %v261
    %v1011 = vunpack.c.l.bf16 %v262
    %v1012 = vunpack.c.h.bf16 %v262
    %v1013 = vunpack.c.l.bf16 %v263
    %v1014 = vunpack.c.h.bf16 %v263
    %v1015 = vunpack.c.l.bf16 %v264
    %v1016 = vunpack.c.h.bf16 %v264
    %v1017 = vunpack.c.l.bf16 %v265
    %v1018 = vunpack.c.h.bf16 %v265
    %v1019 = vunpack.c.l.bf16 %v266
    %v1020 = vunpack.c.h.bf16 %v266
    %v1021 = vunpack.c.l.bf16 %v267
    %v1022 = vunpack.c.h.bf16 %v267
    %v1023 = vunpack.c.l.bf16 %v268
    %v1024 = vunpack.c.h.bf16 %v268
    %v1025 = vunpack.c.l.bf16 %v269
    %v1026 = vunpack.c.h.bf16 %v269
    %v1027 = vunpack.c.l.bf16 %v270
    %v1028 = vunpack.c.h.bf16 %v270
    %v1029 = vunpack.c.l.bf16 %v271
    %v1030 = vunpack.c.h.bf16 %v271
    %v1031 = vunpack.c.l.bf16 %v272
    %v1032 = vunpack.c.h.bf16 %v272
    %v1033 = vunpack.c.l.bf16 %v273
    %v1034 = vunpack.c.h.bf16 %v273
    %v1035 = vunpack.c.l.bf16 %v274
    %v1036 = vunpack.c.h.bf16 %v274
    %v1037 = vunpack.c.l.bf16 %v275
    %v1038 = vunpack.c.h.bf16 %v275
    %v1039 = vunpack.c.l.bf16 %v276
    %v1040 = vunpack.c.h.bf16 %v276
    %v1041 = vunpack.c.l.bf16 %v277
    %v1042 = vunpack.c.h.bf16 %v277
    %v1043 = vunpack.c.l.bf16 %v278
    %v1044 = vunpack.c.h.bf16 %v278
    %v1045 = vunpack.c.l.bf16 %v279
    %v1046 = vunpack.c.h.bf16 %v279
    %v1047 = vunpack.c.l.bf16 %v280
    %v1048 = vunpack.c.h.bf16 %v280
    %v1049 = vunpack.c.l.bf16 %v281
    %v1050 = vunpack.c.h.bf16 %v281
    %v1051 = vunpack.c.l.bf16 %v282
    %v1052 = vunpack.c.h.bf16 %v282
    %v1053 = vunpack.c.l.bf16 %v283
    %v1054 = vunpack.c.h.bf16 %v283
    %v1055 = vunpack.c.l.bf16 %v284
    %v1056 = vunpack.c.h.bf16 %v284
    %v1057 = vunpack.c.l.bf16 %v285
    %v1058 = vunpack.c.h.bf16 %v285
    %v1059 = vunpack.c.l.bf16 %v286
    %v1060 = vunpack.c.h.bf16 %v286
    %v1061 = vunpack.c.l.bf16 %v287
    %v1062 = vunpack.c.h.bf16 %v287
    %v1063 = vunpack.c.l.bf16 %v288
    %v1064 = vunpack.c.h.bf16 %v288
    %v1065 = vunpack.c.l.bf16 %v289
    %v1066 = vunpack.c.h.bf16 %v289
    %v1067 = vunpack.c.l.bf16 %v290
    %v1068 = vunpack.c.h.bf16 %v290
    %v1069 = vunpack.c.l.bf16 %v291
    %v1070 = vunpack.c.h.bf16 %v291
    %v1071 = vunpack.c.l.bf16 %v292
    %v1072 = vunpack.c.h.bf16 %v292
    %v1073 = vunpack.c.l.bf16 %v293
    %v1074 = vunpack.c.h.bf16 %v293
    %v1075 = vunpack.c.l.bf16 %v294
    %v1076 = vunpack.c.h.bf16 %v294
    %v1077 = vunpack.c.l.bf16 %v295
    %v1078 = vunpack.c.h.bf16 %v295
    %v1079 = vunpack.c.l.bf16 %v296
    %v1080 = vunpack.c.h.bf16 %v296
    %v1081 = vunpack.c.l.bf16 %v297
    %v1082 = vunpack.c.h.bf16 %v297
    %v1083 = vunpack.c.l.bf16 %v298
    %v1084 = vunpack.c.h.bf16 %v298
    %v1085 = vunpack.c.l.bf16 %v299
    %v1086 = vunpack.c.h.bf16 %v299
    %v1087 = vunpack.c.l.bf16 %v300
    %v1088 = vunpack.c.h.bf16 %v300
    %v1089 = vunpack.c.l.bf16 %v301
    %v1090 = vunpack.c.h.bf16 %v301
    %v1091 = vunpack.c.l.bf16 %v302
    %v1092 = vunpack.c.h.bf16 %v302
    %v1093 = vunpack.c.l.bf16 %v303
    %v1094 = vunpack.c.h.bf16 %v303
    %v1095 = vunpack.c.l.bf16 %v304
    %v1096 = vunpack.c.h.bf16 %v304
    %v1097 = vunpack.c.l.bf16 %v305
    %v1098 = vunpack.c.h.bf16 %v305
    %v1099 = vunpack.c.l.bf16 %v306
    %v1100 = vunpack.c.h.bf16 %v306
    %v1101 = vunpack.c.l.bf16 %v307
    %v1102 = vunpack.c.h.bf16 %v307
    %v1103 = vunpack.c.l.bf16 %v308
    %v1104 = vunpack.c.h.bf16 %v308
    %v1105 = vunpack.c.l.bf16 %v309
    %v1106 = vunpack.c.h.bf16 %v309
    %v1107 = vunpack.c.l.bf16 %v310
    %v1108 = vunpack.c.h.bf16 %v310
    %v1109 = vunpack.c.l.bf16 %v311
    %v1110 = vunpack.c.h.bf16 %v311
    %v1111 = vunpack.c.l.bf16 %v312
    %v1112 = vunpack.c.h.bf16 %v312
    %v1113 = vunpack.c.l.bf16 %v313
    %v1114 = vunpack.c.h.bf16 %v313
    %v1115 = vunpack.c.l.bf16 %v314
    %v1116 = vunpack.c.h.bf16 %v314
    %v1117 = vunpack.c.l.bf16 %v315
    %v1118 = vunpack.c.h.bf16 %v315
    %v1119 = vunpack.c.l.bf16 %v316
    %v1120 = vunpack.c.h.bf16 %v316
    %v1121 = vunpack.c.l.bf16 %v317
    %v1122 = vunpack.c.h.bf16 %v317
    %v1123 = vunpack.c.l.bf16 %v318
    %v1124 = vunpack.c.h.bf16 %v318
    %v1125 = vunpack.c.l.bf16 %v319
    %v1126 = vunpack.c.h.bf16 %v319
    %v1127 = vunpack.c.l.bf16 %v320
    %v1128 = vunpack.c.h.bf16 %v320
    %v1129 = vunpack.c.l.bf16 %v321
    %v1130 = vunpack.c.h.bf16 %v321
    %v1131 = vunpack.c.l.bf16 %v322
    %v1132 = vunpack.c.h.bf16 %v322
    %v1133 = vunpack.c.l.bf16 %v323
    %v1134 = vunpack.c.h.bf16 %v323
    %v1135 = vunpack.c.l.bf16 %v324
    %v1136 = vunpack.c.h.bf16 %v324
    %v1137 = vunpack.c.l.bf16 %v325
    %v1138 = vunpack.c.h.bf16 %v325
    %v1139 = vunpack.c.l.bf16 %v326
    %v1140 = vunpack.c.h.bf16 %v326
    %v1141 = vunpack.c.l.bf16 %v327
    %v1142 = vunpack.c.h.bf16 %v327
    %v1143 = vunpack.c.l.bf16 %v328
    %v1144 = vunpack.c.h.bf16 %v328
    %v1145 = vunpack.c.l.bf16 %v329
    %v1146 = vunpack.c.h.bf16 %v329
    %v1147 = vunpack.c.l.bf16 %v330
    %v1148 = vunpack.c.h.bf16 %v330
    %v1149 = vunpack.c.l.bf16 %v331
    %v1150 = vunpack.c.h.bf16 %v331
    %v1151 = vunpack.c.l.bf16 %v332
    %v1152 = vunpack.c.h.bf16 %v332
    %v1153 = vunpack.c.l.bf16 %v333
    %v1154 = vunpack.c.h.bf16 %v333
    %v1155 = vunpack.c.l.bf16 %v334
    %v1156 = vunpack.c.h.bf16 %v334
    %v1157 = vunpack.c.l.bf16 %v335
    %v1158 = vunpack.c.h.bf16 %v335
    %v1159 = vunpack.c.l.bf16 %v336
    %v1160 = vunpack.c.h.bf16 %v336
    %v1161 = vunpack.c.l.bf16 %v337
    %v1162 = vunpack.c.h.bf16 %v337
    %v1163 = vunpack.c.l.bf16 %v338
    %v1164 = vunpack.c.h.bf16 %v338
    %v1165 = vunpack.c.l.bf16 %v339
    %v1166 = vunpack.c.h.bf16 %v339
    %v1167 = vunpack.c.l.bf16 %v340
    %v1168 = vunpack.c.h.bf16 %v340
    %v1169 = vunpack.c.l.bf16 %v341
    %v1170 = vunpack.c.h.bf16 %v341
    %v1171 = vunpack.c.l.bf16 %v342
    %v1172 = vunpack.c.h.bf16 %v342
    %v1173 = vunpack.c.l.bf16 %v343
    %v1174 = vunpack.c.h.bf16 %v343
    %v1175 = vunpack.c.l.bf16 %v344
    %v1176 = vunpack.c.h.bf16 %v344
    %v1177 = vunpack.c.l.bf16 %v345
    %v1178 = vunpack.c.h.bf16 %v345
    %v1179 = vunpack.c.l.bf16 %v346
    %v1180 = vunpack.c.h.bf16 %v346
    %v1181 = vunpack.c.l.bf16 %v347
    %v1182 = vunpack.c.h.bf16 %v347
    %v1183 = vunpack.c.l.bf16 %v348
    %v1184 = vunpack.c.h.bf16 %v348
    %v1185 = vunpack.c.l.bf16 %v349
    %v1186 = vunpack.c.h.bf16 %v349
    %v1187 = vunpack.c.l.bf16 %v350
    %v1188 = vunpack.c.h.bf16 %v350
    %v1189 = vunpack.c.l.bf16 %v351
    %v1190 = vunpack.c.h.bf16 %v351
    %v1191 = vunpack.c.l.bf16 %v352
    %v1192 = vunpack.c.h.bf16 %v352
    %v1193 = vunpack.c.l.bf16 %v353
    %v1194 = vunpack.c.h.bf16 %v353
    %v1195 = vunpack.c.l.bf16 %v354
    %v1196 = vunpack.c.h.bf16 %v354
    %v1197 = vunpack.c.l.bf16 %v355
    %v1198 = vunpack.c.h.bf16 %v355
    %v1199 = vunpack.c.l.bf16 %v356
    %v1200 = vunpack.c.h.bf16 %v356
    %v1201 = vunpack.c.l.bf16 %v357
    %v1202 = vunpack.c.h.bf16 %v357
    %v1203 = vunpack.c.l.bf16 %v358
    %v1204 = vunpack.c.h.bf16 %v358
    %v1205 = vunpack.c.l.bf16 %v359
    %v1206 = vunpack.c.h.bf16 %v359
    %v1207 = vunpack.c.l.bf16 %v360
    %v1208 = vunpack.c.h.bf16 %v360
    %v1209 = vunpack.c.l.bf16 %v361
    %v1210 = vunpack.c.h.bf16 %v361
    %v1211 = vunpack.c.l.bf16 %v362
    %v1212 = vunpack.c.h.bf16 %v362
    %v1213 = vunpack.c.l.bf16 %v363
    %v1214 = vunpack.c.h.bf16 %v363
    %v1215 = vunpack.c.l.bf16 %v364
    %v1216 = vunpack.c.h.bf16 %v364
    %v1217 = vunpack.c.l.bf16 %v365
    %v1218 = vunpack.c.h.bf16 %v365
    %v1219 = vunpack.c.l.bf16 %v366
    %v1220 = vunpack.c.h.bf16 %v366
    %v1221 = vunpack.c.l.bf16 %v367
    %v1222 = vunpack.c.h.bf16 %v367
    %v1223 = vunpack.c.l.bf16 %v368
    %v1224 = vunpack.c.h.bf16 %v368
    %v1225 = vunpack.c.l.bf16 %v369
    %v1226 = vunpack.c.h.bf16 %v369
    %v1227 = vunpack.c.l.bf16 %v370
    %v1228 = vunpack.c.h.bf16 %v370
    %v1229 = vunpack.c.l.bf16 %v371
    %v1230 = vunpack.c.h.bf16 %v371
    %v1231 = vunpack.c.l.bf16 %v372
    %v1232 = vunpack.c.h.bf16 %v372
    %v1233 = vunpack.c.l.bf16 %v373
    %v1234 = vunpack.c.h.bf16 %v373
    %v1235 = vunpack.c.l.bf16 %v374
    %v1236 = vunpack.c.h.bf16 %v374
    %v1237 = vunpack.c.l.bf16 %v375
    %v1238 = vunpack.c.h.bf16 %v375
    %v1239 = vunpack.c.l.bf16 %v376
    %v1240 = vunpack.c.h.bf16 %v376
    %v1241 = vunpack.c.l.bf16 %v377
    %v1242 = vunpack.c.h.bf16 %v377
    %v1243 = vunpack.c.l.bf16 %v378
    %v1244 = vunpack.c.h.bf16 %v378
    %v1245 = vunpack.c.l.bf16 %v379
    %v1246 = vunpack.c.h.bf16 %v379
    %v1247 = vunpack.c.l.bf16 %v380
    %v1248 = vunpack.c.h.bf16 %v380
    %v1249 = vunpack.c.l.bf16 %v381
    %v1250 = vunpack.c.h.bf16 %v381
    %v1251 = vunpack.c.l.bf16 %v382
    %v1252 = vunpack.c.h.bf16 %v382
    %v1253 = vunpack.c.l.bf16 %v383
    %v1254 = vunpack.c.h.bf16 %v383
    %v1255 = vunpack.c.l.bf16 %v384
    %v1256 = vunpack.c.h.bf16 %v384
    %v1257 = vunpack.c.l.bf16 %v385
    %v1258 = vunpack.c.h.bf16 %v385
    %v1259 = vunpack.c.l.bf16 %v386
    %v1260 = vunpack.c.h.bf16 %v386
    %v1261 = vunpack.c.l.bf16 %v387
    %v1262 = vunpack.c.h.bf16 %v387
    %v1263 = vunpack.c.l.bf16 %v388
    %v1264 = vunpack.c.h.bf16 %v388
    %v1265 = vunpack.c.l.bf16 %v389
    %v1266 = vunpack.c.h.bf16 %v389
    %v1267 = vunpack.c.l.bf16 %v390
    %v1268 = vunpack.c.h.bf16 %v390
    %v1269 = vunpack.c.l.bf16 %v391
    %v1270 = vunpack.c.h.bf16 %v391
    %v1271 = vunpack.c.l.bf16 %v392
    %v1272 = vunpack.c.h.bf16 %v392
    %v1273 = vunpack.c.l.bf16 %v393
    %v1274 = vunpack.c.h.bf16 %v393
    %v1275 = vunpack.c.l.bf16 %v394
    %v1276 = vunpack.c.h.bf16 %v394
    %v1277 = vunpack.c.l.bf16 %v395
    %v1278 = vunpack.c.h.bf16 %v395
    %v1279 = vunpack.c.l.bf16 %v396
    %v1280 = vunpack.c.h.bf16 %v396
    %v1281 = vunpack.c.l.bf16 %v397
    %v1282 = vunpack.c.h.bf16 %v397
    %v1283 = vunpack.c.l.bf16 %v398
    %v1284 = vunpack.c.h.bf16 %v398
    %v1285 = vunpack.c.l.bf16 %v399
    %v1286 = vunpack.c.h.bf16 %v399
    %v1287 = vunpack.c.l.bf16 %v400
    %v1288 = vunpack.c.h.bf16 %v400
    %v1289 = vunpack.c.l.bf16 %v401
    %v1290 = vunpack.c.h.bf16 %v401
    %v1291 = vunpack.c.l.bf16 %v402
    %v1292 = vunpack.c.h.bf16 %v402
    %v1293 = vunpack.c.l.bf16 %v403
    %v1294 = vunpack.c.h.bf16 %v403
    %v1295 = vunpack.c.l.bf16 %v404
    %v1296 = vunpack.c.h.bf16 %v404
    %v1297 = vunpack.c.l.bf16 %v405
    %v1298 = vunpack.c.h.bf16 %v405
    %v1299 = vunpack.c.l.bf16 %v406
    %v1300 = vunpack.c.h.bf16 %v406
    %v1301 = vunpack.c.l.bf16 %v407
    %v1302 = vunpack.c.h.bf16 %v407
    %v1303 = vunpack.c.l.bf16 %v408
    %v1304 = vunpack.c.h.bf16 %v408
    %v1305 = vunpack.c.l.bf16 %v409
    %v1306 = vunpack.c.h.bf16 %v409
    %v1307 = vunpack.c.l.bf16 %v410
    %v1308 = vunpack.c.h.bf16 %v410
    %v1309 = vunpack.c.l.bf16 %v411
    %v1310 = vunpack.c.h.bf16 %v411
    %v1311 = vunpack.c.l.bf16 %v412
    %v1312 = vunpack.c.h.bf16 %v412
    %v1313 = vunpack.c.l.bf16 %v413
    %v1314 = vunpack.c.h.bf16 %v413
    %v1315 = vunpack.c.l.bf16 %v414
    %v1316 = vunpack.c.h.bf16 %v414
    %v1317 = vunpack.c.l.bf16 %v415
    %v1318 = vunpack.c.h.bf16 %v415
    %v1319 = vunpack.c.l.bf16 %v416
    %v1320 = vunpack.c.h.bf16 %v416
    %v1321 = vunpack.c.l.bf16 %v417
    %v1322 = vunpack.c.h.bf16 %v417
    %v1323 = vunpack.c.l.bf16 %v418
    %v1324 = vunpack.c.h.bf16 %v418
    %v1325 = vunpack.c.l.bf16 %v419
    %v1326 = vunpack.c.h.bf16 %v419
    %v1327 = vunpack.c.l.bf16 %v420
    %v1328 = vunpack.c.h.bf16 %v420
    %v1329 = vunpack.c.l.bf16 %v421
    %v1330 = vunpack.c.h.bf16 %v421
    %v1331 = vunpack.c.l.bf16 %v422
    %v1332 = vunpack.c.h.bf16 %v422
    %v1333 = vunpack.c.l.bf16 %v423
    %v1334 = vunpack.c.h.bf16 %v423
    %v1335 = vunpack.c.l.bf16 %v424
    %v1336 = vunpack.c.h.bf16 %v424
    %v1337 = vunpack.c.l.bf16 %v425
    %v1338 = vunpack.c.h.bf16 %v425
    %v1339 = vunpack.c.l.bf16 %v426
    %v1340 = vunpack.c.h.bf16 %v426
    %v1341 = vunpack.c.l.bf16 %v427
    %v1342 = vunpack.c.h.bf16 %v427
    %v1343 = vunpack.c.l.bf16 %v428
    %v1344 = vunpack.c.h.bf16 %v428
    %v1345 = vunpack.c.l.bf16 %v429
    %v1346 = vunpack.c.h.bf16 %v429
    %v1347 = vunpack.c.l.bf16 %v430
    %v1348 = vunpack.c.h.bf16 %v430
    %v1349 = vunpack.c.l.bf16 %v431
    %v1350 = vunpack.c.h.bf16 %v431
    %v1351 = vunpack.c.l.bf16 %v432
    %v1352 = vunpack.c.h.bf16 %v432
    %v1353 = vunpack.c.l.bf16 %v433
    %v1354 = vunpack.c.h.bf16 %v433
    %v1355 = vunpack.c.l.bf16 %v434
    %v1356 = vunpack.c.h.bf16 %v434
    %v1357 = vunpack.c.l.bf16 %v435
    %v1358 = vunpack.c.h.bf16 %v435
    %v1359 = vunpack.c.l.bf16 %v436
    %v1360 = vunpack.c.h.bf16 %v436
    %v1361 = vunpack.c.l.bf16 %v437
    %v1362 = vunpack.c.h.bf16 %v437
    %v1363 = vunpack.c.l.bf16 %v438
    %v1364 = vunpack.c.h.bf16 %v438
    %v1365 = vunpack.c.l.bf16 %v439
    %v1366 = vunpack.c.h.bf16 %v439
    %v1367 = vunpack.c.l.bf16 %v440
    %v1368 = vunpack.c.h.bf16 %v440
    %v1369 = vunpack.c.l.bf16 %v441
    %v1370 = vunpack.c.h.bf16 %v441
    %v1371 = vunpack.c.l.bf16 %v442
    %v1372 = vunpack.c.h.bf16 %v442
    %v1373 = vunpack.c.l.bf16 %v443
    %v1374 = vunpack.c.h.bf16 %v443
    %v1375 = vunpack.c.l.bf16 %v444
    %v1376 = vunpack.c.h.bf16 %v444
    %v1377 = vunpack.c.l.bf16 %v445
    %v1378 = vunpack.c.h.bf16 %v445
    %v1379 = vunpack.c.l.bf16 %v446
    %v1380 = vunpack.c.h.bf16 %v446
    %v1381 = vunpack.c.l.bf16 %v447
    %v1382 = vunpack.c.h.bf16 %v447
    %v1383 = vunpack.c.l.bf16 %v448
    %v1384 = vunpack.c.h.bf16 %v448
    %v1385 = vunpack.c.l.bf16 %v449
    %v1386 = vunpack.c.h.bf16 %v449
    %v1387 = vunpack.c.l.bf16 %v450
    %v1388 = vunpack.c.h.bf16 %v450
    %v1389 = vunpack.c.l.bf16 %v451
    %v1390 = vunpack.c.h.bf16 %v451
    %v1391 = vunpack.c.l.bf16 %v452
    %v1392 = vunpack.c.h.bf16 %v452
    %v1393 = vunpack.c.l.bf16 %v453
    %v1394 = vunpack.c.h.bf16 %v453
    %v1395 = vunpack.c.l.bf16 %v454
    %v1396 = vunpack.c.h.bf16 %v454
    %v1397 = vunpack.c.l.bf16 %v455
    %v1398 = vunpack.c.h.bf16 %v455
    %v1399 = vunpack.c.l.bf16 %v456
    %v1400 = vunpack.c.h.bf16 %v456
    %v1401 = vunpack.c.l.bf16 %v457
    %v1402 = vunpack.c.h.bf16 %v457
    %v1403 = vunpack.c.l.bf16 %v458
    %v1404 = vunpack.c.h.bf16 %v458
    %v1405 = vunpack.c.l.bf16 %v459
    %v1406 = vunpack.c.h.bf16 %v459
    %v1407 = vunpack.c.l.bf16 %v460
    %v1408 = vunpack.c.h.bf16 %v460
    %v1409 = vunpack.c.l.bf16 %v461
    %v1410 = vunpack.c.h.bf16 %v461
    %v1411 = vunpack.c.l.bf16 %v462
    %v1412 = vunpack.c.h.bf16 %v462
    %v1413 = vunpack.c.l.bf16 %v463
    %v1414 = vunpack.c.h.bf16 %v463
    %v1415 = vunpack.c.l.bf16 %v464
    %v1416 = vunpack.c.h.bf16 %v464
    %v1417 = vunpack.c.l.bf16 %v465
    %v1418 = vunpack.c.h.bf16 %v465
    %v1419 = vunpack.c.l.bf16 %v466
    %v1420 = vunpack.c.h.bf16 %v466
    %v1421 = vunpack.c.l.bf16 %v467
    %v1422 = vunpack.c.h.bf16 %v467
    %v1423 = vunpack.c.l.bf16 %v468
    %v1424 = vunpack.c.h.bf16 %v468
    %v1425 = vunpack.c.l.bf16 %v469
    %v1426 = vunpack.c.h.bf16 %v469
    %v1427 = vunpack.c.l.bf16 %v470
    %v1428 = vunpack.c.h.bf16 %v470
    %v1429 = vunpack.c.l.bf16 %v471
    %v1430 = vunpack.c.h.bf16 %v471
    %v1431 = vunpack.c.l.bf16 %v472
    %v1432 = vunpack.c.h.bf16 %v472
    %v1433 = vunpack.c.l.bf16 %v473
    %v1434 = vunpack.c.h.bf16 %v473
    %v1435 = vunpack.c.l.bf16 %v474
    %v1436 = vunpack.c.h.bf16 %v474
    %v1437 = vunpack.c.l.bf16 %v475
    %v1438 = vunpack.c.h.bf16 %v475
    %v1439 = vunpack.c.l.bf16 %v476
    %v1440 = vunpack.c.h.bf16 %v476
    %v1441 = vunpack.c.l.bf16 %v477
    %v1442 = vunpack.c.h.bf16 %v477
    %v1443 = vunpack.c.l.bf16 %v478
    %v1444 = vunpack.c.h.bf16 %v478
    %v1445 = vunpack.c.l.bf16 %v479
    %v1446 = vunpack.c.h.bf16 %v479
    %v1447 = vunpack.c.l.bf16 %v480
    %v1448 = vunpack.c.h.bf16 %v480
    %v1449 = vunpack.c.l.bf16 %v481
    %v1450 = vunpack.c.h.bf16 %v481
    %v1451 = vunpack.c.l.bf16 %v482
    %v1452 = vunpack.c.h.bf16 %v482
    %v1453 = vunpack.c.l.bf16 %v483
    %v1454 = vunpack.c.h.bf16 %v483
    %v1455 = vunpack.c.l.bf16 %v484
    %v1456 = vunpack.c.h.bf16 %v484
    %v1457 = vunpack.c.l.bf16 %v485
    %v1458 = vunpack.c.h.bf16 %v485
    %v1459 = vunpack.c.l.bf16 %v486
    %v1460 = vunpack.c.h.bf16 %v486
    %v1461 = vunpack.c.l.bf16 %v487
    %v1462 = vunpack.c.h.bf16 %v487
    %v1463 = vunpack.c.l.bf16 %v488
    %v1464 = vunpack.c.h.bf16 %v488
    %v1465 = vunpack.c.l.bf16 %v489
    %v1466 = vunpack.c.h.bf16 %v489
    %v1467 = vunpack.c.l.bf16 %v490
    %v1468 = vunpack.c.h.bf16 %v490
    %v1469 = vunpack.c.l.bf16 %v491
    %v1470 = vunpack.c.h.bf16 %v491
    %v1471 = vunpack.c.l.bf16 %v492
    %v1472 = vunpack.c.h.bf16 %v492
    %v1473 = vunpack.c.l.bf16 %v493
    %v1474 = vunpack.c.h.bf16 %v493
    %v1475 = vunpack.c.l.bf16 %v494
    %v1476 = vunpack.c.h.bf16 %v494
    %v1477 = vunpack.c.l.bf16 %v495
    %v1478 = vunpack.c.h.bf16 %v495
    %v1479 = vunpack.c.l.bf16 %v496
    %v1480 = vunpack.c.h.bf16 %v496
    %v1481 = vunpack.c.l.bf16 %v497
    %v1482 = vunpack.c.h.bf16 %v497
    %v1483 = vunpack.c.l.bf16 %v498
    %v1484 = vunpack.c.h.bf16 %v498
    %v1485 = vunpack.c.l.bf16 %v499
    %v1486 = vunpack.c.h.bf16 %v499
    %v1487 = vunpack.c.l.bf16 %v500
    %v1488 = vunpack.c.h.bf16 %v500
    %v1489 = vunpack.c.l.bf16 %v501
    %v1490 = vunpack.c.h.bf16 %v501
    %v1491 = vunpack.c.l.bf16 %v502
    %v1492 = vunpack.c.h.bf16 %v502
    %v1493 = vunpack.c.l.bf16 %v503
    %v1494 = vunpack.c.h.bf16 %v503
    %v1495 = vunpack.c.l.bf16 %v504
    %v1496 = vunpack.c.h.bf16 %v504
    %v1497 = vunpack.c.l.bf16 %v505
    %v1498 = vunpack.c.h.bf16 %v505
    %v1499 = vunpack.c.l.bf16 %v506
    %v1500 = vunpack.c.h.bf16 %v506
    %v1501 = vunpack.c.l.bf16 %v507
    %v1502 = vunpack.c.h.bf16 %v507
    %v1503 = vunpack.c.l.bf16 %v508
    %v1504 = vunpack.c.h.bf16 %v508
    %v1505 = vunpack.c.l.bf16 %v509
    %v1506 = vunpack.c.h.bf16 %v509
    %v1507 = vunpack.c.l.bf16 %v510
    %v1508 = vunpack.c.h.bf16 %v510
    %v1509 = vunpack.c.l.bf16 %v511
    %v1510 = vunpack.c.h.bf16 %v511
    %v1511 = vunpack.c.l.bf16 %v512
    %v1512 = vunpack.c.h.bf16 %v512
    %v1513 = vunpack.c.l.bf16 %v513
    %v1514 = vunpack.c.h.bf16 %v513
    %v1515 = vunpack.c.l.bf16 %v514
    %v1516 = vunpack.c.h.bf16 %v514
    %v1517 = vunpack.c.l.bf16 %v515
    %v1518 = vunpack.c.h.bf16 %v515
    %v1519 = vunpack.c.l.bf16 %v516
    %v1520 = vunpack.c.h.bf16 %v516
    %v1521 = vunpack.c.l.bf16 %v517
    %v1522 = vunpack.c.h.bf16 %v517
    %v1523 = vunpack.c.l.bf16 %v518
    %v1524 = vunpack.c.h.bf16 %v518
    %v1525 = vunpack.c.l.bf16 %v519
    %v1526 = vunpack.c.h.bf16 %v519
    %v1527 = vunpack.c.l.bf16 %v520
    %v1528 = vunpack.c.h.bf16 %v520
    %v1529 = vunpack.c.l.bf16 %v521
    %v1530 = vunpack.c.h.bf16 %v521
    %v1531 = vunpack.c.l.bf16 %v522
    %v1532 = vunpack.c.h.bf16 %v522
    %v1533 = vunpack.c.l.bf16 %v523
    %v1534 = vunpack.c.h.bf16 %v523
    %v1535 = vunpack.c.l.bf16 %v524
    %v1536 = vunpack.c.h.bf16 %v524
    %v1537 = vunpack.c.l.bf16 %v525
    %v1538 = vunpack.c.h.bf16 %v525
    %v1539 = vunpack.c.l.bf16 %v526
    %v1540 = vunpack.c.h.bf16 %v526
    %v1541 = vunpack.c.l.bf16 %v527
    %v1542 = vunpack.c.h.bf16 %v527
    %v1543 = vunpack.c.l.bf16 %v528
    %v1544 = vunpack.c.h.bf16 %v528
    %v1545 = vunpack.c.l.bf16 %v529
    %v1546 = vunpack.c.h.bf16 %v529
    %v1547 = vunpack.c.l.bf16 %v530
    %v1548 = vunpack.c.h.bf16 %v530
    %v1549 = vunpack.c.l.bf16 %v531
    %v1550 = vunpack.c.h.bf16 %v531
    %v1551 = vunpack.c.l.bf16 %v532
    %v1552 = vunpack.c.h.bf16 %v532
    %v1553 = vunpack.c.l.bf16 %v533
    %v1554 = vunpack.c.h.bf16 %v533
    %v1555 = vunpack.c.l.bf16 %v534
    %v1556 = vunpack.c.h.bf16 %v534
    %v1557 = vunpack.c.l.bf16 %v535
    %v1558 = vunpack.c.h.bf16 %v535
    %v1559 = vunpack.c.l.bf16 %v536
    %v1560 = vunpack.c.h.bf16 %v536
    %v1561 = vld [vmem:[%s2] sm:$0xf]
    %v1563 = vlaneseq
    %v1564 = vshrl.u32 %v1563, 7
    %v1565 = vsub.s32 0, %v1564
    %v1566 = vrot.slane %v1561, %v1565
    %v1567 = vlaneseq
    %v1568 = vshrl.u32 %v1567, 7
    %v1569 = vsub.s32 1, %v1568
    %v1570 = vrot.slane %v1561, %v1569
    %v1571 = vlaneseq
    %v1572 = vshrl.u32 %v1571, 7
    %v1573 = vsub.s32 2, %v1572
    %v1574 = vrot.slane %v1561, %v1573
    %v1575 = vlaneseq
    %v1576 = vshrl.u32 %v1575, 7
    %v1577 = vsub.s32 3, %v1576
    %v1578 = vrot.slane %v1561, %v1577
    %v1587 = vcombine.high %v21, %v21
    %v1589 = vunpack.c.l.s4 1983009808
    %v1590 = vunpack.c.0.s8 %v1589
    %v1591 = vlaneseq
    %v1592 = vshrl.u32 %v1591, 7
    %v1593 = vsub.s32 %v1590, %v1592
    %v1594 = vrot.slane %v21, %v1593
    %v1596 = vunpack.c.l.s4 1983009808
    %v1597 = vunpack.c.0.s8 %v1596
    %v1598 = vlaneseq
    %v1599 = vshrl.u32 %v1598, 7
    %v1600 = vsub.s32 %v1597, %v1599
    %v1601 = vrot.slane %v1587, %v1600
    %v1602 = vcombine.high %v1594, %v1594
    %v1603 = vcombine.high %v1601, %v1601
    %v1604 = vcombine.high %v22, %v22
    %v1606 = vunpack.c.l.s4 1983009808
    %v1607 = vunpack.c.0.s8 %v1606
    %v1608 = vlaneseq
    %v1609 = vshrl.u32 %v1608, 7
    %v1610 = vsub.s32 %v1607, %v1609
    %v1611 = vrot.slane %v22, %v1610
    %v1613 = vunpack.c.l.s4 1983009808
    %v1614 = vunpack.c.0.s8 %v1613
    %v1615 = vlaneseq
    %v1616 = vshrl.u32 %v1615, 7
    %v1617 = vsub.s32 %v1614, %v1616
    %v1618 = vrot.slane %v1604, %v1617
    %v1619 = vcombine.high %v1611, %v1611
    %v1620 = vcombine.high %v1618, %v1618
    %v1621 = vcombine.high %v23, %v23
    %v1623 = vunpack.c.l.s4 1983009808
    %v1624 = vunpack.c.0.s8 %v1623
    %v1625 = vlaneseq
    %v1626 = vshrl.u32 %v1625, 7
    %v1627 = vsub.s32 %v1624, %v1626
    %v1628 = vrot.slane %v23, %v1627
    %v1630 = vunpack.c.l.s4 1983009808
    %v1631 = vunpack.c.0.s8 %v1630
    %v1632 = vlaneseq
    %v1633 = vshrl.u32 %v1632, 7
    %v1634 = vsub.s32 %v1631, %v1633
    %v1635 = vrot.slane %v1621, %v1634
    %v1636 = vcombine.high %v1628, %v1628
    %v1637 = vcombine.high %v1635, %v1635
    %v1638 = vcombine.high %v24, %v24
    %v1640 = vunpack.c.l.s4 1983009808
    %v1641 = vunpack.c.0.s8 %v1640
    %v1642 = vlaneseq
    %v1643 = vshrl.u32 %v1642, 7
    %v1644 = vsub.s32 %v1641, %v1643
    %v1645 = vrot.slane %v24, %v1644
    %v1647 = vunpack.c.l.s4 1983009808
    %v1648 = vunpack.c.0.s8 %v1647
    %v1649 = vlaneseq
    %v1650 = vshrl.u32 %v1649, 7
    %v1651 = vsub.s32 %v1648, %v1650
    %v1652 = vrot.slane %v1638, %v1651
    %v1653 = vcombine.high %v1645, %v1645
    %v1654 = vcombine.high %v1652, %v1652
    %1671 = vmatprep.subr.mxu0 %v538
    %1672 = vmatpush1.msra.mxu0 %v537
    %1673 = vmatprep.subr.mxu0 %v542
    %1674 = vmatpush1.msra.mxu0 %v541
    %1675 = vmatprep.subr.mxu0 %v546
    %1676 = vmatpush1.msra.mxu0 %v545
    %1677 = vmatprep.subr.mxu0 %v550
    %1678 = vmatpush1.msra.mxu0 %v549
    %1679 = vmatprep.subr.mxu0 %v554
    %1680 = vmatpush1.msra.mxu0 %v553
    %1681 = vmatprep.subr.mxu0 %v558
    %1682 = vmatpush1.msra.mxu0 %v557
    %1683 = vmatprep.subr.mxu0 %v562
    %1684 = vmatpush1.msra.mxu0 %v561
    %1685 = vmatprep.subr.mxu0 %v566
    %1686 = vmatpush1.msra.mxu0 %v565
    %1687 = vmatprep.subr.mxu0 %v570
    %1688 = vmatpush1.msra.mxu0 %v569
    %1689 = vmatprep.subr.mxu0 %v574
    %1690 = vmatpush1.msra.mxu0 %v573
    %1691 = vmatprep.subr.mxu0 %v578
    %1692 = vmatpush1.msra.mxu0 %v577
    %1693 = vmatprep.subr.mxu0 %v582
    %1694 = vmatpush1.msra.mxu0 %v581
    %1695 = vmatprep.subr.mxu0 %v586
    %1696 = vmatpush1.msra.mxu0 %v585
    %1697 = vmatprep.subr.mxu0 %v590
    %1698 = vmatpush1.msra.mxu0 %v589
    %1699 = vmatprep.subr.mxu0 %v594
    %1700 = vmatpush1.msra.mxu0 %v593
    %1701 = vmatprep.subr.mxu0 %v598
    %1702 = vmatpush1.msra.mxu0 %v597
    %1703 = vmatprep.subr.mxu0 %v602
    %1704 = vmatpush1.msra.mxu0 %v601
    %1705 = vmatprep.subr.mxu0 %v606
    %1706 = vmatpush1.msra.mxu0 %v605
    %1707 = vmatprep.subr.mxu0 %v610
    %1708 = vmatpush1.msra.mxu0 %v609
    %1709 = vmatprep.subr.mxu0 %v614
    %1710 = vmatpush1.msra.mxu0 %v613
    %1711 = vmatprep.subr.mxu0 %v618
    %1712 = vmatpush1.msra.mxu0 %v617
    %1713 = vmatprep.subr.mxu0 %v622
    %1714 = vmatpush1.msra.mxu0 %v621
    %1715 = vmatprep.subr.mxu0 %v626
    %1716 = vmatpush1.msra.mxu0 %v625
    %1717 = vmatprep.subr.mxu0 %v630
    %1718 = vmatpush1.msra.mxu0 %v629
    %1719 = vmatprep.subr.mxu0 %v634
    %1720 = vmatpush1.msra.mxu0 %v633
    %1721 = vmatprep.subr.mxu0 %v638
    %1722 = vmatpush1.msra.mxu0 %v637
    %1723 = vmatprep.subr.mxu0 %v642
    %1724 = vmatpush1.msra.mxu0 %v641
    %1725 = vmatprep.subr.mxu0 %v646
    %1726 = vmatpush1.msra.mxu0 %v645
    %1727 = vmatprep.subr.mxu0 %v650
    %1728 = vmatpush1.msra.mxu0 %v649
    %1729 = vmatprep.subr.mxu0 %v654
    %1730 = vmatpush1.msra.mxu0 %v653
    %1731 = vmatprep.subr.mxu0 %v658
    %1732 = vmatpush1.msra.mxu0 %v657
    %1733 = vmatprep.subr.mxu0 %v662
    %1734 = vmatpush1.msra.mxu0 %v661
    %1735 = vmatprep.mubr.f32.mxu0 %v1602
    %1736 = vmatmul.mubr.f32.gmra.mrb[0].mxu0 %v1594
    %v1737 = vpop.f32.mrb[0].mxu0
    %v1738 = vadd.f32 %v1566, %v1737
    %v1739 = vpop.f32.mrb[0].mxu0
    %v1740 = vadd.f32 %v1570, %v1739
    %1741 = vdwg.mxu0
    %1742 = vmatprep.subr.mxu0 %v666
    %1743 = vmatpush1.msra.mxu0 %v665
    %1744 = vmatprep.subr.mxu0 %v670
    %1745 = vmatpush1.msra.mxu0 %v669
    %1746 = vmatprep.subr.mxu0 %v674
    %1747 = vmatpush1.msra.mxu0 %v673
    %1748 = vmatprep.subr.mxu0 %v678
    %1749 = vmatpush1.msra.mxu0 %v677
    %1750 = vmatprep.subr.mxu0 %v682
    %1751 = vmatpush1.msra.mxu0 %v681
    %1752 = vmatprep.subr.mxu0 %v686
    %1753 = vmatpush1.msra.mxu0 %v685
    %1754 = vmatprep.subr.mxu0 %v690
    %1755 = vmatpush1.msra.mxu0 %v689
    %1756 = vmatprep.subr.mxu0 %v694
    %1757 = vmatpush1.msra.mxu0 %v693
    %1758 = vmatprep.subr.mxu0 %v698
    %1759 = vmatpush1.msra.mxu0 %v697
    %1760 = vmatprep.subr.mxu0 %v702
    %1761 = vmatpush1.msra.mxu0 %v701
    %1762 = vmatprep.subr.mxu0 %v706
    %1763 = vmatpush1.msra.mxu0 %v705
    %1764 = vmatprep.subr.mxu0 %v710
    %1765 = vmatpush1.msra.mxu0 %v709
    %1766 = vmatprep.subr.mxu0 %v714
    %1767 = vmatpush1.msra.mxu0 %v713
    %1768 = vmatprep.subr.mxu0 %v718
    %1769 = vmatpush1.msra.mxu0 %v717
    %1770 = vmatprep.subr.mxu0 %v722
    %1771 = vmatpush1.msra.mxu0 %v721
    %1772 = vmatprep.subr.mxu0 %v726
    %1773 = vmatpush1.msra.mxu0 %v725
    %1774 = vmatprep.subr.mxu0 %v730
    %1775 = vmatpush1.msra.mxu0 %v729
    %1776 = vmatprep.subr.mxu0 %v734
    %1777 = vmatpush1.msra.mxu0 %v733
    %1778 = vmatprep.subr.mxu0 %v738
    %1779 = vmatpush1.msra.mxu0 %v737
    %1780 = vmatprep.subr.mxu0 %v742
    %1781 = vmatpush1.msra.mxu0 %v741
    %1782 = vmatprep.subr.mxu0 %v746
    %1783 = vmatpush1.msra.mxu0 %v745
    %1784 = vmatprep.subr.mxu0 %v750
    %1785 = vmatpush1.msra.mxu0 %v749
    %1786 = vmatprep.subr.mxu0 %v754
    %1787 = vmatpush1.msra.mxu0 %v753
    %1788 = vmatprep.subr.mxu0 %v758
    %1789 = vmatpush1.msra.mxu0 %v757
    %1790 = vmatprep.subr.mxu0 %v762
    %1791 = vmatpush1.msra.mxu0 %v761
    %1792 = vmatprep.subr.mxu0 %v766
    %1793 = vmatpush1.msra.mxu0 %v765
    %1794 = vmatprep.subr.mxu0 %v770
    %1795 = vmatpush1.msra.mxu0 %v769
    %1796 = vmatprep.subr.mxu0 %v774
    %1797 = vmatpush1.msra.mxu0 %v773
    %1798 = vmatprep.subr.mxu0 %v778
    %1799 = vmatpush1.msra.mxu0 %v777
    %1800 = vmatprep.subr.mxu0 %v782
    %1801 = vmatpush1.msra.mxu0 %v781
    %1802 = vmatprep.subr.mxu0 %v786
    %1803 = vmatpush1.msra.mxu0 %v785
    %1804 = vmatprep.subr.mxu0 %v790
    %1805 = vmatpush1.msra.mxu0 %v789
    %1806 = vmatprep.mubr.f32.mxu0 %v1603
    %1807 = vmatmul.mubr.f32.gmra.mrb[0].mxu0 %v1601
    %v1808 = vpop.f32.mrb[0].mxu0
    %v1809 = vadd.f32 %v1738, %v1808
    %v1810 = vpop.f32.mrb[0].mxu0
    %v1811 = vadd.f32 %v1740, %v1810
    %1812 = vdwg.mxu0
    %1813 = vmatprep.subr.mxu0 %v794
    %1814 = vmatpush1.msra.mxu0 %v793
    %1815 = vmatprep.subr.mxu0 %v798
    %1816 = vmatpush1.msra.mxu0 %v797
    %1817 = vmatprep.subr.mxu0 %v802
    %1818 = vmatpush1.msra.mxu0 %v801
    %1819 = vmatprep.subr.mxu0 %v806
    %1820 = vmatpush1.msra.mxu0 %v805
    %1821 = vmatprep.subr.mxu0 %v810
    %1822 = vmatpush1.msra.mxu0 %v809
    %1823 = vmatprep.subr.mxu0 %v814
    %1824 = vmatpush1.msra.mxu0 %v813
    %1825 = vmatprep.subr.mxu0 %v818
    %1826 = vmatpush1.msra.mxu0 %v817
    %1827 = vmatprep.subr.mxu0 %v822
    %1828 = vmatpush1.msra.mxu0 %v821
    %1829 = vmatprep.subr.mxu0 %v826
    %1830 = vmatpush1.msra.mxu0 %v825
    %1831 = vmatprep.subr.mxu0 %v830
    %1832 = vmatpush1.msra.mxu0 %v829
    %1833 = vmatprep.subr.mxu0 %v834
    %1834 = vmatpush1.msra.mxu0 %v833
    %1835 = vmatprep.subr.mxu0 %v838
    %1836 = vmatpush1.msra.mxu0 %v837
    %1837 = vmatprep.subr.mxu0 %v842
    %1838 = vmatpush1.msra.mxu0 %v841
    %1839 = vmatprep.subr.mxu0 %v846
    %1840 = vmatpush1.msra.mxu0 %v845
    %1841 = vmatprep.subr.mxu0 %v850
    %1842 = vmatpush1.msra.mxu0 %v849
    %1843 = vmatprep.subr.mxu0 %v854
    %1844 = vmatpush1.msra.mxu0 %v853
    %1845 = vmatprep.subr.mxu0 %v858
    %1846 = vmatpush1.msra.mxu0 %v857
    %1847 = vmatprep.subr.mxu0 %v862
    %1848 = vmatpush1.msra.mxu0 %v861
    %1849 = vmatprep.subr.mxu0 %v866
    %1850 = vmatpush1.msra.mxu0 %v865
    %1851 = vmatprep.subr.mxu0 %v870
    %1852 = vmatpush1.msra.mxu0 %v869
    %1853 = vmatprep.subr.mxu0 %v874
    %1854 = vmatpush1.msra.mxu0 %v873
    %1855 = vmatprep.subr.mxu0 %v878
    %1856 = vmatpush1.msra.mxu0 %v877
    %1857 = vmatprep.subr.mxu0 %v882
    %1858 = vmatpush1.msra.mxu0 %v881
    %1859 = vmatprep.subr.mxu0 %v886
    %1860 = vmatpush1.msra.mxu0 %v885
    %1861 = vmatprep.subr.mxu0 %v890
    %1862 = vmatpush1.msra.mxu0 %v889
    %1863 = vmatprep.subr.mxu0 %v894
    %1864 = vmatpush1.msra.mxu0 %v893
    %1865 = vmatprep.subr.mxu0 %v898
    %1866 = vmatpush1.msra.mxu0 %v897
    %1867 = vmatprep.subr.mxu0 %v902
    %1868 = vmatpush1.msra.mxu0 %v901
    %1869 = vmatprep.subr.mxu0 %v906
    %1870 = vmatpush1.msra.mxu0 %v905
    %1871 = vmatprep.subr.mxu0 %v910
    %1872 = vmatpush1.msra.mxu0 %v909
    %1873 = vmatprep.subr.mxu0 %v914
    %1874 = vmatpush1.msra.mxu0 %v913
    %1875 = vmatprep.subr.mxu0 %v918
    %1876 = vmatpush1.msra.mxu0 %v917
    %1877 = vmatprep.mubr.f32.mxu0 %v1619
    %1878 = vmatmul.mubr.f32.gmra.mrb[0].mxu0 %v1611
    %v1879 = vpop.f32.mrb[0].mxu0
    %v1880 = vadd.f32 %v1809, %v1879
    %v1881 = vpop.f32.mrb[0].mxu0
    %v1882 = vadd.f32 %v1811, %v1881
    %1883 = vdwg.mxu0
    %1884 = vmatprep.subr.mxu0 %v922
    %1885 = vmatpush1.msra.mxu0 %v921
    %1886 = vmatprep.subr.mxu0 %v926
    %1887 = vmatpush1.msra.mxu0 %v925
    %1888 = vmatprep.subr.mxu0 %v930
    %1889 = vmatpush1.msra.mxu0 %v929
    %1890 = vmatprep.subr.mxu0 %v934
    %1891 = vmatpush1.msra.mxu0 %v933
    %1892 = vmatprep.subr.mxu0 %v938
    %1893 = vmatpush1.msra.mxu0 %v937
    %1894 = vmatprep.subr.mxu0 %v942
    %1895 = vmatpush1.msra.mxu0 %v941
    %1896 = vmatprep.subr.mxu0 %v946
    %1897 = vmatpush1.msra.mxu0 %v945
    %1898 = vmatprep.subr.mxu0 %v950
    %1899 = vmatpush1.msra.mxu0 %v949
    %1900 = vmatprep.subr.mxu0 %v954
    %1901 = vmatpush1.msra.mxu0 %v953
    %1902 = vmatprep.subr.mxu0 %v958
    %1903 = vmatpush1.msra.mxu0 %v957
    %1904 = vmatprep.subr.mxu0 %v962
    %1905 = vmatpush1.msra.mxu0 %v961
    %1906 = vmatprep.subr.mxu0 %v966
    %1907 = vmatpush1.msra.mxu0 %v965
    %1908 = vmatprep.subr.mxu0 %v970
    %1909 = vmatpush1.msra.mxu0 %v969
    %1910 = vmatprep.subr.mxu0 %v974
    %1911 = vmatpush1.msra.mxu0 %v973
    %1912 = vmatprep.subr.mxu0 %v978
    %1913 = vmatpush1.msra.mxu0 %v977
    %1914 = vmatprep.subr.mxu0 %v982
    %1915 = vmatpush1.msra.mxu0 %v981
    %1916 = vmatprep.subr.mxu0 %v986
    %1917 = vmatpush1.msra.mxu0 %v985
    %1918 = vmatprep.subr.mxu0 %v990
    %1919 = vmatpush1.msra.mxu0 %v989
    %1920 = vmatprep.subr.mxu0 %v994
    %1921 = vmatpush1.msra.mxu0 %v993
    %1922 = vmatprep.subr.mxu0 %v998
    %1923 = vmatpush1.msra.mxu0 %v997
    %1924 = vmatprep.subr.mxu0 %v1002
    %1925 = vmatpush1.msra.mxu0 %v1001
    %1926 = vmatprep.subr.mxu0 %v1006
    %1927 = vmatpush1.msra.mxu0 %v1005
    %1928 = vmatprep.subr.mxu0 %v1010
    %1929 = vmatpush1.msra.mxu0 %v1009
    %1930 = vmatprep.subr.mxu0 %v1014
    %1931 = vmatpush1.msra.mxu0 %v1013
    %1932 = vmatprep.subr.mxu0 %v1018
    %1933 = vmatpush1.msra.mxu0 %v1017
    %1934 = vmatprep.subr.mxu0 %v1022
    %1935 = vmatpush1.msra.mxu0 %v1021
    %1936 = vmatprep.subr.mxu0 %v1026
    %1937 = vmatpush1.msra.mxu0 %v1025
    %1938 = vmatprep.subr.mxu0 %v1030
    %1939 = vmatpush1.msra.mxu0 %v1029
    %1940 = vmatprep.subr.mxu0 %v1034
    %1941 = vmatpush1.msra.mxu0 %v1033
    %1942 = vmatprep.subr.mxu0 %v1038
    %1943 = vmatpush1.msra.mxu0 %v1037
    %1944 = vmatprep.subr.mxu0 %v1042
    %1945 = vmatpush1.msra.mxu0 %v1041
    %1946 = vmatprep.subr.mxu0 %v1046
    %1947 = vmatpush1.msra.mxu0 %v1045
    %1948 = vmatprep.mubr.f32.mxu0 %v1620
    %1949 = vmatmul.mubr.f32.gmra.mrb[0].mxu0 %v1618
    %v1950 = vpop.f32.mrb[0].mxu0
    %v1951 = vadd.f32 %v1880, %v1950
    %v1952 = vpop.f32.mrb[0].mxu0
    %v1953 = vadd.f32 %v1882, %v1952
    %1954 = vdwg.mxu0
    %1955 = vmatprep.subr.mxu0 %v1050
    %1956 = vmatpush1.msra.mxu0 %v1049
    %1957 = vmatprep.subr.mxu0 %v1054
    %1958 = vmatpush1.msra.mxu0 %v1053
    %1959 = vmatprep.subr.mxu0 %v1058
    %1960 = vmatpush1.msra.mxu0 %v1057
    %1961 = vmatprep.subr.mxu0 %v1062
    %1962 = vmatpush1.msra.mxu0 %v1061
    %1963 = vmatprep.subr.mxu0 %v1066
    %1964 = vmatpush1.msra.mxu0 %v1065
    %1965 = vmatprep.subr.mxu0 %v1070
    %1966 = vmatpush1.msra.mxu0 %v1069
    %1967 = vmatprep.subr.mxu0 %v1074
    %1968 = vmatpush1.msra.mxu0 %v1073
    %1969 = vmatprep.subr.mxu0 %v1078
    %1970 = vmatpush1.msra.mxu0 %v1077
    %1971 = vmatprep.subr.mxu0 %v1082
    %1972 = vmatpush1.msra.mxu0 %v1081
    %1973 = vmatprep.subr.mxu0 %v1086
    %1974 = vmatpush1.msra.mxu0 %v1085
    %1975 = vmatprep.subr.mxu0 %v1090
    %1976 = vmatpush1.msra.mxu0 %v1089
    %1977 = vmatprep.subr.mxu0 %v1094
    %1978 = vmatpush1.msra.mxu0 %v1093
    %1979 = vmatprep.subr.mxu0 %v1098
    %1980 = vmatpush1.msra.mxu0 %v1097
    %1981 = vmatprep.subr.mxu0 %v1102
    %1982 = vmatpush1.msra.mxu0 %v1101
    %1983 = vmatprep.subr.mxu0 %v1106
    %1984 = vmatpush1.msra.mxu0 %v1105
    %1985 = vmatprep.subr.mxu0 %v1110
    %1986 = vmatpush1.msra.mxu0 %v1109
    %1987 = vmatprep.subr.mxu0 %v1114
    %1988 = vmatpush1.msra.mxu0 %v1113
    %1989 = vmatprep.subr.mxu0 %v1118
    %1990 = vmatpush1.msra.mxu0 %v1117
    %1991 = vmatprep.subr.mxu0 %v1122
    %1992 = vmatpush1.msra.mxu0 %v1121
    %1993 = vmatprep.subr.mxu0 %v1126
    %1994 = vmatpush1.msra.mxu0 %v1125
    %1995 = vmatprep.subr.mxu0 %v1130
    %1996 = vmatpush1.msra.mxu0 %v1129
    %1997 = vmatprep.subr.mxu0 %v1134
    %1998 = vmatpush1.msra.mxu0 %v1133
    %1999 = vmatprep.subr.mxu0 %v1138
    %2000 = vmatpush1.msra.mxu0 %v1137
    %2001 = vmatprep.subr.mxu0 %v1142
    %2002 = vmatpush1.msra.mxu0 %v1141
    %2003 = vmatprep.subr.mxu0 %v1146
    %2004 = vmatpush1.msra.mxu0 %v1145
    %2005 = vmatprep.subr.mxu0 %v1150
    %2006 = vmatpush1.msra.mxu0 %v1149
    %2007 = vmatprep.subr.mxu0 %v1154
    %2008 = vmatpush1.msra.mxu0 %v1153
    %2009 = vmatprep.subr.mxu0 %v1158
    %2010 = vmatpush1.msra.mxu0 %v1157
    %2011 = vmatprep.subr.mxu0 %v1162
    %2012 = vmatpush1.msra.mxu0 %v1161
    %2013 = vmatprep.subr.mxu0 %v1166
    %2014 = vmatpush1.msra.mxu0 %v1165
    %2015 = vmatprep.subr.mxu0 %v1170
    %2016 = vmatpush1.msra.mxu0 %v1169
    %2017 = vmatprep.subr.mxu0 %v1174
    %2018 = vmatpush1.msra.mxu0 %v1173
    %2019 = vmatprep.mubr.f32.mxu0 %v1636
    %2020 = vmatmul.mubr.f32.gmra.mrb[0].mxu0 %v1628
    %v2021 = vpop.f32.mrb[0].mxu0
    %v2022 = vadd.f32 %v1951, %v2021
    %v2023 = vpop.f32.mrb[0].mxu0
    %v2024 = vadd.f32 %v1953, %v2023
    %2025 = vdwg.mxu0
    %2026 = vmatprep.subr.mxu0 %v1178
    %2027 = vmatpush1.msra.mxu0 %v1177
    %2028 = vmatprep.subr.mxu0 %v1182
    %2029 = vmatpush1.msra.mxu0 %v1181
    %2030 = vmatprep.subr.mxu0 %v1186
    %2031 = vmatpush1.msra.mxu0 %v1185
    %2032 = vmatprep.subr.mxu0 %v1190
    %2033 = vmatpush1.msra.mxu0 %v1189
    %2034 = vmatprep.subr.mxu0 %v1194
    %2035 = vmatpush1.msra.mxu0 %v1193
    %2036 = vmatprep.subr.mxu0 %v1198
    %2037 = vmatpush1.msra.mxu0 %v1197
    %2038 = vmatprep.subr.mxu0 %v1202
    %2039 = vmatpush1.msra.mxu0 %v1201
    %2040 = vmatprep.subr.mxu0 %v1206
    %2041 = vmatpush1.msra.mxu0 %v1205
    %2042 = vmatprep.subr.mxu0 %v1210
    %2043 = vmatpush1.msra.mxu0 %v1209
    %2044 = vmatprep.subr.mxu0 %v1214
    %2045 = vmatpush1.msra.mxu0 %v1213
    %2046 = vmatprep.subr.mxu0 %v1218
    %2047 = vmatpush1.msra.mxu0 %v1217
    %2048 = vmatprep.subr.mxu0 %v1222
    %2049 = vmatpush1.msra.mxu0 %v1221
    %2050 = vmatprep.subr.mxu0 %v1226
    %2051 = vmatpush1.msra.mxu0 %v1225
    %2052 = vmatprep.subr.mxu0 %v1230
    %2053 = vmatpush1.msra.mxu0 %v1229
    %2054 = vmatprep.subr.mxu0 %v1234
    %2055 = vmatpush1.msra.mxu0 %v1233
    %2056 = vmatprep.subr.mxu0 %v1238
    %2057 = vmatpush1.msra.mxu0 %v1237
    %2058 = vmatprep.subr.mxu0 %v1242
    %2059 = vmatpush1.msra.mxu0 %v1241
    %2060 = vmatprep.subr.mxu0 %v1246
    %2061 = vmatpush1.msra.mxu0 %v1245
    %2062 = vmatprep.subr.mxu0 %v1250
    %2063 = vmatpush1.msra.mxu0 %v1249
    %2064 = vmatprep.subr.mxu0 %v1254
    %2065 = vmatpush1.msra.mxu0 %v1253
    %2066 = vmatprep.subr.mxu0 %v1258
    %2067 = vmatpush1.msra.mxu0 %v1257
    %2068 = vmatprep.subr.mxu0 %v1262
    %2069 = vmatpush1.msra.mxu0 %v1261
    %2070 = vmatprep.subr.mxu0 %v1266
    %2071 = vmatpush1.msra.mxu0 %v1265
    %2072 = vmatprep.subr.mxu0 %v1270
    %2073 = vmatpush1.msra.mxu0 %v1269
    %2074 = vmatprep.subr.mxu0 %v1274
    %2075 = vmatpush1.msra.mxu0 %v1273
    %2076 = vmatprep.subr.mxu0 %v1278
    %2077 = vmatpush1.msra.mxu0 %v1277
    %2078 = vmatprep.subr.mxu0 %v1282
    %2079 = vmatpush1.msra.mxu0 %v1281
    %2080 = vmatprep.subr.mxu0 %v1286
    %2081 = vmatpush1.msra.mxu0 %v1285
    %2082 = vmatprep.subr.mxu0 %v1290
    %2083 = vmatpush1.msra.mxu0 %v1289
    %2084 = vmatprep.subr.mxu0 %v1294
    %2085 = vmatpush1.msra.mxu0 %v1293
    %2086 = vmatprep.subr.mxu0 %v1298
    %2087 = vmatpush1.msra.mxu0 %v1297
    %2088 = vmatprep.subr.mxu0 %v1302
    %2089 = vmatpush1.msra.mxu0 %v1301
    %2090 = vmatprep.mubr.f32.mxu0 %v1637
    %2091 = vmatmul.mubr.f32.gmra.mrb[0].mxu0 %v1635
    %v2092 = vpop.f32.mrb[0].mxu0
    %v2093 = vadd.f32 %v2022, %v2092
    %v2094 = vpop.f32.mrb[0].mxu0
    %v2095 = vadd.f32 %v2024, %v2094
    %2096 = vdwg.mxu0
    %2097 = vmatprep.subr.mxu0 %v1306
    %2098 = vmatpush1.msra.mxu0 %v1305
    %2099 = vmatprep.subr.mxu0 %v1310
    %2100 = vmatpush1.msra.mxu0 %v1309
    %2101 = vmatprep.subr.mxu0 %v1314
    %2102 = vmatpush1.msra.mxu0 %v1313
    %2103 = vmatprep.subr.mxu0 %v1318
    %2104 = vmatpush1.msra.mxu0 %v1317
    %2105 = vmatprep.subr.mxu0 %v1322
    %2106 = vmatpush1.msra.mxu0 %v1321
    %2107 = vmatprep.subr.mxu0 %v1326
    %2108 = vmatpush1.msra.mxu0 %v1325
    %2109 = vmatprep.subr.mxu0 %v1330
    %2110 = vmatpush1.msra.mxu0 %v1329
    %2111 = vmatprep.subr.mxu0 %v1334
    %2112 = vmatpush1.msra.mxu0 %v1333
    %2113 = vmatprep.subr.mxu0 %v1338
    %2114 = vmatpush1.msra.mxu0 %v1337
    %2115 = vmatprep.subr.mxu0 %v1342
    %2116 = vmatpush1.msra.mxu0 %v1341
    %2117 = vmatprep.subr.mxu0 %v1346
    %2118 = vmatpush1.msra.mxu0 %v1345
    %2119 = vmatprep.subr.mxu0 %v1350
    %2120 = vmatpush1.msra.mxu0 %v1349
    %2121 = vmatprep.subr.mxu0 %v1354
    %2122 = vmatpush1.msra.mxu0 %v1353
    %2123 = vmatprep.subr.mxu0 %v1358
    %2124 = vmatpush1.msra.mxu0 %v1357
    %2125 = vmatprep.subr.mxu0 %v1362
    %2126 = vmatpush1.msra.mxu0 %v1361
    %2127 = vmatprep.subr.mxu0 %v1366
    %2128 = vmatpush1.msra.mxu0 %v1365
    %2129 = vmatprep.subr.mxu0 %v1370
    %2130 = vmatpush1.msra.mxu0 %v1369
    %2131 = vmatprep.subr.mxu0 %v1374
    %2132 = vmatpush1.msra.mxu0 %v1373
    %2133 = vmatprep.subr.mxu0 %v1378
    %2134 = vmatpush1.msra.mxu0 %v1377
    %2135 = vmatprep.subr.mxu0 %v1382
    %2136 = vmatpush1.msra.mxu0 %v1381
    %2137 = vmatprep.subr.mxu0 %v1386
    %2138 = vmatpush1.msra.mxu0 %v1385
    %2139 = vmatprep.subr.mxu0 %v1390
    %2140 = vmatpush1.msra.mxu0 %v1389
    %2141 = vmatprep.subr.mxu0 %v1394
    %2142 = vmatpush1.msra.mxu0 %v1393
    %2143 = vmatprep.subr.mxu0 %v1398
    %2144 = vmatpush1.msra.mxu0 %v1397
    %2145 = vmatprep.subr.mxu0 %v1402
    %2146 = vmatpush1.msra.mxu0 %v1401
    %2147 = vmatprep.subr.mxu0 %v1406
    %2148 = vmatpush1.msra.mxu0 %v1405
    %2149 = vmatprep.subr.mxu0 %v1410
    %2150 = vmatpush1.msra.mxu0 %v1409
    %2151 = vmatprep.subr.mxu0 %v1414
    %2152 = vmatpush1.msra.mxu0 %v1413
    %2153 = vmatprep.subr.mxu0 %v1418
    %2154 = vmatpush1.msra.mxu0 %v1417
    %2155 = vmatprep.subr.mxu0 %v1422
    %2156 = vmatpush1.msra.mxu0 %v1421
    %2157 = vmatprep.subr.mxu0 %v1426
    %2158 = vmatpush1.msra.mxu0 %v1425
    %2159 = vmatprep.subr.mxu0 %v1430
    %2160 = vmatpush1.msra.mxu0 %v1429
    %2161 = vmatprep.mubr.f32.mxu0 %v1653
    %2162 = vmatmul.mubr.f32.gmra.mrb[0].mxu0 %v1645
    %v2163 = vpop.f32.mrb[0].mxu0
    %v2164 = vadd.f32 %v2093, %v2163
    %v2165 = vpop.f32.mrb[0].mxu0
    %v2166 = vadd.f32 %v2095, %v2165
    %2167 = vdwg.mxu0
    %2168 = vmatprep.subr.mxu0 %v1434
    %2169 = vmatpush1.msra.mxu0 %v1433
    %2170 = vmatprep.subr.mxu0 %v1438
    %2171 = vmatpush1.msra.mxu0 %v1437
    %2172 = vmatprep.subr.mxu0 %v1442
    %2173 = vmatpush1.msra.mxu0 %v1441
    %2174 = vmatprep.subr.mxu0 %v1446
    %2175 = vmatpush1.msra.mxu0 %v1445
    %2176 = vmatprep.subr.mxu0 %v1450
    %2177 = vmatpush1.msra.mxu0 %v1449
    %2178 = vmatprep.subr.mxu0 %v1454
    %2179 = vmatpush1.msra.mxu0 %v1453
    %2180 = vmatprep.subr.mxu0 %v1458
    %2181 = vmatpush1.msra.mxu0 %v1457
    %2182 = vmatprep.subr.mxu0 %v1462
    %2183 = vmatpush1.msra.mxu0 %v1461
    %2184 = vmatprep.subr.mxu0 %v1466
    %2185 = vmatpush1.msra.mxu0 %v1465
    %2186 = vmatprep.subr.mxu0 %v1470
    %2187 = vmatpush1.msra.mxu0 %v1469
    %2188 = vmatprep.subr.mxu0 %v1474
    %2189 = vmatpush1.msra.mxu0 %v1473
    %2190 = vmatprep.subr.mxu0 %v1478
    %2191 = vmatpush1.msra.mxu0 %v1477
    %2192 = vmatprep.subr.mxu0 %v1482
    %2193 = vmatpush1.msra.mxu0 %v1481
    %2194 = vmatprep.subr.mxu0 %v1486
    %2195 = vmatpush1.msra.mxu0 %v1485
    %2196 = vmatprep.subr.mxu0 %v1490
    %2197 = vmatpush1.msra.mxu0 %v1489
    %2198 = vmatprep.subr.mxu0 %v1494
    %2199 = vmatpush1.msra.mxu0 %v1493
    %2200 = vmatprep.subr.mxu0 %v1498
    %2201 = vmatpush1.msra.mxu0 %v1497
    %2202 = vmatprep.subr.mxu0 %v1502
    %2203 = vmatpush1.msra.mxu0 %v1501
    %2204 = vmatprep.subr.mxu0 %v1506
    %2205 = vmatpush1.msra.mxu0 %v1505
    %2206 = vmatprep.subr.mxu0 %v1510
    %2207 = vmatpush1.msra.mxu0 %v1509
    %2208 = vmatprep.subr.mxu0 %v1514
    %2209 = vmatpush1.msra.mxu0 %v1513
    %2210 = vmatprep.subr.mxu0 %v1518
    %2211 = vmatpush1.msra.mxu0 %v1517
    %2212 = vmatprep.subr.mxu0 %v1522
    %2213 = vmatpush1.msra.mxu0 %v1521
    %2214 = vmatprep.subr.mxu0 %v1526
    %2215 = vmatpush1.msra.mxu0 %v1525
    %2216 = vmatprep.subr.mxu0 %v1530
    %2217 = vmatpush1.msra.mxu0 %v1529
    %2218 = vmatprep.subr.mxu0 %v1534
    %2219 = vmatpush1.msra.mxu0 %v1533
    %2220 = vmatprep.subr.mxu0 %v1538
    %2221 = vmatpush1.msra.mxu0 %v1537
    %2222 = vmatprep.subr.mxu0 %v1542
    %2223 = vmatpush1.msra.mxu0 %v1541
    %2224 = vmatprep.subr.mxu0 %v1546
    %2225 = vmatpush1.msra.mxu0 %v1545
    %2226 = vmatprep.subr.mxu0 %v1550
    %2227 = vmatpush1.msra.mxu0 %v1549
    %2228 = vmatprep.subr.mxu0 %v1554
    %2229 = vmatpush1.msra.mxu0 %v1553
    %2230 = vmatprep.subr.mxu0 %v1558
    %2231 = vmatpush1.msra.mxu0 %v1557
    %2232 = vmatprep.mubr.f32.mxu0 %v1654
    %2233 = vmatmul.mubr.f32.gmra.mrb[0].mxu0 %v1652
    %v2234 = vpop.f32.mrb[0].mxu0
    %v2235 = vadd.f32 %v2164, %v2234
    %v2236 = vpop.f32.mrb[0].mxu0
    %v2237 = vadd.f32 %v2166, %v2236
    %2238 = vdwg.mxu0
    %2239 = vmatprep.subr.mxu0 %v540
    %2240 = vmatpush1.msra.mxu0 %v539
    %2241 = vmatprep.subr.mxu0 %v544
    %2242 = vmatpush1.msra.mxu0 %v543
    %2243 = vmatprep.subr.mxu0 %v548
    %2244 = vmatpush1.msra.mxu0 %v547
    %2245 = vmatprep.subr.mxu0 %v552
    %2246 = vmatpush1.msra.mxu0 %v551
    %2247 = vmatprep.subr.mxu0 %v556
    %2248 = vmatpush1.msra.mxu0 %v555
    %2249 = vmatprep.subr.mxu0 %v560
    %2250 = vmatpush1.msra.mxu0 %v559
    %2251 = vmatprep.subr.mxu0 %v564
    %2252 = vmatpush1.msra.mxu0 %v563
    %2253 = vmatprep.subr.mxu0 %v568
    %2254 = vmatpush1.msra.mxu0 %v567
    %2255 = vmatprep.subr.mxu0 %v572
    %2256 = vmatpush1.msra.mxu0 %v571
    %2257 = vmatprep.subr.mxu0 %v576
    %2258 = vmatpush1.msra.mxu0 %v575
    %2259 = vmatprep.subr.mxu0 %v580
    %2260 = vmatpush1.msra.mxu0 %v579
    %2261 = vmatprep.subr.mxu0 %v584
    %2262 = vmatpush1.msra.mxu0 %v583
    %2263 = vmatprep.subr.mxu0 %v588
    %2264 = vmatpush1.msra.mxu0 %v587
    %2265 = vmatprep.subr.mxu0 %v592
    %2266 = vmatpush1.msra.mxu0 %v591
    %2267 = vmatprep.subr.mxu0 %v596
    %2268 = vmatpush1.msra.mxu0 %v595
    %2269 = vmatprep.subr.mxu0 %v600
    %2270 = vmatpush1.msra.mxu0 %v599
    %2271 = vmatprep.subr.mxu0 %v604
    %2272 = vmatpush1.msra.mxu0 %v603
    %2273 = vmatprep.subr.mxu0 %v608
    %2274 = vmatpush1.msra.mxu0 %v607
    %2275 = vmatprep.subr.mxu0 %v612
    %2276 = vmatpush1.msra.mxu0 %v611
    %2277 = vmatprep.subr.mxu0 %v616
    %2278 = vmatpush1.msra.mxu0 %v615
    %2279 = vmatprep.subr.mxu0 %v620
    %2280 = vmatpush1.msra.mxu0 %v619
    %2281 = vmatprep.subr.mxu0 %v624
    %2282 = vmatpush1.msra.mxu0 %v623
    %2283 = vmatprep.subr.mxu0 %v628
    %2284 = vmatpush1.msra.mxu0 %v627
    %2285 = vmatprep.subr.mxu0 %v632
    %2286 = vmatpush1.msra.mxu0 %v631
    %2287 = vmatprep.subr.mxu0 %v636
    %2288 = vmatpush1.msra.mxu0 %v635
    %2289 = vmatprep.subr.mxu0 %v640
    %2290 = vmatpush1.msra.mxu0 %v639
    %2291 = vmatprep.subr.mxu0 %v644
    %2292 = vmatpush1.msra.mxu0 %v643
    %2293 = vmatprep.subr.mxu0 %v648
    %2294 = vmatpush1.msra.mxu0 %v647
    %2295 = vmatprep.subr.mxu0 %v652
    %2296 = vmatpush1.msra.mxu0 %v651
    %2297 = vmatprep.subr.mxu0 %v656
    %2298 = vmatpush1.msra.mxu0 %v655
    %2299 = vmatprep.subr.mxu0 %v660
    %2300 = vmatpush1.msra.mxu0 %v659
    %2301 = vmatprep.subr.mxu0 %v664
    %2302 = vmatpush1.msra.mxu0 %v663
    %2303 = vmatprep.mubr.f32.mxu0 %v1602
    %2304 = vmatmul.mubr.f32.gmra.mrb[0].mxu0 %v1594
    %v2305 = vpop.f32.mrb[0].mxu0
    %v2306 = vadd.f32 %v1574, %v2305
    %v2307 = vpop.f32.mrb[0].mxu0
    %v2308 = vadd.f32 %v1578, %v2307
    %2309 = vdwg.mxu0
    %2310 = vmatprep.subr.mxu0 %v668
    %2311 = vmatpush1.msra.mxu0 %v667
    %2312 = vmatprep.subr.mxu0 %v672
    %2313 = vmatpush1.msra.mxu0 %v671
    %2314 = vmatprep.subr.mxu0 %v676
    %2315 = vmatpush1.msra.mxu0 %v675
    %2316 = vmatprep.subr.mxu0 %v680
    %2317 = vmatpush1.msra.mxu0 %v679
    %2318 = vmatprep.subr.mxu0 %v684
    %2319 = vmatpush1.msra.mxu0 %v683
    %2320 = vmatprep.subr.mxu0 %v688
    %2321 = vmatpush1.msra.mxu0 %v687
    %2322 = vmatprep.subr.mxu0 %v692
    %2323 = vmatpush1.msra.mxu0 %v691
    %2324 = vmatprep.subr.mxu0 %v696
    %2325 = vmatpush1.msra.mxu0 %v695
    %2326 = vmatprep.subr.mxu0 %v700
    %2327 = vmatpush1.msra.mxu0 %v699
    %2328 = vmatprep.subr.mxu0 %v704
    %2329 = vmatpush1.msra.mxu0 %v703
    %2330 = vmatprep.subr.mxu0 %v708
    %2331 = vmatpush1.msra.mxu0 %v707
    %2332 = vmatprep.subr.mxu0 %v712
    %2333 = vmatpush1.msra.mxu0 %v711
    %2334 = vmatprep.subr.mxu0 %v716
    %2335 = vmatpush1.msra.mxu0 %v715
    %2336 = vmatprep.subr.mxu0 %v720
    %2337 = vmatpush1.msra.mxu0 %v719
    %2338 = vmatprep.subr.mxu0 %v724
    %2339 = vmatpush1.msra.mxu0 %v723
    %2340 = vmatprep.subr.mxu0 %v728
    %2341 = vmatpush1.msra.mxu0 %v727
    %2342 = vmatprep.subr.mxu0 %v732
    %2343 = vmatpush1.msra.mxu0 %v731
    %2344 = vmatprep.subr.mxu0 %v736
    %2345 = vmatpush1.msra.mxu0 %v735
    %2346 = vmatprep.subr.mxu0 %v740
    %2347 = vmatpush1.msra.mxu0 %v739
    %2348 = vmatprep.subr.mxu0 %v744
    %2349 = vmatpush1.msra.mxu0 %v743
    %2350 = vmatprep.subr.mxu0 %v748
    %2351 = vmatpush1.msra.mxu0 %v747
    %2352 = vmatprep.subr.mxu0 %v752
    %2353 = vmatpush1.msra.mxu0 %v751
    %2354 = vmatprep.subr.mxu0 %v756
    %2355 = vmatpush1.msra.mxu0 %v755
    %2356 = vmatprep.subr.mxu0 %v760
    %2357 = vmatpush1.msra.mxu0 %v759
    %2358 = vmatprep.subr.mxu0 %v764
    %2359 = vmatpush1.msra.mxu0 %v763
    %2360 = vmatprep.subr.mxu0 %v768
    %2361 = vmatpush1.msra.mxu0 %v767
    %2362 = vmatprep.subr.mxu0 %v772
    %2363 = vmatpush1.msra.mxu0 %v771
    %2364 = vmatprep.subr.mxu0 %v776
    %2365 = vmatpush1.msra.mxu0 %v775
    %2366 = vmatprep.subr.mxu0 %v780
    %2367 = vmatpush1.msra.mxu0 %v779
    %2368 = vmatprep.subr.mxu0 %v784
    %2369 = vmatpush1.msra.mxu0 %v783
    %2370 = vmatprep.subr.mxu0 %v788
    %2371 = vmatpush1.msra.mxu0 %v787
    %2372 = vmatprep.subr.mxu0 %v792
    %2373 = vmatpush1.msra.mxu0 %v791
    %2374 = vmatprep.mubr.f32.mxu0 %v1603
    %2375 = vmatmul.mubr.f32.gmra.mrb[0].mxu0 %v1601
    %v2376 = vpop.f32.mrb[0].mxu0
    %v2377 = vadd.f32 %v2306, %v2376
    %v2378 = vpop.f32.mrb[0].mxu0
    %v2379 = vadd.f32 %v2308, %v2378
    %2380 = vdwg.mxu0
    %2381 = vmatprep.subr.mxu0 %v796
    %2382 = vmatpush1.msra.mxu0 %v795
    %2383 = vmatprep.subr.mxu0 %v800
    %2384 = vmatpush1.msra.mxu0 %v799
    %2385 = vmatprep.subr.mxu0 %v804
    %2386 = vmatpush1.msra.mxu0 %v803
    %2387 = vmatprep.subr.mxu0 %v808
    %2388 = vmatpush1.msra.mxu0 %v807
    %2389 = vmatprep.subr.mxu0 %v812
    %2390 = vmatpush1.msra.mxu0 %v811
    %2391 = vmatprep.subr.mxu0 %v816
    %2392 = vmatpush1.msra.mxu0 %v815
    %2393 = vmatprep.subr.mxu0 %v820
    %2394 = vmatpush1.msra.mxu0 %v819
    %2395 = vmatprep.subr.mxu0 %v824
    %2396 = vmatpush1.msra.mxu0 %v823
    %2397 = vmatprep.subr.mxu0 %v828
    %2398 = vmatpush1.msra.mxu0 %v827
    %2399 = vmatprep.subr.mxu0 %v832
    %2400 = vmatpush1.msra.mxu0 %v831
    %2401 = vmatprep.subr.mxu0 %v836
    %2402 = vmatpush1.msra.mxu0 %v835
    %2403 = vmatprep.subr.mxu0 %v840
    %2404 = vmatpush1.msra.mxu0 %v839
    %2405 = vmatprep.subr.mxu0 %v844
    %2406 = vmatpush1.msra.mxu0 %v843
    %2407 = vmatprep.subr.mxu0 %v848
    %2408 = vmatpush1.msra.mxu0 %v847
    %2409 = vmatprep.subr.mxu0 %v852
    %2410 = vmatpush1.msra.mxu0 %v851
    %2411 = vmatprep.subr.mxu0 %v856
    %2412 = vmatpush1.msra.mxu0 %v855
    %2413 = vmatprep.subr.mxu0 %v860
    %2414 = vmatpush1.msra.mxu0 %v859
    %2415 = vmatprep.subr.mxu0 %v864
    %2416 = vmatpush1.msra.mxu0 %v863
    %2417 = vmatprep.subr.mxu0 %v868
    %2418 = vmatpush1.msra.mxu0 %v867
    %2419 = vmatprep.subr.mxu0 %v872
    %2420 = vmatpush1.msra.mxu0 %v871
    %2421 = vmatprep.subr.mxu0 %v876
    %2422 = vmatpush1.msra.mxu0 %v875
    %2423 = vmatprep.subr.mxu0 %v880
    %2424 = vmatpush1.msra.mxu0 %v879
    %2425 = vmatprep.subr.mxu0 %v884
    %2426 = vmatpush1.msra.mxu0 %v883
    %2427 = vmatprep.subr.mxu0 %v888
    %2428 = vmatpush1.msra.mxu0 %v887
    %2429 = vmatprep.subr.mxu0 %v892
    %2430 = vmatpush1.msra.mxu0 %v891
    %2431 = vmatprep.subr.mxu0 %v896
    %2432 = vmatpush1.msra.mxu0 %v895
    %2433 = vmatprep.subr.mxu0 %v900
    %2434 = vmatpush1.msra.mxu0 %v899
    %2435 = vmatprep.subr.mxu0 %v904
    %2436 = vmatpush1.msra.mxu0 %v903
    %2437 = vmatprep.subr.mxu0 %v908
    %2438 = vmatpush1.msra.mxu0 %v907
    %2439 = vmatprep.subr.mxu0 %v912
    %2440 = vmatpush1.msra.mxu0 %v911
    %2441 = vmatprep.subr.mxu0 %v916
    %2442 = vmatpush1.msra.mxu0 %v915
    %2443 = vmatprep.subr.mxu0 %v920
    %2444 = vmatpush1.msra.mxu0 %v919
    %2445 = vmatprep.mubr.f32.mxu0 %v1619
    %2446 = vmatmul.mubr.f32.gmra.mrb[0].mxu0 %v1611
    %v2447 = vpop.f32.mrb[0].mxu0
    %v2448 = vadd.f32 %v2377, %v2447
    %v2449 = vpop.f32.mrb[0].mxu0
    %v2450 = vadd.f32 %v2379, %v2449
    %2451 = vdwg.mxu0
    %2452 = vmatprep.subr.mxu0 %v924
    %2453 = vmatpush1.msra.mxu0 %v923
    %2454 = vmatprep.subr.mxu0 %v928
    %2455 = vmatpush1.msra.mxu0 %v927
    %2456 = vmatprep.subr.mxu0 %v932
    %2457 = vmatpush1.msra.mxu0 %v931
    %2458 = vmatprep.subr.mxu0 %v936
    %2459 = vmatpush1.msra.mxu0 %v935
    %2460 = vmatprep.subr.mxu0 %v940
    %2461 = vmatpush1.msra.mxu0 %v939
    %2462 = vmatprep.subr.mxu0 %v944
    %2463 = vmatpush1.msra.mxu0 %v943
    %2464 = vmatprep.subr.mxu0 %v948
    %2465 = vmatpush1.msra.mxu0 %v947
    %2466 = vmatprep.subr.mxu0 %v952
    %2467 = vmatpush1.msra.mxu0 %v951
    %2468 = vmatprep.subr.mxu0 %v956
    %2469 = vmatpush1.msra.mxu0 %v955
    %2470 = vmatprep.subr.mxu0 %v960
    %2471 = vmatpush1.msra.mxu0 %v959
    %2472 = vmatprep.subr.mxu0 %v964
    %2473 = vmatpush1.msra.mxu0 %v963
    %2474 = vmatprep.subr.mxu0 %v968
    %2475 = vmatpush1.msra.mxu0 %v967
    %2476 = vmatprep.subr.mxu0 %v972
    %2477 = vmatpush1.msra.mxu0 %v971
    %2478 = vmatprep.subr.mxu0 %v976
    %2479 = vmatpush1.msra.mxu0 %v975
    %2480 = vmatprep.subr.mxu0 %v980
    %2481 = vmatpush1.msra.mxu0 %v979
    %2482 = vmatprep.subr.mxu0 %v984
    %2483 = vmatpush1.msra.mxu0 %v983
    %2484 = vmatprep.subr.mxu0 %v988
    %2485 = vmatpush1.msra.mxu0 %v987
    %2486 = vmatprep.subr.mxu0 %v992
    %2487 = vmatpush1.msra.mxu0 %v991
    %2488 = vmatprep.subr.mxu0 %v996
    %2489 = vmatpush1.msra.mxu0 %v995
    %2490 = vmatprep.subr.mxu0 %v1000
    %2491 = vmatpush1.msra.mxu0 %v999
    %2492 = vmatprep.subr.mxu0 %v1004
    %2493 = vmatpush1.msra.mxu0 %v1003
    %2494 = vmatprep.subr.mxu0 %v1008
    %2495 = vmatpush1.msra.mxu0 %v1007
    %2496 = vmatprep.subr.mxu0 %v1012
    %2497 = vmatpush1.msra.mxu0 %v1011
    %2498 = vmatprep.subr.mxu0 %v1016
    %2499 = vmatpush1.msra.mxu0 %v1015
    %2500 = vmatprep.subr.mxu0 %v1020
    %2501 = vmatpush1.msra.mxu0 %v1019
    %2502 = vmatprep.subr.mxu0 %v1024
    %2503 = vmatpush1.msra.mxu0 %v1023
    %2504 = vmatprep.subr.mxu0 %v1028
    %2505 = vmatpush1.msra.mxu0 %v1027
    %2506 = vmatprep.subr.mxu0 %v1032
    %2507 = vmatpush1.msra.mxu0 %v1031
    %2508 = vmatprep.subr.mxu0 %v1036
    %2509 = vmatpush1.msra.mxu0 %v1035
    %2510 = vmatprep.subr.mxu0 %v1040
    %2511 = vmatpush1.msra.mxu0 %v1039
    %2512 = vmatprep.subr.mxu0 %v1044
    %2513 = vmatpush1.msra.mxu0 %v1043
    %2514 = vmatprep.subr.mxu0 %v1048
    %2515 = vmatpush1.msra.mxu0 %v1047
    %2516 = vmatprep.mubr.f32.mxu0 %v1620
    %2517 = vmatmul.mubr.f32.gmra.mrb[0].mxu0 %v1618
    %v2518 = vpop.f32.mrb[0].mxu0
    %v2519 = vadd.f32 %v2448, %v2518
    %v2520 = vpop.f32.mrb[0].mxu0
    %v2521 = vadd.f32 %v2450, %v2520
    %2522 = vdwg.mxu0
    %2523 = vmatprep.subr.mxu0 %v1052
    %2524 = vmatpush1.msra.mxu0 %v1051
    %2525 = vmatprep.subr.mxu0 %v1056
    %2526 = vmatpush1.msra.mxu0 %v1055
    %2527 = vmatprep.subr.mxu0 %v1060
    %2528 = vmatpush1.msra.mxu0 %v1059
    %2529 = vmatprep.subr.mxu0 %v1064
    %2530 = vmatpush1.msra.mxu0 %v1063
    %2531 = vmatprep.subr.mxu0 %v1068
    %2532 = vmatpush1.msra.mxu0 %v1067
    %2533 = vmatprep.subr.mxu0 %v1072
    %2534 = vmatpush1.msra.mxu0 %v1071
    %2535 = vmatprep.subr.mxu0 %v1076
    %2536 = vmatpush1.msra.mxu0 %v1075
    %2537 = vmatprep.subr.mxu0 %v1080
    %2538 = vmatpush1.msra.mxu0 %v1079
    %2539 = vmatprep.subr.mxu0 %v1084
    %2540 = vmatpush1.msra.mxu0 %v1083
    %2541 = vmatprep.subr.mxu0 %v1088
    %2542 = vmatpush1.msra.mxu0 %v1087
    %2543 = vmatprep.subr.mxu0 %v1092
    %2544 = vmatpush1.msra.mxu0 %v1091
    %2545 = vmatprep.subr.mxu0 %v1096
    %2546 = vmatpush1.msra.mxu0 %v1095
    %2547 = vmatprep.subr.mxu0 %v1100
    %2548 = vmatpush1.msra.mxu0 %v1099
    %2549 = vmatprep.subr.mxu0 %v1104
    %2550 = vmatpush1.msra.mxu0 %v1103
    %2551 = vmatprep.subr.mxu0 %v1108
    %2552 = vmatpush1.msra.mxu0 %v1107
    %2553 = vmatprep.subr.mxu0 %v1112
    %2554 = vmatpush1.msra.mxu0 %v1111
    %2555 = vmatprep.subr.mxu0 %v1116
    %2556 = vmatpush1.msra.mxu0 %v1115
    %2557 = vmatprep.subr.mxu0 %v1120
    %2558 = vmatpush1.msra.mxu0 %v1119
    %2559 = vmatprep.subr.mxu0 %v1124
    %2560 = vmatpush1.msra.mxu0 %v1123
    %2561 = vmatprep.subr.mxu0 %v1128
    %2562 = vmatpush1.msra.mxu0 %v1127
    %2563 = vmatprep.subr.mxu0 %v1132
    %2564 = vmatpush1.msra.mxu0 %v1131
    %2565 = vmatprep.subr.mxu0 %v1136
    %2566 = vmatpush1.msra.mxu0 %v1135
    %2567 = vmatprep.subr.mxu0 %v1140
    %2568 = vmatpush1.msra.mxu0 %v1139
    %2569 = vmatprep.subr.mxu0 %v1144
    %2570 = vmatpush1.msra.mxu0 %v1143
    %2571 = vmatprep.subr.mxu0 %v1148
    %2572 = vmatpush1.msra.mxu0 %v1147
    %2573 = vmatprep.subr.mxu0 %v1152
    %2574 = vmatpush1.msra.mxu0 %v1151
    %2575 = vmatprep.subr.mxu0 %v1156
    %2576 = vmatpush1.msra.mxu0 %v1155
    %2577 = vmatprep.subr.mxu0 %v1160
    %2578 = vmatpush1.msra.mxu0 %v1159
    %2579 = vmatprep.subr.mxu0 %v1164
    %2580 = vmatpush1.msra.mxu0 %v1163
    %2581 = vmatprep.subr.mxu0 %v1168
    %2582 = vmatpush1.msra.mxu0 %v1167
    %2583 = vmatprep.subr.mxu0 %v1172
    %2584 = vmatpush1.msra.mxu0 %v1171
    %2585 = vmatprep.subr.mxu0 %v1176
    %2586 = vmatpush1.msra.mxu0 %v1175
    %2587 = vmatprep.mubr.f32.mxu0 %v1636
    %2588 = vmatmul.mubr.f32.gmra.mrb[0].mxu0 %v1628
    %v2589 = vpop.f32.mrb[0].mxu0
    %v2590 = vadd.f32 %v2519, %v2589
    %v2591 = vpop.f32.mrb[0].mxu0
    %v2592 = vadd.f32 %v2521, %v2591
    %2593 = vdwg.mxu0
    %2594 = vmatprep.subr.mxu0 %v1180
    %2595 = vmatpush1.msra.mxu0 %v1179
    %2596 = vmatprep.subr.mxu0 %v1184
    %2597 = vmatpush1.msra.mxu0 %v1183
    %2598 = vmatprep.subr.mxu0 %v1188
    %2599 = vmatpush1.msra.mxu0 %v1187
    %2600 = vmatprep.subr.mxu0 %v1192
    %2601 = vmatpush1.msra.mxu0 %v1191
    %2602 = vmatprep.subr.mxu0 %v1196
    %2603 = vmatpush1.msra.mxu0 %v1195
    %2604 = vmatprep.subr.mxu0 %v1200
    %2605 = vmatpush1.msra.mxu0 %v1199
    %2606 = vmatprep.subr.mxu0 %v1204
    %2607 = vmatpush1.msra.mxu0 %v1203
    %2608 = vmatprep.subr.mxu0 %v1208
    %2609 = vmatpush1.msra.mxu0 %v1207
    %2610 = vmatprep.subr.mxu0 %v1212
    %2611 = vmatpush1.msra.mxu0 %v1211
    %2612 = vmatprep.subr.mxu0 %v1216
    %2613 = vmatpush1.msra.mxu0 %v1215
    %2614 = vmatprep.subr.mxu0 %v1220
    %2615 = vmatpush1.msra.mxu0 %v1219
    %2616 = vmatprep.subr.mxu0 %v1224
    %2617 = vmatpush1.msra.mxu0 %v1223
    %2618 = vmatprep.subr.mxu0 %v1228
    %2619 = vmatpush1.msra.mxu0 %v1227
    %2620 = vmatprep.subr.mxu0 %v1232
    %2621 = vmatpush1.msra.mxu0 %v1231
    %2622 = vmatprep.subr.mxu0 %v1236
    %2623 = vmatpush1.msra.mxu0 %v1235
    %2624 = vmatprep.subr.mxu0 %v1240
    %2625 = vmatpush1.msra.mxu0 %v1239
    %2626 = vmatprep.subr.mxu0 %v1244
    %2627 = vmatpush1.msra.mxu0 %v1243
    %2628 = vmatprep.subr.mxu0 %v1248
    %2629 = vmatpush1.msra.mxu0 %v1247
    %2630 = vmatprep.subr.mxu0 %v1252
    %2631 = vmatpush1.msra.mxu0 %v1251
    %2632 = vmatprep.subr.mxu0 %v1256
    %2633 = vmatpush1.msra.mxu0 %v1255
    %2634 = vmatprep.subr.mxu0 %v1260
    %2635 = vmatpush1.msra.mxu0 %v1259
    %2636 = vmatprep.subr.mxu0 %v1264
    %2637 = vmatpush1.msra.mxu0 %v1263
    %2638 = vmatprep.subr.mxu0 %v1268
    %2639 = vmatpush1.msra.mxu0 %v1267
    %2640 = vmatprep.subr.mxu0 %v1272
    %2641 = vmatpush1.msra.mxu0 %v1271
    %2642 = vmatprep.subr.mxu0 %v1276
    %2643 = vmatpush1.msra.mxu0 %v1275
    %2644 = vmatprep.subr.mxu0 %v1280
    %2645 = vmatpush1.msra.mxu0 %v1279
    %2646 = vmatprep.subr.mxu0 %v1284
    %2647 = vmatpush1.msra.mxu0 %v1283
    %2648 = vmatprep.subr.mxu0 %v1288
    %2649 = vmatpush1.msra.mxu0 %v1287
    %2650 = vmatprep.subr.mxu0 %v1292
    %2651 = vmatpush1.msra.mxu0 %v1291
    %2652 = vmatprep.subr.mxu0 %v1296
    %2653 = vmatpush1.msra.mxu0 %v1295
    %2654 = vmatprep.subr.mxu0 %v1300
    %2655 = vmatpush1.msra.mxu0 %v1299
    %2656 = vmatprep.subr.mxu0 %v1304
    %2657 = vmatpush1.msra.mxu0 %v1303
    %2658 = vmatprep.mubr.f32.mxu0 %v1637
    %2659 = vmatmul.mubr.f32.gmra.mrb[0].mxu0 %v1635
    %v2660 = vpop.f32.mrb[0].mxu0
    %v2661 = vadd.f32 %v2590, %v2660
    %v2662 = vpop.f32.mrb[0].mxu0
    %v2663 = vadd.f32 %v2592, %v2662
    %2664 = vdwg.mxu0
    %2665 = vmatprep.subr.mxu0 %v1308
    %2666 = vmatpush1.msra.mxu0 %v1307
    %2667 = vmatprep.subr.mxu0 %v1312
    %2668 = vmatpush1.msra.mxu0 %v1311
    %2669 = vmatprep.subr.mxu0 %v1316
    %2670 = vmatpush1.msra.mxu0 %v1315
    %2671 = vmatprep.subr.mxu0 %v1320
    %2672 = vmatpush1.msra.mxu0 %v1319
    %2673 = vmatprep.subr.mxu0 %v1324
    %2674 = vmatpush1.msra.mxu0 %v1323
    %2675 = vmatprep.subr.mxu0 %v1328
    %2676 = vmatpush1.msra.mxu0 %v1327
    %2677 = vmatprep.subr.mxu0 %v1332
    %2678 = vmatpush1.msra.mxu0 %v1331
    %2679 = vmatprep.subr.mxu0 %v1336
    %2680 = vmatpush1.msra.mxu0 %v1335
    %2681 = vmatprep.subr.mxu0 %v1340
    %2682 = vmatpush1.msra.mxu0 %v1339
    %2683 = vmatprep.subr.mxu0 %v1344
    %2684 = vmatpush1.msra.mxu0 %v1343
    %2685 = vmatprep.subr.mxu0 %v1348
    %2686 = vmatpush1.msra.mxu0 %v1347
    %2687 = vmatprep.subr.mxu0 %v1352
    %2688 = vmatpush1.msra.mxu0 %v1351
    %2689 = vmatprep.subr.mxu0 %v1356
    %2690 = vmatpush1.msra.mxu0 %v1355
    %2691 = vmatprep.subr.mxu0 %v1360
    %2692 = vmatpush1.msra.mxu0 %v1359
    %2693 = vmatprep.subr.mxu0 %v1364
    %2694 = vmatpush1.msra.mxu0 %v1363
    %2695 = vmatprep.subr.mxu0 %v1368
    %2696 = vmatpush1.msra.mxu0 %v1367
    %2697 = vmatprep.subr.mxu0 %v1372
    %2698 = vmatpush1.msra.mxu0 %v1371
    %2699 = vmatprep.subr.mxu0 %v1376
    %2700 = vmatpush1.msra.mxu0 %v1375
    %2701 = vmatprep.subr.mxu0 %v1380
    %2702 = vmatpush1.msra.mxu0 %v1379
    %2703 = vmatprep.subr.mxu0 %v1384
    %2704 = vmatpush1.msra.mxu0 %v1383
    %2705 = vmatprep.subr.mxu0 %v1388
    %2706 = vmatpush1.msra.mxu0 %v1387
    %2707 = vmatprep.subr.mxu0 %v1392
    %2708 = vmatpush1.msra.mxu0 %v1391
    %2709 = vmatprep.subr.mxu0 %v1396
    %2710 = vmatpush1.msra.mxu0 %v1395
    %2711 = vmatprep.subr.mxu0 %v1400
    %2712 = vmatpush1.msra.mxu0 %v1399
    %2713 = vmatprep.subr.mxu0 %v1404
    %2714 = vmatpush1.msra.mxu0 %v1403
    %2715 = vmatprep.subr.mxu0 %v1408
    %2716 = vmatpush1.msra.mxu0 %v1407
    %2717 = vmatprep.subr.mxu0 %v1412
    %2718 = vmatpush1.msra.mxu0 %v1411
    %2719 = vmatprep.subr.mxu0 %v1416
    %2720 = vmatpush1.msra.mxu0 %v1415
    %2721 = vmatprep.subr.mxu0 %v1420
    %2722 = vmatpush1.msra.mxu0 %v1419
    %2723 = vmatprep.subr.mxu0 %v1424
    %2724 = vmatpush1.msra.mxu0 %v1423
    %2725 = vmatprep.subr.mxu0 %v1428
    %2726 = vmatpush1.msra.mxu0 %v1427
    %2727 = vmatprep.subr.mxu0 %v1432
    %2728 = vmatpush1.msra.mxu0 %v1431
    %2729 = vmatprep.mubr.f32.mxu0 %v1653
    %2730 = vmatmul.mubr.f32.gmra.mrb[0].mxu0 %v1645
    %v2731 = vpop.f32.mrb[0].mxu0
    %v2732 = vadd.f32 %v2661, %v2731
    %v2733 = vpop.f32.mrb[0].mxu0
    %v2734 = vadd.f32 %v2663, %v2733
    %2735 = vdwg.mxu0
    %2736 = vmatprep.subr.mxu0 %v1436
    %2737 = vmatpush1.msra.mxu0 %v1435
    %2738 = vmatprep.subr.mxu0 %v1440
    %2739 = vmatpush1.msra.mxu0 %v1439
    %2740 = vmatprep.subr.mxu0 %v1444
    %2741 = vmatpush1.msra.mxu0 %v1443
    %2742 = vmatprep.subr.mxu0 %v1448
    %2743 = vmatpush1.msra.mxu0 %v1447
    %2744 = vmatprep.subr.mxu0 %v1452
    %2745 = vmatpush1.msra.mxu0 %v1451
    %2746 = vmatprep.subr.mxu0 %v1456
    %2747 = vmatpush1.msra.mxu0 %v1455
    %2748 = vmatprep.subr.mxu0 %v1460
    %2749 = vmatpush1.msra.mxu0 %v1459
    %2750 = vmatprep.subr.mxu0 %v1464
    %2751 = vmatpush1.msra.mxu0 %v1463
    %2752 = vmatprep.subr.mxu0 %v1468
    %2753 = vmatpush1.msra.mxu0 %v1467
    %2754 = vmatprep.subr.mxu0 %v1472
    %2755 = vmatpush1.msra.mxu0 %v1471
    %2756 = vmatprep.subr.mxu0 %v1476
    %2757 = vmatpush1.msra.mxu0 %v1475
    %2758 = vmatprep.subr.mxu0 %v1480
    %2759 = vmatpush1.msra.mxu0 %v1479
    %2760 = vmatprep.subr.mxu0 %v1484
    %2761 = vmatpush1.msra.mxu0 %v1483
    %2762 = vmatprep.subr.mxu0 %v1488
    %2763 = vmatpush1.msra.mxu0 %v1487
    %2764 = vmatprep.subr.mxu0 %v1492
    %2765 = vmatpush1.msra.mxu0 %v1491
    %2766 = vmatprep.subr.mxu0 %v1496
    %2767 = vmatpush1.msra.mxu0 %v1495
    %2768 = vmatprep.subr.mxu0 %v1500
    %2769 = vmatpush1.msra.mxu0 %v1499
    %2770 = vmatprep.subr.mxu0 %v1504
    %2771 = vmatpush1.msra.mxu0 %v1503
    %2772 = vmatprep.subr.mxu0 %v1508
    %2773 = vmatpush1.msra.mxu0 %v1507
    %2774 = vmatprep.subr.mxu0 %v1512
    %2775 = vmatpush1.msra.mxu0 %v1511
    %2776 = vmatprep.subr.mxu0 %v1516
    %2777 = vmatpush1.msra.mxu0 %v1515
    %2778 = vmatprep.subr.mxu0 %v1520
    %2779 = vmatpush1.msra.mxu0 %v1519
    %2780 = vmatprep.subr.mxu0 %v1524
    %2781 = vmatpush1.msra.mxu0 %v1523
    %2782 = vmatprep.subr.mxu0 %v1528
    %2783 = vmatpush1.msra.mxu0 %v1527
    %2784 = vmatprep.subr.mxu0 %v1532
    %2785 = vmatpush1.msra.mxu0 %v1531
    %2786 = vmatprep.subr.mxu0 %v1536
    %2787 = vmatpush1.msra.mxu0 %v1535
    %2788 = vmatprep.subr.mxu0 %v1540
    %2789 = vmatpush1.msra.mxu0 %v1539
    %2790 = vmatprep.subr.mxu0 %v1544
    %2791 = vmatpush1.msra.mxu0 %v1543
    %2792 = vmatprep.subr.mxu0 %v1548
    %2793 = vmatpush1.msra.mxu0 %v1547
    %2794 = vmatprep.subr.mxu0 %v1552
    %2795 = vmatpush1.msra.mxu0 %v1551
    %2796 = vmatprep.subr.mxu0 %v1556
    %2797 = vmatpush1.msra.mxu0 %v1555
    %2798 = vmatprep.subr.mxu0 %v1560
    %2799 = vmatpush1.msra.mxu0 %v1559
    %2800 = vmatprep.mubr.f32.mxu0 %v1654
    %2801 = vmatmul.mubr.f32.gmra.mrb[0].mxu0 %v1652
    %v2802 = vpop.f32.mrb[0].mxu0
    %v2803 = vadd.f32 %v2732, %v2802
    %v2804 = vpop.f32.mrb[0].mxu0
    %v2805 = vadd.f32 %v2734, %v2804
    %2806 = vdwg.mxu0
    %vm2807 = vcmp.gt.f32.partialorder %v2235, 0.0
    %vm2808 = vcmp.gt.f32.partialorder %v2237, 0.0
    %vm2809 = vcmp.gt.f32.partialorder %v2803, 0.0
    %vm2810 = vcmp.gt.f32.partialorder %v2805, 0.0
    %v2811 = vmul.f32 %v2235, 0.2
    %v2812 = vmul.f32 %v2237, 0.2
    %v2813 = vmul.f32 %v2803, 0.2
    %v2814 = vmul.f32 %v2805, 0.2
    %v2815 = vsel %vm2807, %v2235, %v2811
    %v2816 = vsel %vm2808, %v2237, %v2812
    %v2817 = vsel %vm2809, %v2803, %v2813
    %v2818 = vsel %vm2810, %v2805, %v2814
    %v2819 = vld [vmem:[%s3] sm:$0xf]
    %v2820 = vld [vmem:[%s3 + $0x4] sm:$0xf]
    %v2821 = vld [vmem:[%s3 + $0x8] sm:$0xf]
    %v2822 = vld [vmem:[%s3 + $0xc] sm:$0xf]
    %v2823 = vld [vmem:[%s3 + $0x10] sm:$0xf]
    %v2824 = vld [vmem:[%s3 + $0x14] sm:$0xf]
    %v2825 = vld [vmem:[%s3 + $0x18] sm:$0xf]
    %v2826 = vld [vmem:[%s3 + $0x1c] sm:$0xf]
    %v2827 = vld [vmem:[%s3 + $0x20] sm:$0xf]
    %v2828 = vld [vmem:[%s3 + $0x24] sm:$0xf]
    %v2829 = vld [vmem:[%s3 + $0x28] sm:$0xf]
    %v2830 = vld [vmem:[%s3 + $0x2c] sm:$0xf]
    %v2831 = vld [vmem:[%s3 + $0x30] sm:$0xf]
    %v2832 = vld [vmem:[%s3 + $0x34] sm:$0xf]
    %v2833 = vld [vmem:[%s3 + $0x38] sm:$0xf]
    %v2834 = vld [vmem:[%s3 + $0x3c] sm:$0xf]
    %v2835 = vld [vmem:[%s3 + $0x40] sm:$0xf]
    %v2836 = vld [vmem:[%s3 + $0x44] sm:$0xf]
    %v2837 = vld [vmem:[%s3 + $0x48] sm:$0xf]
    %v2838 = vld [vmem:[%s3 + $0x4c] sm:$0xf]
    %v2839 = vld [vmem:[%s3 + $0x50] sm:$0xf]
    %v2840 = vld [vmem:[%s3 + $0x54] sm:$0xf]
    %v2841 = vld [vmem:[%s3 + $0x58] sm:$0xf]
    %v2842 = vld [vmem:[%s3 + $0x5c] sm:$0xf]
    %v2843 = vld [vmem:[%s3 + $0x60] sm:$0xf]
    %v2844 = vld [vmem:[%s3 + $0x64] sm:$0xf]
    %v2845 = vld [vmem:[%s3 + $0x68] sm:$0xf]
    %v2846 = vld [vmem:[%s3 + $0x6c] sm:$0xf]
    %v2847 = vld [vmem:[%s3 + $0x70] sm:$0xf]
    %v2848 = vld [vmem:[%s3 + $0x74] sm:$0xf]
    %v2849 = vld [vmem:[%s3 + $0x78] sm:$0xf]
    %v2850 = vld [vmem:[%s3 + $0x7c] sm:$0xf]
    %v2851 = vld [vmem:[%s3 + $0x80] sm:$0xf]
    %v2852 = vld [vmem:[%s3 + $0x84] sm:$0xf]
    %v2853 = vld [vmem:[%s3 + $0x88] sm:$0xf]
    %v2854 = vld [vmem:[%s3 + $0x8c] sm:$0xf]
    %v2855 = vld [vmem:[%s3 + $0x90] sm:$0xf]
    %v2856 = vld [vmem:[%s3 + $0x94] sm:$0xf]
    %v2857 = vld [vmem:[%s3 + $0x98] sm:$0xf]
    %v2858 = vld [vmem:[%s3 + $0x9c] sm:$0xf]
    %v2859 = vld [vmem:[%s3 + $0xa0] sm:$0xf]
    %v2860 = vld [vmem:[%s3 + $0xa4] sm:$0xf]
    %v2861 = vld [vmem:[%s3 + $0xa8] sm:$0xf]
    %v2862 = vld [vmem:[%s3 + $0xac] sm:$0xf]
    %v2863 = vld [vmem:[%s3 + $0xb0] sm:$0xf]
    %v2864 = vld [vmem:[%s3 + $0xb4] sm:$0xf]
    %v2865 = vld [vmem:[%s3 + $0xb8] sm:$0xf]
    %v2866 = vld [vmem:[%s3 + $0xbc] sm:$0xf]
    %v2867 = vld [vmem:[%s3 + $0xc0] sm:$0xf]
    %v2868 = vld [vmem:[%s3 + $0xc4] sm:$0xf]
    %v2869 = vld [vmem:[%s3 + $0xc8] sm:$0xf]
    %v2870 = vld [vmem:[%s3 + $0xcc] sm:$0xf]
    %v2871 = vld [vmem:[%s3 + $0xd0] sm:$0xf]
    %v2872 = vld [vmem:[%s3 + $0xd4] sm:$0xf]
    %v2873 = vld [vmem:[%s3 + $0xd8] sm:$0xf]
    %v2874 = vld [vmem:[%s3 + $0xdc] sm:$0xf]
    %v2875 = vld [vmem:[%s3 + $0xe0] sm:$0xf]
    %v2876 = vld [vmem:[%s3 + $0xe4] sm:$0xf]
    %v2877 = vld [vmem:[%s3 + $0xe8] sm:$0xf]
    %v2878 = vld [vmem:[%s3 + $0xec] sm:$0xf]
    %v2879 = vld [vmem:[%s3 + $0xf0] sm:$0xf]
    %v2880 = vld [vmem:[%s3 + $0xf4] sm:$0xf]
    %v2881 = vld [vmem:[%s3 + $0xf8] sm:$0xf]
    %v2882 = vld [vmem:[%s3 + $0xfc] sm:$0xf]
    %v2883 = vunpack.c.l.bf16 %v2819
    %v2884 = vunpack.c.l.bf16 %v2820
    %v2885 = vunpack.c.l.bf16 %v2821
    %v2886 = vunpack.c.l.bf16 %v2822
    %v2887 = vunpack.c.l.bf16 %v2823
    %v2888 = vunpack.c.l.bf16 %v2824
    %v2889 = vunpack.c.l.bf16 %v2825
    %v2890 = vunpack.c.l.bf16 %v2826
    %v2891 = vunpack.c.l.bf16 %v2827
    %v2892 = vunpack.c.l.bf16 %v2828
    %v2893 = vunpack.c.l.bf16 %v2829
    %v2894 = vunpack.c.l.bf16 %v2830
    %v2895 = vunpack.c.l.bf16 %v2831
    %v2896 = vunpack.c.l.bf16 %v2832
    %v2897 = vunpack.c.l.bf16 %v2833
    %v2898 = vunpack.c.l.bf16 %v2834
    %v2899 = vunpack.c.l.bf16 %v2835
    %v2900 = vunpack.c.l.bf16 %v2836
    %v2901 = vunpack.c.l.bf16 %v2837
    %v2902 = vunpack.c.l.bf16 %v2838
    %v2903 = vunpack.c.l.bf16 %v2839
    %v2904 = vunpack.c.l.bf16 %v2840
    %v2905 = vunpack.c.l.bf16 %v2841
    %v2906 = vunpack.c.l.bf16 %v2842
    %v2907 = vunpack.c.l.bf16 %v2843
    %v2908 = vunpack.c.l.bf16 %v2844
    %v2909 = vunpack.c.l.bf16 %v2845
    %v2910 = vunpack.c.l.bf16 %v2846
    %v2911 = vunpack.c.l.bf16 %v2847
    %v2912 = vunpack.c.l.bf16 %v2848
    %v2913 = vunpack.c.l.bf16 %v2849
    %v2914 = vunpack.c.l.bf16 %v2850
    %v2915 = vunpack.c.l.bf16 %v2851
    %v2916 = vunpack.c.l.bf16 %v2852
    %v2917 = vunpack.c.l.bf16 %v2853
    %v2918 = vunpack.c.l.bf16 %v2854
    %v2919 = vunpack.c.l.bf16 %v2855
    %v2920 = vunpack.c.l.bf16 %v2856
    %v2921 = vunpack.c.l.bf16 %v2857
    %v2922 = vunpack.c.l.bf16 %v2858
    %v2923 = vunpack.c.l.bf16 %v2859
    %v2924 = vunpack.c.l.bf16 %v2860
    %v2925 = vunpack.c.l.bf16 %v2861
    %v2926 = vunpack.c.l.bf16 %v2862
    %v2927 = vunpack.c.l.bf16 %v2863
    %v2928 = vunpack.c.l.bf16 %v2864
    %v2929 = vunpack.c.l.bf16 %v2865
    %v2930 = vunpack.c.l.bf16 %v2866
    %v2931 = vunpack.c.l.bf16 %v2867
    %v2932 = vunpack.c.l.bf16 %v2868
    %v2933 = vunpack.c.l.bf16 %v2869
    %v2934 = vunpack.c.l.bf16 %v2870
    %v2935 = vunpack.c.l.bf16 %v2871
    %v2936 = vunpack.c.l.bf16 %v2872
    %v2937 = vunpack.c.l.bf16 %v2873
    %v2938 = vunpack.c.l.bf16 %v2874
    %v2939 = vunpack.c.l.bf16 %v2875
    %v2940 = vunpack.c.l.bf16 %v2876
    %v2941 = vunpack.c.l.bf16 %v2877
    %v2942 = vunpack.c.l.bf16 %v2878
    %v2943 = vunpack.c.l.bf16 %v2879
    %v2944 = vunpack.c.l.bf16 %v2880
    %v2945 = vunpack.c.l.bf16 %v2881
    %v2946 = vunpack.c.l.bf16 %v2882
    %v2947 = vld [vmem:[%s4] sm:$0x1]
    %v2949 = vlaneseq
    %v2950 = vshrl.u32 %v2949, 7
    %v2951 = vsub.s32 0, %v2950
    %v2952 = vrot.slane %v2947, %v2951
    %2954 = vmatprep.subr.mxu0 0.0
    %2955 = vmatpush1.msra.mxu0 %v2883
    %2956 = vmatprep.subr.mxu0 0.0
    %2957 = vmatpush1.msra.mxu0 %v2884
    %2958 = vmatprep.subr.mxu0 0.0
    %2959 = vmatpush1.msra.mxu0 %v2885
    %2960 = vmatprep.subr.mxu0 0.0
    %2961 = vmatpush1.msra.mxu0 %v2886
    %2962 = vmatprep.subr.mxu0 0.0
    %2963 = vmatpush1.msra.mxu0 %v2887
    %2964 = vmatprep.subr.mxu0 0.0
    %2965 = vmatpush1.msra.mxu0 %v2888
    %2966 = vmatprep.subr.mxu0 0.0
    %2967 = vmatpush1.msra.mxu0 %v2889
    %2968 = vmatprep.subr.mxu0 0.0
    %2969 = vmatpush1.msra.mxu0 %v2890
    %2970 = vmatprep.subr.mxu0 0.0
    %2971 = vmatpush1.msra.mxu0 %v2891
    %2972 = vmatprep.subr.mxu0 0.0
    %2973 = vmatpush1.msra.mxu0 %v2892
    %2974 = vmatprep.subr.mxu0 0.0
    %2975 = vmatpush1.msra.mxu0 %v2893
    %2976 = vmatprep.subr.mxu0 0.0
    %2977 = vmatpush1.msra.mxu0 %v2894
    %2978 = vmatprep.subr.mxu0 0.0
    %2979 = vmatpush1.msra.mxu0 %v2895
    %2980 = vmatprep.subr.mxu0 0.0
    %2981 = vmatpush1.msra.mxu0 %v2896
    %2982 = vmatprep.subr.mxu0 0.0
    %2983 = vmatpush1.msra.mxu0 %v2897
    %2984 = vmatprep.subr.mxu0 0.0
    %2985 = vmatpush1.msra.mxu0 %v2898
    %2986 = vmatprep.subr.mxu0 0.0
    %2987 = vmatpush1.msra.mxu0 %v2899
    %2988 = vmatprep.subr.mxu0 0.0
    %2989 = vmatpush1.msra.mxu0 %v2900
    %2990 = vmatprep.subr.mxu0 0.0
    %2991 = vmatpush1.msra.mxu0 %v2901
    %2992 = vmatprep.subr.mxu0 0.0
    %2993 = vmatpush1.msra.mxu0 %v2902
    %2994 = vmatprep.subr.mxu0 0.0
    %2995 = vmatpush1.msra.mxu0 %v2903
    %2996 = vmatprep.subr.mxu0 0.0
    %2997 = vmatpush1.msra.mxu0 %v2904
    %2998 = vmatprep.subr.mxu0 0.0
    %2999 = vmatpush1.msra.mxu0 %v2905
    %3000 = vmatprep.subr.mxu0 0.0
    %3001 = vmatpush1.msra.mxu0 %v2906
    %3002 = vmatprep.subr.mxu0 0.0
    %3003 = vmatpush1.msra.mxu0 %v2907
    %3004 = vmatprep.subr.mxu0 0.0
    %3005 = vmatpush1.msra.mxu0 %v2908
    %3006 = vmatprep.subr.mxu0 0.0
    %3007 = vmatpush1.msra.mxu0 %v2909
    %3008 = vmatprep.subr.mxu0 0.0
    %3009 = vmatpush1.msra.mxu0 %v2910
    %3010 = vmatprep.subr.mxu0 0.0
    %3011 = vmatpush1.msra.mxu0 %v2911
    %3012 = vmatprep.subr.mxu0 0.0
    %3013 = vmatpush1.msra.mxu0 %v2912
    %3014 = vmatprep.subr.mxu0 0.0
    %3015 = vmatpush1.msra.mxu0 %v2913
    %3016 = vmatprep.subr.mxu0 0.0
    %3017 = vmatpush1.msra.mxu0 %v2914
    %3018 = vmatprep.mubr.f32.mxu0 %v2816
    %3019 = vmatmul.mubr.f32.gmra.mrb[0].mxu0 %v2815
    %v3020 = vpop.f32.mrb[0].mxu0
    %v3021 = vadd.f32 %v2952, %v3020
    %v3022 = vpop.f32.mrb[0].mxu0
    %3023 = vdwg.mxu0
    %3024 = vmatprep.subr.mxu0 0.0
    %3025 = vmatpush1.msra.mxu0 %v2915
    %3026 = vmatprep.subr.mxu0 0.0
    %3027 = vmatpush1.msra.mxu0 %v2916
    %3028 = vmatprep.subr.mxu0 0.0
    %3029 = vmatpush1.msra.mxu0 %v2917
    %3030 = vmatprep.subr.mxu0 0.0
    %3031 = vmatpush1.msra.mxu0 %v2918
    %3032 = vmatprep.subr.mxu0 0.0
    %3033 = vmatpush1.msra.mxu0 %v2919
    %3034 = vmatprep.subr.mxu0 0.0
    %3035 = vmatpush1.msra.mxu0 %v2920
    %3036 = vmatprep.subr.mxu0 0.0
    %3037 = vmatpush1.msra.mxu0 %v2921
    %3038 = vmatprep.subr.mxu0 0.0
    %3039 = vmatpush1.msra.mxu0 %v2922
    %3040 = vmatprep.subr.mxu0 0.0
    %3041 = vmatpush1.msra.mxu0 %v2923
    %3042 = vmatprep.subr.mxu0 0.0
    %3043 = vmatpush1.msra.mxu0 %v2924
    %3044 = vmatprep.subr.mxu0 0.0
    %3045 = vmatpush1.msra.mxu0 %v2925
    %3046 = vmatprep.subr.mxu0 0.0
    %3047 = vmatpush1.msra.mxu0 %v2926
    %3048 = vmatprep.subr.mxu0 0.0
    %3049 = vmatpush1.msra.mxu0 %v2927
    %3050 = vmatprep.subr.mxu0 0.0
    %3051 = vmatpush1.msra.mxu0 %v2928
    %3052 = vmatprep.subr.mxu0 0.0
    %3053 = vmatpush1.msra.mxu0 %v2929
    %3054 = vmatprep.subr.mxu0 0.0
    %3055 = vmatpush1.msra.mxu0 %v2930
    %3056 = vmatprep.subr.mxu0 0.0
    %3057 = vmatpush1.msra.mxu0 %v2931
    %3058 = vmatprep.subr.mxu0 0.0
    %3059 = vmatpush1.msra.mxu0 %v2932
    %3060 = vmatprep.subr.mxu0 0.0
    %3061 = vmatpush1.msra.mxu0 %v2933
    %3062 = vmatprep.subr.mxu0 0.0
    %3063 = vmatpush1.msra.mxu0 %v2934
    %3064 = vmatprep.subr.mxu0 0.0
    %3065 = vmatpush1.msra.mxu0 %v2935
    %3066 = vmatprep.subr.mxu0 0.0
    %3067 = vmatpush1.msra.mxu0 %v2936
    %3068 = vmatprep.subr.mxu0 0.0
    %3069 = vmatpush1.msra.mxu0 %v2937
    %3070 = vmatprep.subr.mxu0 0.0
    %3071 = vmatpush1.msra.mxu0 %v2938
    %3072 = vmatprep.subr.mxu0 0.0
    %3073 = vmatpush1.msra.mxu0 %v2939
    %3074 = vmatprep.subr.mxu0 0.0
    %3075 = vmatpush1.msra.mxu0 %v2940
    %3076 = vmatprep.subr.mxu0 0.0
    %3077 = vmatpush1.msra.mxu0 %v2941
    %3078 = vmatprep.subr.mxu0 0.0
    %3079 = vmatpush1.msra.mxu0 %v2942
    %3080 = vmatprep.subr.mxu0 0.0
    %3081 = vmatpush1.msra.mxu0 %v2943
    %3082 = vmatprep.subr.mxu0 0.0
    %3083 = vmatpush1.msra.mxu0 %v2944
    %3084 = vmatprep.subr.mxu0 0.0
    %3085 = vmatpush1.msra.mxu0 %v2945
    %3086 = vmatprep.subr.mxu0 0.0
    %3087 = vmatpush1.msra.mxu0 %v2946
    %3088 = vmatprep.mubr.f32.mxu0 %v2818
    %3089 = vmatmul.mubr.f32.gmra.mrb[0].mxu0 %v2817
    %v3090 = vpop.f32.mrb[0].mxu0
    %v3091 = vadd.f32 %v3021, %v3090
    %v3092 = vpop.f32.mrb[0].mxu0
    %3093 = vdwg.mxu0
    %vm3094 = vcmask 58368
    %3095 = vst.msk [vmem:[#allocation2] sm:$0x3] %vm3094, %v3091
    // Predicated region
    $region22: #{discriminator_forward.1} parent=1 // pred_check
      _
    $region23: #{discriminator_forward.1} parent=1 // pred_check_branch
      %3097 = sbr.rel (0) target = $region25
    $region24: #{discriminator_forward.1} parent=1 // pred_region
      %s3099 = ssub.s32 32, 32
      %3100 = vsyncadd [#allocation3], %s3099
      %s3102 = sshll.u32 [#allocation2], 4
      %s3103 = int_to_ptr.vmem [resolvable:$true] %s3102
      %3105 = dma.vmem_to_hbm [thread:$0]  %s3103, 32, %s5, [#allocation3]
    $region25: #{discriminator_forward.1} parent=1 // pred_fallthru
      _
    // Predicated region
    $region26: #{discriminator_forward.1} parent=1 // pred_check
      _
    $region27: #{discriminator_forward.1} parent=1 // pred_check_branch
      %3107 = sbr.rel (0) target = $region29
    $region28: #{discriminator_forward.1} parent=1 // pred_region
      %3108 = dma.done [#allocation3], 32
    $region29: #{discriminator_forward.1} parent=1 // pred_fallthru
      _
    %3109 = vsyncpa [#allocation3], 1

</llo_original>
